<compile_context>
chip_gen: v6e
topology: v6e:2x2x1
jax: 0.10.0
libtpu: 0.0.40
codegen_flags: <defaults>
</compile_context>

<pallas_src>
import jax
import jax.numpy as jnp
from jax import lax
from jax.experimental import pallas as pl
from jax.experimental.pallas import tpu as pltpu

MATMUL_DTYPE = jnp.bfloat16   # MXU-native matmul inputs; state/acc stay f32.


def _round_up(n, m):
    return ((n + m - 1) // m) * m


def _pad_axis(x, axis, size):
    pad = size - x.shape[axis]
    if pad == 0:
        return x
    widths = [(0, 0)] * x.ndim
    widths[axis] = (0, pad)
    return jnp.pad(x, widths)


def _prep_lstm_weights(w_ih, w_hh, b_ih, b_hh, d_pad, h_pad):
    """Pad PyTorch-layout LSTM weights per-gate to lane-aligned sizes.

    Gate order (i, f, g, o); each gate block is padded H -> h_pad so that
    gates[:, k*h_pad:(k+1)*h_pad] lands on vreg lane boundaries.
    Returns wih_t (d_pad, 4*h_pad) bf16, whh_t (h_pad, 4*h_pad) bf16,
    bias (1, 4*h_pad) f32.
    """
    H = w_hh.shape[1]
    D = w_ih.shape[1]
    w_ih4 = _pad_axis(_pad_axis(w_ih.reshape(4, H, D), 1, h_pad), 2, d_pad)
    w_hh4 = _pad_axis(_pad_axis(w_hh.reshape(4, H, H), 1, h_pad), 2, h_pad)
    b4 = _pad_axis((b_ih + b_hh).reshape(4, H), 1, h_pad)
    wih_t = w_ih4.reshape(4 * h_pad, d_pad).T.astype(MATMUL_DTYPE)
    whh_t = w_hh4.reshape(4 * h_pad, h_pad).T.astype(MATMUL_DTYPE)
    bias = b4.reshape(1, 4 * h_pad).astype(jnp.float32)
    return wih_t, whh_t, bias


def _lstm_layer_kernel(x_ref, wih_ref, whh_ref, bias_ref, len_ref,
                       h0_ref, c0_ref, y_ref, hn_ref, cn_ref, gx_ref):
    """One LSTM layer: fused input projection + sequential recurrence.

    Grid = (time_blocks,), "arbitrary".  The time axis is folded into the
    sublane axis: x_ref/y_ref blocks are (tt*Bp, feat).  Each grid step
    computes the gate pre-activations for its tt timesteps with a single
    MXU matmul (M = tt*Bp) into VMEM scratch, then advances (h, c) through
    tt unrolled recurrence steps.  The running state lives in hn_ref/cn_ref
    (constant block index over time -> resident accumulator).
    """
    t_blk = pl.program_id(0)
    bb, hp = hn_ref.shape
    tt = x_ref.shape[0] // bb

    @pl.when(t_blk == 0)
    def _():
        hn_ref[...] = h0_ref[...]
        cn_ref[...] = c0_ref[...]

    # Fused input projection for this time block (bf16 in, f32 acc) + bias.
    # Eliminates the HBM round trip of a precomputed (Tp,Bp,4Hp) f32 tensor.
    gx_ref[...] = (jnp.dot(x_ref[...], wih_ref[...],
                           preferred_element_type=jnp.float32)
                   + bias_ref[...])

    whh = whh_ref[...]          # (Hp, 4Hp) bf16, VMEM-resident across the grid
    lens = len_ref[...]         # (Bp, 1) int32, resident
    t0 = t_blk * tt

    def step(i, carry):
        h_prev, c_prev = carry                        # (Bp, Hp) f32
        row = pl.multiple_of(i * bb, 8)
        # TODO(synk): on v5e, consider pltpu.matmul_push_rhs/acc_lhs/pop to
        # keep W_hh staged in the MXU across the tt tiny-M recurrent dots.
        gates = gx_ref[pl.ds(row, bb), :] + jnp.dot(
            h_prev.astype(MATMUL_DTYPE), whh,
            preferred_element_type=jnp.float32)
        i_g = jax.nn.sigmoid(gates[:, 0 * hp:1 * hp])
        f_g = jax.nn.sigmoid(gates[:, 1 * hp:2 * hp])
        g_g = jnp.tanh(gates[:, 2 * hp:3 * hp])
        o_g = jax.nn.sigmoid(gates[:, 3 * hp:4 * hp])
        c_new = f_g * c_prev + i_g * g_g
        h_new = o_g * jnp.tanh(c_new)
        valid = (t0 + i) < lens                       # packed-seq validity
        y_ref[pl.ds(row, bb), :] = jnp.where(valid, h_new,
                                             0.0).astype(y_ref.dtype)
        h_next = jnp.where(valid, h_new, h_prev)      # state frozen past len
        c_next = jnp.where(valid, c_new, c_prev)
        return h_next, c_next

    h, c = lax.fori_loop(0, tt, step, (hn_ref[...], cn_ref[...]),
                         unroll=min(tt, 8))
    hn_ref[...] = h
    cn_ref[...] = c


def lstm_layer(x2d, lengths, wih_t, whh_t, bias, h0, c0, *, bp, tt,
               y_dtype=jnp.float32):
    """One LSTM layer over a padded, length-sorted batch.

    x2d: (Tp*Bp, Dp) bf16 (time-major rows); lengths: (Bp, 1) i32;
    wih_t: (Dp, 4Hp) bf16; whh_t: (Hp, 4Hp) bf16; bias: (1, 4Hp) f32;
    h0/c0: (Bp, Hp) f32.
    Returns y2d (Tp*Bp, Hp) in y_dtype, h_n (Bp, Hp) f32, c_n (Bp, Hp) f32.
    """
    rows, dp = x2d.shape
    tp = rows // bp
    hp = whh_t.shape[0]
    g = 4 * hp
    nt = tp // tt
    blk = tt * bp

    grid_spec = pltpu.PrefetchScalarGridSpec(
        num_scalar_prefetch=0,
        grid=(nt,),
        in_specs=[
            pl.BlockSpec((blk, dp), lambda t: (t, 0)),    # x time-block (bf16)
            # Constant block index over the grid -> fetched once, resident.
            # TODO(synk): on v7x, single-buffer these resident operands
            # (pipeline_mode=pl.Buffered(1)) to halve their VMEM footprint.
            pl.BlockSpec((dp, g), lambda t: (0, 0)),      # W_ih^T
            pl.BlockSpec((hp, g), lambda t: (0, 0)),      # W_hh^T
            pl.BlockSpec((1, g), lambda t: (0, 0)),       # b_ih + b_hh
            pl.BlockSpec((bp, 1), lambda t: (0, 0)),      # lengths
            pl.BlockSpec((bp, hp), lambda t: (0, 0)),     # h0
            pl.BlockSpec((bp, hp), lambda t: (0, 0)),     # c0
        ],
        out_specs=[
            pl.BlockSpec((blk, hp), lambda t: (t, 0)),    # y (lane-dense)
            pl.BlockSpec((bp, hp), lambda t: (0, 0)),     # h_n (running state)
            pl.BlockSpec((bp, hp), lambda t: (0, 0)),     # c_n (running state)
        ],
        scratch_shapes=[pltpu.VMEM((blk, g), jnp.float32)],   # gate block gx
    )

    # Explicit VMEM budget: double-buffered x/y blocks + resident weights +
    # gate scratch, with 2x headroom, clamped so it still fits a v7x TC.
    y_bytes = jnp.dtype(y_dtype).itemsize
    est = (2 * blk * dp * 2 + 2 * blk * hp * y_bytes        # x, y blocks
           + 2 * (dp + hp) * g * 2 + 2 * g * 4              # weights, bias
           + 6 * bp * hp * 4 + 2 * bp * 4                   # h0/c0/hn/cn, lens
           + blk * g * 4)                                   # gx scratch
    vmem_limit = int(min(max(2 * est + (4 << 20), 32 << 20), 64 << 20))

    y, hn, cn = pl.pallas_call(
        _lstm_layer_kernel,
        grid_spec=grid_spec,
        out_shape=(jax.ShapeDtypeStruct((rows, hp), y_dtype),
                   jax.ShapeDtypeStruct((bp, hp), jnp.float32),
                   jax.ShapeDtypeStruct((bp, hp), jnp.float32)),
        compiler_params=pltpu.CompilerParams(
            dimension_semantics=("arbitrary",),     # recurrence is sequential
            vmem_limit_bytes=vmem_limit),
    )(x2d, wih_t, whh_t, bias, lengths, h0, c0)
    return y, hn, cn


def init_params(key, ntoken, ninp, nhid, nlayers, tie_weights=False):
    """Deterministic parameter init mirroring the PyTorch module's shapes."""
    keys = jax.random.split(key, 1 + 4 * nlayers)
    params = {
        # encoder.weight.data.uniform_(-0.1, 0.1)
        'encoder': jax.random.uniform(keys[0], (ntoken, ninp), jnp.float32,
                                      -0.1, 0.1),
        'rnns': [],
    }
    for l in range(nlayers):
        in_dim = ninp if l == 0 else nhid
        hid = nhid if l != nlayers - 1 else (ninp if tie_weights else nhid)
        k = 1.0 / float(hid) ** 0.5     # PyTorch nn.LSTM default init range
        kk = keys[1 + 4 * l: 1 + 4 * (l + 1)]
        params['rnns'].append(dict(
            w_ih=jax.random.uniform(kk[0], (4 * hid, in_dim), jnp.float32, -k, k),
            w_hh=jax.random.uniform(kk[1], (4 * hid, hid), jnp.float32, -k, k),
            b_ih=jax.random.uniform(kk[2], (4 * hid,), jnp.float32, -k, k),
            b_hh=jax.random.uniform(kk[3], (4 * hid,), jnp.float32, -k, k),
        ))
    return params


def rnn_model_forward(params, input_ids, hidden, *, t_max=None, tt=None):
    """Eval-mode RNNModel.forward (return_h=False).

    input_ids: (T, B) int32 token ids, padding_idx = 0.
    hidden: list (per layer) of (h0, c0), each (1, B, H_l) float32.
    t_max: static int -> jit-friendly.  If None, computed as int(max(lengths))
           exactly like pad_packed_sequence (host sync + recompile per length).
    tt: timesteps per kernel grid step (static); None -> derived from t_max.
    Returns (result, new_hidden); `result` is in length-sorted batch order,
    exactly like the reference implementation.
    """
    T, B = input_ids.shape

    mask = (input_ids.T != 0).astype(jnp.int32)     # compute_mask
    lengths = mask.sum(1).astype(jnp.int32)         # (B,)

    # embedded_dropout / lockdrop(dropouti) are identity in eval mode.
    emb = jnp.take(params['encoder'], input_ids, axis=0)   # (T, B, ninp)

    idx_sort = jnp.argsort(-lengths)
    idx_unsort = jnp.argsort(idx_sort)
    lengths_sort = lengths[idx_sort]

    if t_max is None:
        t_max = int(jnp.max(lengths))   # eager-only exact-semantics fallback

    if tt is None:
        # Amortize ~0.35us/grid-step overhead without inflating time padding.
        tt = next((c for c in (32, 16) if t_max % c == 0 or t_max >= 4 * c), 8)

    emb_sort = emb[:t_max, idx_sort, :]
    hid_sort = [(h[:, idx_sort, :], c[:, idx_sort, :]) for (h, c) in hidden]

    # Pad to TPU-friendly shapes: time -> multiple of tt; batch -> multiple of
    # 16 (bf16 sublane tile for the MXU LHS; prereq for any future 2-TC split).
    b_pad = _round_up(B, 16)
    t_pad = _round_up(t_max, tt)
    lens_pad = _pad_axis(lengths_sort.reshape(B, 1), 0, b_pad)   # (Bp, 1) i32
    x = _pad_axis(_pad_axis(emb_sort, 0, t_pad), 1, b_pad)       # (Tp, Bp, D)

    d_pad0 = _round_up(params['rnns'][0]['w_ih'].shape[1], 128)
    x = _pad_axis(x, 2, d_pad0)
    # Fold (Tp, Bp) -> Tp*Bp rows so every kernel ref is 2-D and tile-aligned;
    # activations are streamed to the kernel in bf16.
    x = x.reshape(t_pad * b_pad, d_pad0).astype(MATMUL_DTYPE)

    nlayers = len(params['rnns'])
    new_hidden_sorted = []
    for l, lp in enumerate(params['rnns']):
        H = lp['w_hh'].shape[1]
        h_pad = _round_up(H, 128)
        d_pad = _round_up(lp['w_ih'].shape[1], 128)
        assert x.shape[1] == d_pad     # stacked LSTM: H_{l-1} == D_l
        wih_t, whh_t, bias = _prep_lstm_weights(
            lp['w_ih'], lp['w_hh'], lp['b_ih'], lp['b_hh'], d_pad, h_pad)
        h0 = _pad_axis(_pad_axis(hid_sort[l][0][0], 0, b_pad), 1, h_pad)
        c0 = _pad_axis(_pad_axis(hid_sort[l][1][0], 0, b_pad), 1, h_pad)
        # Intermediate layers stream bf16 activations (halves HBM traffic);
        # the final layer keeps f32 output for the model result.
        y_dtype = jnp.float32 if l == nlayers - 1 else MATMUL_DTYPE
        y, hn, cn = lstm_layer(x, lens_pad, wih_t, whh_t, bias, h0, c0,
                               bp=b_pad, tt=tt, y_dtype=y_dtype)
        new_hidden_sorted.append((hn[:B, :H][None], cn[:B, :H][None]))
        x = y      # lockdrop(dropouth) identity; padded output feeds next layer

    # hidden is unsorted back to the original batch order.
    new_hidden = [(h[:, idx_unsort, :], c[:, idx_unsort, :])
                  for (h, c) in new_hidden_sorted]

    H_last = params['rnns'][-1]['w_hh'].shape[1]
    h_last_pad = _round_up(H_last, 128)
    output = x.reshape(t_pad, b_pad, h_last_pad)[:t_max, :B, :H_last]
    result = output.reshape(t_max * B, H_last)   # length-sorted batch order
    return result, new_hidden


# ----------------------- pure-JAX f32 reference (validation) ----------------
def _lstm_layer_reference(x, lengths, w_ih, w_hh, b_ih, b_hh, h0, c0):
    H = w_hh.shape[1]

    def step(carry, xt_t):
        xt, t = xt_t
        h, c = carry
        gates = xt @ w_ih.T + h @ w_hh.T + b_ih + b_hh
        i = jax.nn.sigmoid(gates[:, :H])
        f = jax.nn.sigmoid(gates[:, H:2 * H])
        g = jnp.tanh(gates[:, 2 * H:3 * H])
        o = jax.nn.sigmoid(gates[:, 3 * H:])
        c_new = f * c + i * g
        h_new = o * jnp.tanh(c_new)
        valid = (t < lengths)[:, None]
        h = jnp.where(valid, h_new, h)
        c = jnp.where(valid, c_new, c)
        return (h, c), jnp.where(valid, h_new, 0.0)

    (h, c), ys = lax.scan(step, (h0, c0), (x, jnp.arange(x.shape[0])))
    return ys, h, c


def rnn_model_forward_reference(params, input_ids, hidden):
    T, B = input_ids.shape
    lengths = (input_ids.T != 0).sum(1).astype(jnp.int32)
    emb = jnp.take(params['encoder'], input_ids, axis=0)
    idx_sort = jnp.argsort(-lengths)
    idx_unsort = jnp.argsort(idx_sort)
    lengths_sort = lengths[idx_sort]
    x = emb[:, idx_sort, :]
    new_hidden = []
    for l, lp in enumerate(params['rnns']):
        h0 = hidden[l][0][0, idx_sort]
        c0 = hidden[l][1][0, idx_sort]
        y, hn, cn = _lstm_layer_reference(x, lengths_sort, lp['w_ih'],
                                          lp['w_hh'], lp['b_ih'], lp['b_hh'],
                                          h0, c0)
        new_hidden.append((hn[idx_unsort][None], cn[idx_unsort][None]))
        x = y
    return x.reshape(T * B, x.shape[2]), new_hidden


if __name__ == "__main__":
    ntoken, ninp, nhid, nlayers = 50, 16, 32, 2
    T, B = 8, 4

    key = jax.random.PRNGKey(0)
    pkey, ikey = jax.random.split(key)
    params = init_params(pkey, ntoken, ninp, nhid, nlayers)

    # Token ids with trailing padding (padding_idx = 0); one sequence is full
    # length so pad_packed_sequence keeps T_out == T (static t_max == T).
    seq_lengths = jnp.array([8, 5, 3, 6], dtype=jnp.int32)
    ids = jax.random.randint(ikey, (T, B), 1, ntoken, dtype=jnp.int32)
    valid = jnp.arange(T)[:, None] < seq_lengths[None, :]
    input_ids = jnp.where(valid, ids, 0)                      # (T, B)

    # init_hidden(bsz): zeros, shape (1, B, nhid) per layer for LSTM.
    hidden = [(jnp.zeros((1, B, nhid), jnp.float32),
               jnp.zeros((1, B, nhid), jnp.float32)) for _ in range(nlayers)]

    fwd = jax.jit(rnn_model_forward, static_argnames=("t_max", "tt"))
    result, new_hidden = fwd(params, input_ids, hidden, t_max=T)
    jax.block_until_ready(result)
    for h, c in new_hidden:
        jax.block_until_ready(h)
        jax.block_until_ready(c)

    assert result.shape == (T * B, nhid)

    # Validate the bf16-matmul / bf16-activation kernel against the pure-f32
    # reference.  TODO(synk): re-validate at production T/H before relying on
    # bf16 intermediates for long sequences.
    result_ref, hidden_ref = rnn_model_forward_reference(params, input_ids,
                                                         hidden)
    assert float(jnp.max(jnp.abs(result - result_ref))) < 5e-2
    for (h, c), (hr, cr) in zip(new_hidden, hidden_ref):
        assert float(jnp.max(jnp.abs(h - hr))) < 5e-2
        assert float(jnp.max(jnp.abs(c - cr))) < 5e-2

    print("KERNEL_OK")
</pallas_src>

<mosaic_0001>
module attributes {stable_mosaic.version = 11 : i64} {
  func.func @_lstm_layer_kernel(%arg0: i32, %arg1: memref<128x128xbf16, #tpu.memory_space<vmem>>, %arg2: memref<128x512xbf16, #tpu.memory_space<vmem>>, %arg3: memref<128x512xbf16, #tpu.memory_space<vmem>>, %arg4: memref<1x512xf32, #tpu.memory_space<vmem>>, %arg5: memref<16x1xi32, #tpu.memory_space<vmem>>, %arg6: memref<16x128xf32, #tpu.memory_space<vmem>>, %arg7: memref<16x128xf32, #tpu.memory_space<vmem>>, %arg8: memref<128x128xf32, #tpu.memory_space<vmem>>, %arg9: memref<16x128xf32, #tpu.memory_space<vmem>>, %arg10: memref<16x128xf32, #tpu.memory_space<vmem>>, %arg11: memref<128x512xf32, #tpu.memory_space<vmem>>) attributes {dimension_semantics = [#tpu.dimension_semantics<arbitrary>], iteration_bounds = array<i64: 1>, scalar_prefetch = 0 : i64, scratch_operands = 1 : i64, tpu.core_type = #tpu.core_type<tc>, window_params = [{transform_indices = @transform_0, window_bounds = array<i64: 128, 128>}, {pipeline_mode = #tpu.pipeline_mode<synchronous>, transform_indices = @transform_1, window_bounds = array<i64: 128, 512>}, {pipeline_mode = #tpu.pipeline_mode<synchronous>, transform_indices = @transform_2, window_bounds = array<i64: 128, 512>}, {pipeline_mode = #tpu.pipeline_mode<synchronous>, transform_indices = @transform_3, window_bounds = array<i64: 1, 512>}, {pipeline_mode = #tpu.pipeline_mode<synchronous>, transform_indices = @transform_4, window_bounds = array<i64: 16, 1>}, {pipeline_mode = #tpu.pipeline_mode<synchronous>, transform_indices = @transform_5, window_bounds = array<i64: 16, 128>}, {pipeline_mode = #tpu.pipeline_mode<synchronous>, transform_indices = @transform_6, window_bounds = array<i64: 16, 128>}, {transform_indices = @transform_7, window_bounds = array<i64: 128, 128>}, {pipeline_mode = #tpu.pipeline_mode<synchronous>, transform_indices = @transform_8, window_bounds = array<i64: 16, 128>}, {pipeline_mode = #tpu.pipeline_mode<synchronous>, transform_indices = @transform_9, window_bounds = array<i64: 16, 128>}]} {
    %c0_i32 = arith.constant 0 : i32
    %0 = arith.cmpi eq, %arg0, %c0_i32 : i32
    %1 = arith.extui %0 : i1 to i32
    %c0_i32_0 = arith.constant 0 : i32
    %2 = arith.cmpi ne, %1, %c0_i32_0 : i32
    scf.if %2 {
      %c0_85 = arith.constant 0 : index
      %c0_86 = arith.constant 0 : index
      %393 = vector.load %arg6[%c0_85, %c0_86] : memref<16x128xf32, #tpu.memory_space<vmem>>, vector<16x128xf32>
      %c0_87 = arith.constant 0 : index
      %c0_88 = arith.constant 0 : index
      %394 = vector.load %arg9[%c0_87, %c0_88] : memref<16x128xf32, #tpu.memory_space<vmem>>, vector<16x128xf32>
      tpu.vector_store %arg9[%c0_87, %c0_88], %393 {strides = array<i32>} : memref<16x128xf32, #tpu.memory_space<vmem>>, vector<16x128xf32>,
      %c0_89 = arith.constant 0 : index
      %c0_90 = arith.constant 0 : index
      %395 = vector.load %arg7[%c0_89, %c0_90] : memref<16x128xf32, #tpu.memory_space<vmem>>, vector<16x128xf32>
      %c0_91 = arith.constant 0 : index
      %c0_92 = arith.constant 0 : index
      %396 = vector.load %arg10[%c0_91, %c0_92] : memref<16x128xf32, #tpu.memory_space<vmem>>, vector<16x128xf32>
      tpu.vector_store %arg10[%c0_91, %c0_92], %395 {strides = array<i32>} : memref<16x128xf32, #tpu.memory_space<vmem>>, vector<16x128xf32>,
    } else {
    }
    %c0 = arith.constant 0 : index
    %c0_1 = arith.constant 0 : index
    %3 = vector.load %arg1[%c0, %c0_1] : memref<128x128xbf16, #tpu.memory_space<vmem>>, vector<128x128xbf16>
    %c0_2 = arith.constant 0 : index
    %c0_3 = arith.constant 0 : index
    %4 = vector.load %arg2[%c0_2, %c0_3] : memref<128x512xbf16, #tpu.memory_space<vmem>>, vector<128x512xbf16>
    %cst = arith.constant dense<0.000000e+00> : vector<128x512xf32>
    %5 = tpu.matmul %3, %4, %cst {dimension_numbers = #tpu.dot_dimension_numbers<[1], [0], [0], [1], [0, 0, 1, 1], [], []>} : vector<128x128xbf16>, vector<128x512xbf16>, vector<128x512xf32> -> vector<128x512xf32>
    %c0_4 = arith.constant 0 : index
    %c0_5 = arith.constant 0 : index
    %6 = vector.load %arg4[%c0_4, %c0_5] : memref<1x512xf32, #tpu.memory_space<vmem>>, vector<1x512xf32>
    %7 = vector.broadcast %6 : vector<1x512xf32> to vector<128x512xf32>
    %8 = arith.addf %5, %7 : vector<128x512xf32>
    %c0_6 = arith.constant 0 : index
    %c0_7 = arith.constant 0 : index
    %9 = vector.load %arg11[%c0_6, %c0_7] : memref<128x512xf32, #tpu.memory_space<vmem>>, vector<128x512xf32>
    tpu.vector_store %arg11[%c0_6, %c0_7], %8 {strides = array<i32>} : memref<128x512xf32, #tpu.memory_space<vmem>>, vector<128x512xf32>,
    %c0_8 = arith.constant 0 : index
    %c0_9 = arith.constant 0 : index
    %10 = vector.load %arg3[%c0_8, %c0_9] : memref<128x512xbf16, #tpu.memory_space<vmem>>, vector<128x512xbf16>
    %c0_10 = arith.constant 0 : index
    %c0_11 = arith.constant 0 : index
    %11 = vector.load %arg5[%c0_10, %c0_11] : memref<16x1xi32, #tpu.memory_space<vmem>>, vector<16x1xi32>
    %c8_i32 = arith.constant 8 : i32
    %12 = arith.muli %arg0, %c8_i32 : i32
    %c0_12 = arith.constant 0 : index
    %c0_13 = arith.constant 0 : index
    %13 = vector.load %arg9[%c0_12, %c0_13] : memref<16x128xf32, #tpu.memory_space<vmem>>, vector<16x128xf32>
    %c0_14 = arith.constant 0 : index
    %c0_15 = arith.constant 0 : index
    %14 = vector.load %arg10[%c0_14, %c0_15] : memref<16x128xf32, #tpu.memory_space<vmem>>, vector<16x128xf32>
    %c0_i32_16 = arith.constant 0 : i32
    %c16_i32 = arith.constant 16 : i32
    %15 = arith.muli %c0_i32_16, %c16_i32 : i32
    %16 = tpu.assume_multiple %15, 8 : i32
    %17 = arith.index_cast %16 : i32 to index
    %c0_17 = arith.constant 0 : index
    %18 = vector.load %arg11[%17, %c0_17] : memref<128x512xf32, #tpu.memory_space<vmem>>, vector<16x512xf32>
    %19 = arith.truncf %13 : vector<16x128xf32> to vector<16x128xbf16>
    %cst_18 = arith.constant dense<0.000000e+00> : vector<16x512xf32>
    %20 = tpu.matmul %19, %10, %cst_18 {dimension_numbers = #tpu.dot_dimension_numbers<[1], [0], [0], [1], [0, 0, 1, 1], [], []>} : vector<16x128xbf16>, vector<128x512xbf16>, vector<16x512xf32> -> vector<16x512xf32>
    %21 = arith.addf %18, %20 : vector<16x512xf32>
    %22 = vector.extract_strided_slice %21 {offsets = [0, 0], sizes = [16, 128], strides = [1, 1]} : vector<16x512xf32> to vector<16x128xf32>
    %23 = arith.negf %22 : vector<16x128xf32>
    %24 = math.exp %23 : vector<16x128xf32>
    %cst_19 = arith.constant 1.000000e+00 : f32
    %25 = vector.broadcast %cst_19 : f32 to vector<16x128xf32>
    %26 = arith.addf %25, %24 : vector<16x128xf32>
    %27 = arith.divf %25, %26 : vector<16x128xf32>
    %28 = vector.extract_strided_slice %21 {offsets = [0, 128], sizes = [16, 128], strides = [1, 1]} : vector<16x512xf32> to vector<16x128xf32>
    %29 = arith.negf %28 : vector<16x128xf32>
    %30 = math.exp %29 : vector<16x128xf32>
    %cst_20 = arith.constant 1.000000e+00 : f32
    %31 = vector.broadcast %cst_20 : f32 to vector<16x128xf32>
    %32 = arith.addf %31, %30 : vector<16x128xf32>
    %33 = arith.divf %31, %32 : vector<16x128xf32>
    %34 = vector.extract_strided_slice %21 {offsets = [0, 256], sizes = [16, 128], strides = [1, 1]} : vector<16x512xf32> to vector<16x128xf32>
    %35 = math.tanh %34 : vector<16x128xf32>
    %36 = vector.extract_strided_slice %21 {offsets = [0, 384], sizes = [16, 128], strides = [1, 1]} : vector<16x512xf32> to vector<16x128xf32>
    %37 = arith.negf %36 : vector<16x128xf32>
    %38 = math.exp %37 : vector<16x128xf32>
    %cst_21 = arith.constant 1.000000e+00 : f32
    %39 = vector.broadcast %cst_21 : f32 to vector<16x128xf32>
    %40 = arith.addf %39, %38 : vector<16x128xf32>
    %41 = arith.divf %39, %40 : vector<16x128xf32>
    %42 = arith.mulf %33, %14 : vector<16x128xf32>
    %43 = arith.mulf %27, %35 : vector<16x128xf32>
    %44 = arith.addf %42, %43 : vector<16x128xf32>
    %45 = math.tanh %44 : vector<16x128xf32>
    %46 = arith.mulf %41, %45 : vector<16x128xf32>
    %47 = arith.addi %12, %c0_i32_16 : i32
    %48 = vector.broadcast %47 : i32 to vector<16x1xi32>
    %49 = arith.cmpi slt, %48, %11 : vector<16x1xi32>
    %cst_22 = arith.constant 0.000000e+00 : f32
    %50 = vector.shape_cast %49 : vector<16x1xi1> to vector<16x1xi1>
    %51 = vector.broadcast %50 : vector<16x1xi1> to vector<16x128xi1>
    %52 = vector.broadcast %cst_22 : f32 to vector<16x128xf32>
    %53 = arith.select %51, %46, %52 : vector<16x128xi1>, vector<16x128xf32>
    %54 = arith.index_cast %16 : i32 to index
    %c0_23 = arith.constant 0 : index
    %55 = vector.load %arg8[%54, %c0_23] : memref<128x128xf32, #tpu.memory_space<vmem>>, vector<16x128xf32>
    tpu.vector_store %arg8[%54, %c0_23], %53 {strides = array<i32>} : memref<128x128xf32, #tpu.memory_space<vmem>>, vector<16x128xf32>,
    %56 = vector.shape_cast %49 : vector<16x1xi1> to vector<16x1xi1>
    %57 = vector.broadcast %56 : vector<16x1xi1> to vector<16x128xi1>
    %58 = arith.select %57, %46, %13 : vector<16x128xi1>, vector<16x128xf32>
    %59 = vector.shape_cast %49 : vector<16x1xi1> to vector<16x1xi1>
    %60 = vector.broadcast %59 : vector<16x1xi1> to vector<16x128xi1>
    %61 = arith.select %60, %44, %14 : vector<16x128xi1>, vector<16x128xf32>
    %c1_i32 = arith.constant 1 : i32
    %c16_i32_24 = arith.constant 16 : i32
    %62 = arith.muli %c1_i32, %c16_i32_24 : i32
    %63 = tpu.assume_multiple %62, 8 : i32
    %64 = arith.index_cast %63 : i32 to index
    %c0_25 = arith.constant 0 : index
    %65 = vector.load %arg11[%64, %c0_25] : memref<128x512xf32, #tpu.memory_space<vmem>>, vector<16x512xf32>
    %66 = arith.truncf %58 : vector<16x128xf32> to vector<16x128xbf16>
    %cst_26 = arith.constant dense<0.000000e+00> : vector<16x512xf32>
    %67 = tpu.matmul %66, %10, %cst_26 {dimension_numbers = #tpu.dot_dimension_numbers<[1], [0], [0], [1], [0, 0, 1, 1], [], []>} : vector<16x128xbf16>, vector<128x512xbf16>, vector<16x512xf32> -> vector<16x512xf32>
    %68 = arith.addf %65, %67 : vector<16x512xf32>
    %69 = vector.extract_strided_slice %68 {offsets = [0, 0], sizes = [16, 128], strides = [1, 1]} : vector<16x512xf32> to vector<16x128xf32>
    %70 = arith.negf %69 : vector<16x128xf32>
    %71 = math.exp %70 : vector<16x128xf32>
    %cst_27 = arith.constant 1.000000e+00 : f32
    %72 = vector.broadcast %cst_27 : f32 to vector<16x128xf32>
    %73 = arith.addf %72, %71 : vector<16x128xf32>
    %74 = arith.divf %72, %73 : vector<16x128xf32>
    %75 = vector.extract_strided_slice %68 {offsets = [0, 128], sizes = [16, 128], strides = [1, 1]} : vector<16x512xf32> to vector<16x128xf32>
    %76 = arith.negf %75 : vector<16x128xf32>
    %77 = math.exp %76 : vector<16x128xf32>
    %cst_28 = arith.constant 1.000000e+00 : f32
    %78 = vector.broadcast %cst_28 : f32 to vector<16x128xf32>
    %79 = arith.addf %78, %77 : vector<16x128xf32>
    %80 = arith.divf %78, %79 : vector<16x128xf32>
    %81 = vector.extract_strided_slice %68 {offsets = [0, 256], sizes = [16, 128], strides = [1, 1]} : vector<16x512xf32> to vector<16x128xf32>
    %82 = math.tanh %81 : vector<16x128xf32>
    %83 = vector.extract_strided_slice %68 {offsets = [0, 384], sizes = [16, 128], strides = [1, 1]} : vector<16x512xf32> to vector<16x128xf32>
    %84 = arith.negf %83 : vector<16x128xf32>
    %85 = math.exp %84 : vector<16x128xf32>
    %cst_29 = arith.constant 1.000000e+00 : f32
    %86 = vector.broadcast %cst_29 : f32 to vector<16x128xf32>
    %87 = arith.addf %86, %85 : vector<16x128xf32>
    %88 = arith.divf %86, %87 : vector<16x128xf32>
    %89 = arith.mulf %80, %61 : vector<16x128xf32>
    %90 = arith.mulf %74, %82 : vector<16x128xf32>
    %91 = arith.addf %89, %90 : vector<16x128xf32>
    %92 = math.tanh %91 : vector<16x128xf32>
    %93 = arith.mulf %88, %92 : vector<16x128xf32>
    %94 = arith.addi %12, %c1_i32 : i32
    %95 = vector.broadcast %94 : i32 to vector<16x1xi32>
    %96 = arith.cmpi slt, %95, %11 : vector<16x1xi32>
    %cst_30 = arith.constant 0.000000e+00 : f32
    %97 = vector.shape_cast %96 : vector<16x1xi1> to vector<16x1xi1>
    %98 = vector.broadcast %97 : vector<16x1xi1> to vector<16x128xi1>
    %99 = vector.broadcast %cst_30 : f32 to vector<16x128xf32>
    %100 = arith.select %98, %93, %99 : vector<16x128xi1>, vector<16x128xf32>
    %101 = arith.index_cast %63 : i32 to index
    %c0_31 = arith.constant 0 : index
    %102 = vector.load %arg8[%101, %c0_31] : memref<128x128xf32, #tpu.memory_space<vmem>>, vector<16x128xf32>
    tpu.vector_store %arg8[%101, %c0_31], %100 {strides = array<i32>} : memref<128x128xf32, #tpu.memory_space<vmem>>, vector<16x128xf32>,
    %103 = vector.shape_cast %96 : vector<16x1xi1> to vector<16x1xi1>
    %104 = vector.broadcast %103 : vector<16x1xi1> to vector<16x128xi1>
    %105 = arith.select %104, %93, %58 : vector<16x128xi1>, vector<16x128xf32>
    %106 = vector.shape_cast %96 : vector<16x1xi1> to vector<16x1xi1>
    %107 = vector.broadcast %106 : vector<16x1xi1> to vector<16x128xi1>
    %108 = arith.select %107, %91, %61 : vector<16x128xi1>, vector<16x128xf32>
    %c2_i32 = arith.constant 2 : i32
    %c16_i32_32 = arith.constant 16 : i32
    %109 = arith.muli %c2_i32, %c16_i32_32 : i32
    %110 = tpu.assume_multiple %109, 8 : i32
    %111 = arith.index_cast %110 : i32 to index
    %c0_33 = arith.constant 0 : index
    %112 = vector.load %arg11[%111, %c0_33] : memref<128x512xf32, #tpu.memory_space<vmem>>, vector<16x512xf32>
    %113 = arith.truncf %105 : vector<16x128xf32> to vector<16x128xbf16>
    %cst_34 = arith.constant dense<0.000000e+00> : vector<16x512xf32>
    %114 = tpu.matmul %113, %10, %cst_34 {dimension_numbers = #tpu.dot_dimension_numbers<[1], [0], [0], [1], [0, 0, 1, 1], [], []>} : vector<16x128xbf16>, vector<128x512xbf16>, vector<16x512xf32> -> vector<16x512xf32>
    %115 = arith.addf %112, %114 : vector<16x512xf32>
    %116 = vector.extract_strided_slice %115 {offsets = [0, 0], sizes = [16, 128], strides = [1, 1]} : vector<16x512xf32> to vector<16x128xf32>
    %117 = arith.negf %116 : vector<16x128xf32>
    %118 = math.exp %117 : vector<16x128xf32>
    %cst_35 = arith.constant 1.000000e+00 : f32
    %119 = vector.broadcast %cst_35 : f32 to vector<16x128xf32>
    %120 = arith.addf %119, %118 : vector<16x128xf32>
    %121 = arith.divf %119, %120 : vector<16x128xf32>
    %122 = vector.extract_strided_slice %115 {offsets = [0, 128], sizes = [16, 128], strides = [1, 1]} : vector<16x512xf32> to vector<16x128xf32>
    %123 = arith.negf %122 : vector<16x128xf32>
    %124 = math.exp %123 : vector<16x128xf32>
    %cst_36 = arith.constant 1.000000e+00 : f32
    %125 = vector.broadcast %cst_36 : f32 to vector<16x128xf32>
    %126 = arith.addf %125, %124 : vector<16x128xf32>
    %127 = arith.divf %125, %126 : vector<16x128xf32>
    %128 = vector.extract_strided_slice %115 {offsets = [0, 256], sizes = [16, 128], strides = [1, 1]} : vector<16x512xf32> to vector<16x128xf32>
    %129 = math.tanh %128 : vector<16x128xf32>
    %130 = vector.extract_strided_slice %115 {offsets = [0, 384], sizes = [16, 128], strides = [1, 1]} : vector<16x512xf32> to vector<16x128xf32>
    %131 = arith.negf %130 : vector<16x128xf32>
    %132 = math.exp %131 : vector<16x128xf32>
    %cst_37 = arith.constant 1.000000e+00 : f32
    %133 = vector.broadcast %cst_37 : f32 to vector<16x128xf32>
    %134 = arith.addf %133, %132 : vector<16x128xf32>
    %135 = arith.divf %133, %134 : vector<16x128xf32>
    %136 = arith.mulf %127, %108 : vector<16x128xf32>
    %137 = arith.mulf %121, %129 : vector<16x128xf32>
    %138 = arith.addf %136, %137 : vector<16x128xf32>
    %139 = math.tanh %138 : vector<16x128xf32>
    %140 = arith.mulf %135, %139 : vector<16x128xf32>
    %141 = arith.addi %12, %c2_i32 : i32
    %142 = vector.broadcast %141 : i32 to vector<16x1xi32>
    %143 = arith.cmpi slt, %142, %11 : vector<16x1xi32>
    %cst_38 = arith.constant 0.000000e+00 : f32
    %144 = vector.shape_cast %143 : vector<16x1xi1> to vector<16x1xi1>
    %145 = vector.broadcast %144 : vector<16x1xi1> to vector<16x128xi1>
    %146 = vector.broadcast %cst_38 : f32 to vector<16x128xf32>
    %147 = arith.select %145, %140, %146 : vector<16x128xi1>, vector<16x128xf32>
    %148 = arith.index_cast %110 : i32 to index
    %c0_39 = arith.constant 0 : index
    %149 = vector.load %arg8[%148, %c0_39] : memref<128x128xf32, #tpu.memory_space<vmem>>, vector<16x128xf32>
    tpu.vector_store %arg8[%148, %c0_39], %147 {strides = array<i32>} : memref<128x128xf32, #tpu.memory_space<vmem>>, vector<16x128xf32>,
    %150 = vector.shape_cast %143 : vector<16x1xi1> to vector<16x1xi1>
    %151 = vector.broadcast %150 : vector<16x1xi1> to vector<16x128xi1>
    %152 = arith.select %151, %140, %105 : vector<16x128xi1>, vector<16x128xf32>
    %153 = vector.shape_cast %143 : vector<16x1xi1> to vector<16x1xi1>
    %154 = vector.broadcast %153 : vector<16x1xi1> to vector<16x128xi1>
    %155 = arith.select %154, %138, %108 : vector<16x128xi1>, vector<16x128xf32>
    %c3_i32 = arith.constant 3 : i32
    %c16_i32_40 = arith.constant 16 : i32
    %156 = arith.muli %c3_i32, %c16_i32_40 : i32
    %157 = tpu.assume_multiple %156, 8 : i32
    %158 = arith.index_cast %157 : i32 to index
    %c0_41 = arith.constant 0 : index
    %159 = vector.load %arg11[%158, %c0_41] : memref<128x512xf32, #tpu.memory_space<vmem>>, vector<16x512xf32>
    %160 = arith.truncf %152 : vector<16x128xf32> to vector<16x128xbf16>
    %cst_42 = arith.constant dense<0.000000e+00> : vector<16x512xf32>
    %161 = tpu.matmul %160, %10, %cst_42 {dimension_numbers = #tpu.dot_dimension_numbers<[1], [0], [0], [1], [0, 0, 1, 1], [], []>} : vector<16x128xbf16>, vector<128x512xbf16>, vector<16x512xf32> -> vector<16x512xf32>
    %162 = arith.addf %159, %161 : vector<16x512xf32>
    %163 = vector.extract_strided_slice %162 {offsets = [0, 0], sizes = [16, 128], strides = [1, 1]} : vector<16x512xf32> to vector<16x128xf32>
    %164 = arith.negf %163 : vector<16x128xf32>
    %165 = math.exp %164 : vector<16x128xf32>
    %cst_43 = arith.constant 1.000000e+00 : f32
    %166 = vector.broadcast %cst_43 : f32 to vector<16x128xf32>
    %167 = arith.addf %166, %165 : vector<16x128xf32>
    %168 = arith.divf %166, %167 : vector<16x128xf32>
    %169 = vector.extract_strided_slice %162 {offsets = [0, 128], sizes = [16, 128], strides = [1, 1]} : vector<16x512xf32> to vector<16x128xf32>
    %170 = arith.negf %169 : vector<16x128xf32>
    %171 = math.exp %170 : vector<16x128xf32>
    %cst_44 = arith.constant 1.000000e+00 : f32
    %172 = vector.broadcast %cst_44 : f32 to vector<16x128xf32>
    %173 = arith.addf %172, %171 : vector<16x128xf32>
    %174 = arith.divf %172, %173 : vector<16x128xf32>
    %175 = vector.extract_strided_slice %162 {offsets = [0, 256], sizes = [16, 128], strides = [1, 1]} : vector<16x512xf32> to vector<16x128xf32>
    %176 = math.tanh %175 : vector<16x128xf32>
    %177 = vector.extract_strided_slice %162 {offsets = [0, 384], sizes = [16, 128], strides = [1, 1]} : vector<16x512xf32> to vector<16x128xf32>
    %178 = arith.negf %177 : vector<16x128xf32>
    %179 = math.exp %178 : vector<16x128xf32>
    %cst_45 = arith.constant 1.000000e+00 : f32
    %180 = vector.broadcast %cst_45 : f32 to vector<16x128xf32>
    %181 = arith.addf %180, %179 : vector<16x128xf32>
    %182 = arith.divf %180, %181 : vector<16x128xf32>
    %183 = arith.mulf %174, %155 : vector<16x128xf32>
    %184 = arith.mulf %168, %176 : vector<16x128xf32>
    %185 = arith.addf %183, %184 : vector<16x128xf32>
    %186 = math.tanh %185 : vector<16x128xf32>
    %187 = arith.mulf %182, %186 : vector<16x128xf32>
    %188 = arith.addi %12, %c3_i32 : i32
    %189 = vector.broadcast %188 : i32 to vector<16x1xi32>
    %190 = arith.cmpi slt, %189, %11 : vector<16x1xi32>
    %cst_46 = arith.constant 0.000000e+00 : f32
    %191 = vector.shape_cast %190 : vector<16x1xi1> to vector<16x1xi1>
    %192 = vector.broadcast %191 : vector<16x1xi1> to vector<16x128xi1>
    %193 = vector.broadcast %cst_46 : f32 to vector<16x128xf32>
    %194 = arith.select %192, %187, %193 : vector<16x128xi1>, vector<16x128xf32>
    %195 = arith.index_cast %157 : i32 to index
    %c0_47 = arith.constant 0 : index
    %196 = vector.load %arg8[%195, %c0_47] : memref<128x128xf32, #tpu.memory_space<vmem>>, vector<16x128xf32>
    tpu.vector_store %arg8[%195, %c0_47], %194 {strides = array<i32>} : memref<128x128xf32, #tpu.memory_space<vmem>>, vector<16x128xf32>,
    %197 = vector.shape_cast %190 : vector<16x1xi1> to vector<16x1xi1>
    %198 = vector.broadcast %197 : vector<16x1xi1> to vector<16x128xi1>
    %199 = arith.select %198, %187, %152 : vector<16x128xi1>, vector<16x128xf32>
    %200 = vector.shape_cast %190 : vector<16x1xi1> to vector<16x1xi1>
    %201 = vector.broadcast %200 : vector<16x1xi1> to vector<16x128xi1>
    %202 = arith.select %201, %185, %155 : vector<16x128xi1>, vector<16x128xf32>
    %c4_i32 = arith.constant 4 : i32
    %c16_i32_48 = arith.constant 16 : i32
    %203 = arith.muli %c4_i32, %c16_i32_48 : i32
    %204 = tpu.assume_multiple %203, 8 : i32
    %205 = arith.index_cast %204 : i32 to index
    %c0_49 = arith.constant 0 : index
    %206 = vector.load %arg11[%205, %c0_49] : memref<128x512xf32, #tpu.memory_space<vmem>>, vector<16x512xf32>
    %207 = arith.truncf %199 : vector<16x128xf32> to vector<16x128xbf16>
    %cst_50 = arith.constant dense<0.000000e+00> : vector<16x512xf32>
    %208 = tpu.matmul %207, %10, %cst_50 {dimension_numbers = #tpu.dot_dimension_numbers<[1], [0], [0], [1], [0, 0, 1, 1], [], []>} : vector<16x128xbf16>, vector<128x512xbf16>, vector<16x512xf32> -> vector<16x512xf32>
    %209 = arith.addf %206, %208 : vector<16x512xf32>
    %210 = vector.extract_strided_slice %209 {offsets = [0, 0], sizes = [16, 128], strides = [1, 1]} : vector<16x512xf32> to vector<16x128xf32>
    %211 = arith.negf %210 : vector<16x128xf32>
    %212 = math.exp %211 : vector<16x128xf32>
    %cst_51 = arith.constant 1.000000e+00 : f32
    %213 = vector.broadcast %cst_51 : f32 to vector<16x128xf32>
    %214 = arith.addf %213, %212 : vector<16x128xf32>
    %215 = arith.divf %213, %214 : vector<16x128xf32>
    %216 = vector.extract_strided_slice %209 {offsets = [0, 128], sizes = [16, 128], strides = [1, 1]} : vector<16x512xf32> to vector<16x128xf32>
    %217 = arith.negf %216 : vector<16x128xf32>
    %218 = math.exp %217 : vector<16x128xf32>
    %cst_52 = arith.constant 1.000000e+00 : f32
    %219 = vector.broadcast %cst_52 : f32 to vector<16x128xf32>
    %220 = arith.addf %219, %218 : vector<16x128xf32>
    %221 = arith.divf %219, %220 : vector<16x128xf32>
    %222 = vector.extract_strided_slice %209 {offsets = [0, 256], sizes = [16, 128], strides = [1, 1]} : vector<16x512xf32> to vector<16x128xf32>
    %223 = math.tanh %222 : vector<16x128xf32>
    %224 = vector.extract_strided_slice %209 {offsets = [0, 384], sizes = [16, 128], strides = [1, 1]} : vector<16x512xf32> to vector<16x128xf32>
    %225 = arith.negf %224 : vector<16x128xf32>
    %226 = math.exp %225 : vector<16x128xf32>
    %cst_53 = arith.constant 1.000000e+00 : f32
    %227 = vector.broadcast %cst_53 : f32 to vector<16x128xf32>
    %228 = arith.addf %227, %226 : vector<16x128xf32>
    %229 = arith.divf %227, %228 : vector<16x128xf32>
    %230 = arith.mulf %221, %202 : vector<16x128xf32>
    %231 = arith.mulf %215, %223 : vector<16x128xf32>
    %232 = arith.addf %230, %231 : vector<16x128xf32>
    %233 = math.tanh %232 : vector<16x128xf32>
    %234 = arith.mulf %229, %233 : vector<16x128xf32>
    %235 = arith.addi %12, %c4_i32 : i32
    %236 = vector.broadcast %235 : i32 to vector<16x1xi32>
    %237 = arith.cmpi slt, %236, %11 : vector<16x1xi32>
    %cst_54 = arith.constant 0.000000e+00 : f32
    %238 = vector.shape_cast %237 : vector<16x1xi1> to vector<16x1xi1>
    %239 = vector.broadcast %238 : vector<16x1xi1> to vector<16x128xi1>
    %240 = vector.broadcast %cst_54 : f32 to vector<16x128xf32>
    %241 = arith.select %239, %234, %240 : vector<16x128xi1>, vector<16x128xf32>
    %242 = arith.index_cast %204 : i32 to index
    %c0_55 = arith.constant 0 : index
    %243 = vector.load %arg8[%242, %c0_55] : memref<128x128xf32, #tpu.memory_space<vmem>>, vector<16x128xf32>
    tpu.vector_store %arg8[%242, %c0_55], %241 {strides = array<i32>} : memref<128x128xf32, #tpu.memory_space<vmem>>, vector<16x128xf32>,
    %244 = vector.shape_cast %237 : vector<16x1xi1> to vector<16x1xi1>
    %245 = vector.broadcast %244 : vector<16x1xi1> to vector<16x128xi1>
    %246 = arith.select %245, %234, %199 : vector<16x128xi1>, vector<16x128xf32>
    %247 = vector.shape_cast %237 : vector<16x1xi1> to vector<16x1xi1>
    %248 = vector.broadcast %247 : vector<16x1xi1> to vector<16x128xi1>
    %249 = arith.select %248, %232, %202 : vector<16x128xi1>, vector<16x128xf32>
    %c5_i32 = arith.constant 5 : i32
    %c16_i32_56 = arith.constant 16 : i32
    %250 = arith.muli %c5_i32, %c16_i32_56 : i32
    %251 = tpu.assume_multiple %250, 8 : i32
    %252 = arith.index_cast %251 : i32 to index
    %c0_57 = arith.constant 0 : index
    %253 = vector.load %arg11[%252, %c0_57] : memref<128x512xf32, #tpu.memory_space<vmem>>, vector<16x512xf32>
    %254 = arith.truncf %246 : vector<16x128xf32> to vector<16x128xbf16>
    %cst_58 = arith.constant dense<0.000000e+00> : vector<16x512xf32>
    %255 = tpu.matmul %254, %10, %cst_58 {dimension_numbers = #tpu.dot_dimension_numbers<[1], [0], [0], [1], [0, 0, 1, 1], [], []>} : vector<16x128xbf16>, vector<128x512xbf16>, vector<16x512xf32> -> vector<16x512xf32>
    %256 = arith.addf %253, %255 : vector<16x512xf32>
    %257 = vector.extract_strided_slice %256 {offsets = [0, 0], sizes = [16, 128], strides = [1, 1]} : vector<16x512xf32> to vector<16x128xf32>
    %258 = arith.negf %257 : vector<16x128xf32>
    %259 = math.exp %258 : vector<16x128xf32>
    %cst_59 = arith.constant 1.000000e+00 : f32
    %260 = vector.broadcast %cst_59 : f32 to vector<16x128xf32>
    %261 = arith.addf %260, %259 : vector<16x128xf32>
    %262 = arith.divf %260, %261 : vector<16x128xf32>
    %263 = vector.extract_strided_slice %256 {offsets = [0, 128], sizes = [16, 128], strides = [1, 1]} : vector<16x512xf32> to vector<16x128xf32>
    %264 = arith.negf %263 : vector<16x128xf32>
    %265 = math.exp %264 : vector<16x128xf32>
    %cst_60 = arith.constant 1.000000e+00 : f32
    %266 = vector.broadcast %cst_60 : f32 to vector<16x128xf32>
    %267 = arith.addf %266, %265 : vector<16x128xf32>
    %268 = arith.divf %266, %267 : vector<16x128xf32>
    %269 = vector.extract_strided_slice %256 {offsets = [0, 256], sizes = [16, 128], strides = [1, 1]} : vector<16x512xf32> to vector<16x128xf32>
    %270 = math.tanh %269 : vector<16x128xf32>
    %271 = vector.extract_strided_slice %256 {offsets = [0, 384], sizes = [16, 128], strides = [1, 1]} : vector<16x512xf32> to vector<16x128xf32>
    %272 = arith.negf %271 : vector<16x128xf32>
    %273 = math.exp %272 : vector<16x128xf32>
    %cst_61 = arith.constant 1.000000e+00 : f32
    %274 = vector.broadcast %cst_61 : f32 to vector<16x128xf32>
    %275 = arith.addf %274, %273 : vector<16x128xf32>
    %276 = arith.divf %274, %275 : vector<16x128xf32>
    %277 = arith.mulf %268, %249 : vector<16x128xf32>
    %278 = arith.mulf %262, %270 : vector<16x128xf32>
    %279 = arith.addf %277, %278 : vector<16x128xf32>
    %280 = math.tanh %279 : vector<16x128xf32>
    %281 = arith.mulf %276, %280 : vector<16x128xf32>
    %282 = arith.addi %12, %c5_i32 : i32
    %283 = vector.broadcast %282 : i32 to vector<16x1xi32>
    %284 = arith.cmpi slt, %283, %11 : vector<16x1xi32>
    %cst_62 = arith.constant 0.000000e+00 : f32
    %285 = vector.shape_cast %284 : vector<16x1xi1> to vector<16x1xi1>
    %286 = vector.broadcast %285 : vector<16x1xi1> to vector<16x128xi1>
    %287 = vector.broadcast %cst_62 : f32 to vector<16x128xf32>
    %288 = arith.select %286, %281, %287 : vector<16x128xi1>, vector<16x128xf32>
    %289 = arith.index_cast %251 : i32 to index
    %c0_63 = arith.constant 0 : index
    %290 = vector.load %arg8[%289, %c0_63] : memref<128x128xf32, #tpu.memory_space<vmem>>, vector<16x128xf32>
    tpu.vector_store %arg8[%289, %c0_63], %288 {strides = array<i32>} : memref<128x128xf32, #tpu.memory_space<vmem>>, vector<16x128xf32>,
    %291 = vector.shape_cast %284 : vector<16x1xi1> to vector<16x1xi1>
    %292 = vector.broadcast %291 : vector<16x1xi1> to vector<16x128xi1>
    %293 = arith.select %292, %281, %246 : vector<16x128xi1>, vector<16x128xf32>
    %294 = vector.shape_cast %284 : vector<16x1xi1> to vector<16x1xi1>
    %295 = vector.broadcast %294 : vector<16x1xi1> to vector<16x128xi1>
    %296 = arith.select %295, %279, %249 : vector<16x128xi1>, vector<16x128xf32>
    %c6_i32 = arith.constant 6 : i32
    %c16_i32_64 = arith.constant 16 : i32
    %297 = arith.muli %c6_i32, %c16_i32_64 : i32
    %298 = tpu.assume_multiple %297, 8 : i32
    %299 = arith.index_cast %298 : i32 to index
    %c0_65 = arith.constant 0 : index
    %300 = vector.load %arg11[%299, %c0_65] : memref<128x512xf32, #tpu.memory_space<vmem>>, vector<16x512xf32>
    %301 = arith.truncf %293 : vector<16x128xf32> to vector<16x128xbf16>
    %cst_66 = arith.constant dense<0.000000e+00> : vector<16x512xf32>
    %302 = tpu.matmul %301, %10, %cst_66 {dimension_numbers = #tpu.dot_dimension_numbers<[1], [0], [0], [1], [0, 0, 1, 1], [], []>} : vector<16x128xbf16>, vector<128x512xbf16>, vector<16x512xf32> -> vector<16x512xf32>
    %303 = arith.addf %300, %302 : vector<16x512xf32>
    %304 = vector.extract_strided_slice %303 {offsets = [0, 0], sizes = [16, 128], strides = [1, 1]} : vector<16x512xf32> to vector<16x128xf32>
    %305 = arith.negf %304 : vector<16x128xf32>
    %306 = math.exp %305 : vector<16x128xf32>
    %cst_67 = arith.constant 1.000000e+00 : f32
    %307 = vector.broadcast %cst_67 : f32 to vector<16x128xf32>
    %308 = arith.addf %307, %306 : vector<16x128xf32>
    %309 = arith.divf %307, %308 : vector<16x128xf32>
    %310 = vector.extract_strided_slice %303 {offsets = [0, 128], sizes = [16, 128], strides = [1, 1]} : vector<16x512xf32> to vector<16x128xf32>
    %311 = arith.negf %310 : vector<16x128xf32>
    %312 = math.exp %311 : vector<16x128xf32>
    %cst_68 = arith.constant 1.000000e+00 : f32
    %313 = vector.broadcast %cst_68 : f32 to vector<16x128xf32>
    %314 = arith.addf %313, %312 : vector<16x128xf32>
    %315 = arith.divf %313, %314 : vector<16x128xf32>
    %316 = vector.extract_strided_slice %303 {offsets = [0, 256], sizes = [16, 128], strides = [1, 1]} : vector<16x512xf32> to vector<16x128xf32>
    %317 = math.tanh %316 : vector<16x128xf32>
    %318 = vector.extract_strided_slice %303 {offsets = [0, 384], sizes = [16, 128], strides = [1, 1]} : vector<16x512xf32> to vector<16x128xf32>
    %319 = arith.negf %318 : vector<16x128xf32>
    %320 = math.exp %319 : vector<16x128xf32>
    %cst_69 = arith.constant 1.000000e+00 : f32
    %321 = vector.broadcast %cst_69 : f32 to vector<16x128xf32>
    %322 = arith.addf %321, %320 : vector<16x128xf32>
    %323 = arith.divf %321, %322 : vector<16x128xf32>
    %324 = arith.mulf %315, %296 : vector<16x128xf32>
    %325 = arith.mulf %309, %317 : vector<16x128xf32>
    %326 = arith.addf %324, %325 : vector<16x128xf32>
    %327 = math.tanh %326 : vector<16x128xf32>
    %328 = arith.mulf %323, %327 : vector<16x128xf32>
    %329 = arith.addi %12, %c6_i32 : i32
    %330 = vector.broadcast %329 : i32 to vector<16x1xi32>
    %331 = arith.cmpi slt, %330, %11 : vector<16x1xi32>
    %cst_70 = arith.constant 0.000000e+00 : f32
    %332 = vector.shape_cast %331 : vector<16x1xi1> to vector<16x1xi1>
    %333 = vector.broadcast %332 : vector<16x1xi1> to vector<16x128xi1>
    %334 = vector.broadcast %cst_70 : f32 to vector<16x128xf32>
    %335 = arith.select %333, %328, %334 : vector<16x128xi1>, vector<16x128xf32>
    %336 = arith.index_cast %298 : i32 to index
    %c0_71 = arith.constant 0 : index
    %337 = vector.load %arg8[%336, %c0_71] : memref<128x128xf32, #tpu.memory_space<vmem>>, vector<16x128xf32>
    tpu.vector_store %arg8[%336, %c0_71], %335 {strides = array<i32>} : memref<128x128xf32, #tpu.memory_space<vmem>>, vector<16x128xf32>,
    %338 = vector.shape_cast %331 : vector<16x1xi1> to vector<16x1xi1>
    %339 = vector.broadcast %338 : vector<16x1xi1> to vector<16x128xi1>
    %340 = arith.select %339, %328, %293 : vector<16x128xi1>, vector<16x128xf32>
    %341 = vector.shape_cast %331 : vector<16x1xi1> to vector<16x1xi1>
    %342 = vector.broadcast %341 : vector<16x1xi1> to vector<16x128xi1>
    %343 = arith.select %342, %326, %296 : vector<16x128xi1>, vector<16x128xf32>
    %c7_i32 = arith.constant 7 : i32
    %c16_i32_72 = arith.constant 16 : i32
    %344 = arith.muli %c7_i32, %c16_i32_72 : i32
    %345 = tpu.assume_multiple %344, 8 : i32
    %346 = arith.index_cast %345 : i32 to index
    %c0_73 = arith.constant 0 : index
    %347 = vector.load %arg11[%346, %c0_73] : memref<128x512xf32, #tpu.memory_space<vmem>>, vector<16x512xf32>
    %348 = arith.truncf %340 : vector<16x128xf32> to vector<16x128xbf16>
    %cst_74 = arith.constant dense<0.000000e+00> : vector<16x512xf32>
    %349 = tpu.matmul %348, %10, %cst_74 {dimension_numbers = #tpu.dot_dimension_numbers<[1], [0], [0], [1], [0, 0, 1, 1], [], []>} : vector<16x128xbf16>, vector<128x512xbf16>, vector<16x512xf32> -> vector<16x512xf32>
    %350 = arith.addf %347, %349 : vector<16x512xf32>
    %351 = vector.extract_strided_slice %350 {offsets = [0, 0], sizes = [16, 128], strides = [1, 1]} : vector<16x512xf32> to vector<16x128xf32>
    %352 = arith.negf %351 : vector<16x128xf32>
    %353 = math.exp %352 : vector<16x128xf32>
    %cst_75 = arith.constant 1.000000e+00 : f32
    %354 = vector.broadcast %cst_75 : f32 to vector<16x128xf32>
    %355 = arith.addf %354, %353 : vector<16x128xf32>
    %356 = arith.divf %354, %355 : vector<16x128xf32>
    %357 = vector.extract_strided_slice %350 {offsets = [0, 128], sizes = [16, 128], strides = [1, 1]} : vector<16x512xf32> to vector<16x128xf32>
    %358 = arith.negf %357 : vector<16x128xf32>
    %359 = math.exp %358 : vector<16x128xf32>
    %cst_76 = arith.constant 1.000000e+00 : f32
    %360 = vector.broadcast %cst_76 : f32 to vector<16x128xf32>
    %361 = arith.addf %360, %359 : vector<16x128xf32>
    %362 = arith.divf %360, %361 : vector<16x128xf32>
    %363 = vector.extract_strided_slice %350 {offsets = [0, 256], sizes = [16, 128], strides = [1, 1]} : vector<16x512xf32> to vector<16x128xf32>
    %364 = math.tanh %363 : vector<16x128xf32>
    %365 = vector.extract_strided_slice %350 {offsets = [0, 384], sizes = [16, 128], strides = [1, 1]} : vector<16x512xf32> to vector<16x128xf32>
    %366 = arith.negf %365 : vector<16x128xf32>
    %367 = math.exp %366 : vector<16x128xf32>
    %cst_77 = arith.constant 1.000000e+00 : f32
    %368 = vector.broadcast %cst_77 : f32 to vector<16x128xf32>
    %369 = arith.addf %368, %367 : vector<16x128xf32>
    %370 = arith.divf %368, %369 : vector<16x128xf32>
    %371 = arith.mulf %362, %343 : vector<16x128xf32>
    %372 = arith.mulf %356, %364 : vector<16x128xf32>
    %373 = arith.addf %371, %372 : vector<16x128xf32>
    %374 = math.tanh %373 : vector<16x128xf32>
    %375 = arith.mulf %370, %374 : vector<16x128xf32>
    %376 = arith.addi %12, %c7_i32 : i32
    %377 = vector.broadcast %376 : i32 to vector<16x1xi32>
    %378 = arith.cmpi slt, %377, %11 : vector<16x1xi32>
    %cst_78 = arith.constant 0.000000e+00 : f32
    %379 = vector.shape_cast %378 : vector<16x1xi1> to vector<16x1xi1>
    %380 = vector.broadcast %379 : vector<16x1xi1> to vector<16x128xi1>
    %381 = vector.broadcast %cst_78 : f32 to vector<16x128xf32>
    %382 = arith.select %380, %375, %381 : vector<16x128xi1>, vector<16x128xf32>
    %383 = arith.index_cast %345 : i32 to index
    %c0_79 = arith.constant 0 : index
    %384 = vector.load %arg8[%383, %c0_79] : memref<128x128xf32, #tpu.memory_space<vmem>>, vector<16x128xf32>
    tpu.vector_store %arg8[%383, %c0_79], %382 {strides = array<i32>} : memref<128x128xf32, #tpu.memory_space<vmem>>, vector<16x128xf32>,
    %385 = vector.shape_cast %378 : vector<16x1xi1> to vector<16x1xi1>
    %386 = vector.broadcast %385 : vector<16x1xi1> to vector<16x128xi1>
    %387 = arith.select %386, %375, %340 : vector<16x128xi1>, vector<16x128xf32>
    %388 = vector.shape_cast %378 : vector<16x1xi1> to vector<16x1xi1>
    %389 = vector.broadcast %388 : vector<16x1xi1> to vector<16x128xi1>
    %390 = arith.select %389, %373, %343 : vector<16x128xi1>, vector<16x128xf32>
    %c8_i32_80 = arith.constant 8 : i32
    %c0_81 = arith.constant 0 : index
    %c0_82 = arith.constant 0 : index
    %391 = vector.load %arg9[%c0_81, %c0_82] : memref<16x128xf32, #tpu.memory_space<vmem>>, vector<16x128xf32>
    tpu.vector_store %arg9[%c0_81, %c0_82], %387 {strides = array<i32>} : memref<16x128xf32, #tpu.memory_space<vmem>>, vector<16x128xf32>,
    %c0_83 = arith.constant 0 : index
    %c0_84 = arith.constant 0 : index
    %392 = vector.load %arg10[%c0_83, %c0_84] : memref<16x128xf32, #tpu.memory_space<vmem>>, vector<16x128xf32>
    tpu.vector_store %arg10[%c0_83, %c0_84], %390 {strides = array<i32>} : memref<16x128xf32, #tpu.memory_space<vmem>>, vector<16x128xf32>,
    return
  }
  func.func @transform_0(%arg0: i32) -> (i32, i32) {
    %c0_i32 = arith.constant 0 : i32
    %c0_i32_0 = arith.constant 0 : i32
    return %arg0, %c0_i32 : i32, i32
  }
  func.func @transform_1(%arg0: i32) -> (i32, i32) {
    %c0_i32 = arith.constant 0 : i32
    %c0_i32_0 = arith.constant 0 : i32
    %c0_i32_1 = arith.constant 0 : i32
    return %c0_i32, %c0_i32_0 : i32, i32
  }
  func.func @transform_2(%arg0: i32) -> (i32, i32) {
    %c0_i32 = arith.constant 0 : i32
    %c0_i32_0 = arith.constant 0 : i32
    %c0_i32_1 = arith.constant 0 : i32
    return %c0_i32, %c0_i32_0 : i32, i32
  }
  func.func @transform_3(%arg0: i32) -> (i32, i32) {
    %c0_i32 = arith.constant 0 : i32
    %c0_i32_0 = arith.constant 0 : i32
    %c0_i32_1 = arith.constant 0 : i32
    return %c0_i32, %c0_i32_0 : i32, i32
  }
  func.func @transform_4(%arg0: i32) -> (i32, i32) {
    %c0_i32 = arith.constant 0 : i32
    %c0_i32_0 = arith.constant 0 : i32
    %c0_i32_1 = arith.constant 0 : i32
    return %c0_i32, %c0_i32_0 : i32, i32
  }
  func.func @transform_5(%arg0: i32) -> (i32, i32) {
    %c0_i32 = arith.constant 0 : i32
    %c0_i32_0 = arith.constant 0 : i32
    %c0_i32_1 = arith.constant 0 : i32
    return %c0_i32, %c0_i32_0 : i32, i32
  }
  func.func @transform_6(%arg0: i32) -> (i32, i32) {
    %c0_i32 = arith.constant 0 : i32
    %c0_i32_0 = arith.constant 0 : i32
    %c0_i32_1 = arith.constant 0 : i32
    return %c0_i32, %c0_i32_0 : i32, i32
  }
  func.func @transform_7(%arg0: i32) -> (i32, i32) {
    %c0_i32 = arith.constant 0 : i32
    %c0_i32_0 = arith.constant 0 : i32
    return %arg0, %c0_i32 : i32, i32
  }
  func.func @transform_8(%arg0: i32) -> (i32, i32) {
    %c0_i32 = arith.constant 0 : i32
    %c0_i32_0 = arith.constant 0 : i32
    %c0_i32_1 = arith.constant 0 : i32
    return %c0_i32, %c0_i32_0 : i32, i32
  }
  func.func @transform_9(%arg0: i32) -> (i32, i32) {
    %c0_i32 = arith.constant 0 : i32
    %c0_i32_0 = arith.constant 0 : i32
    %c0_i32_1 = arith.constant 0 : i32
    return %c0_i32, %c0_i32_0 : i32, i32
  }
}

module attributes {stable_mosaic.version = 11 : i64} {
  func.func @_lstm_layer_kernel(%arg0: i32, %arg1: memref<128x128xbf16, #tpu.memory_space<vmem>>, %arg2: memref<128x512xbf16, #tpu.memory_space<vmem>>, %arg3: memref<128x512xbf16, #tpu.memory_space<vmem>>, %arg4: memref<1x512xf32, #tpu.memory_space<vmem>>, %arg5: memref<16x1xi32, #tpu.memory_space<vmem>>, %arg6: memref<16x128xf32, #tpu.memory_space<vmem>>, %arg7: memref<16x128xf32, #tpu.memory_space<vmem>>, %arg8: memref<128x128xbf16, #tpu.memory_space<vmem>>, %arg9: memref<16x128xf32, #tpu.memory_space<vmem>>, %arg10: memref<16x128xf32, #tpu.memory_space<vmem>>, %arg11: memref<128x512xf32, #tpu.memory_space<vmem>>) attributes {dimension_semantics = [#tpu.dimension_semantics<arbitrary>], iteration_bounds = array<i64: 1>, scalar_prefetch = 0 : i64, scratch_operands = 1 : i64, tpu.core_type = #tpu.core_type<tc>, window_params = [{transform_indices = @transform_0, window_bounds = array<i64: 128, 128>}, {pipeline_mode = #tpu.pipeline_mode<synchronous>, transform_indices = @transform_1, window_bounds = array<i64: 128, 512>}, {pipeline_mode = #tpu.pipeline_mode<synchronous>, transform_indices = @transform_2, window_bounds = array<i64: 128, 512>}, {pipeline_mode = #tpu.pipeline_mode<synchronous>, transform_indices = @transform_3, window_bounds = array<i64: 1, 512>}, {pipeline_mode = #tpu.pipeline_mode<synchronous>, transform_indices = @transform_4, window_bounds = array<i64: 16, 1>}, {pipeline_mode = #tpu.pipeline_mode<synchronous>, transform_indices = @transform_5, window_bounds = array<i64: 16, 128>}, {pipeline_mode = #tpu.pipeline_mode<synchronous>, transform_indices = @transform_6, window_bounds = array<i64: 16, 128>}, {transform_indices = @transform_7, window_bounds = array<i64: 128, 128>}, {pipeline_mode = #tpu.pipeline_mode<synchronous>, transform_indices = @transform_8, window_bounds = array<i64: 16, 128>}, {pipeline_mode = #tpu.pipeline_mode<synchronous>, transform_indices = @transform_9, window_bounds = array<i64: 16, 128>}]} {
    %c0_i32 = arith.constant 0 : i32
    %0 = arith.cmpi eq, %arg0, %c0_i32 : i32
    %1 = arith.extui %0 : i1 to i32
    %c0_i32_0 = arith.constant 0 : i32
    %2 = arith.cmpi ne, %1, %c0_i32_0 : i32
    scf.if %2 {
      %c0_85 = arith.constant 0 : index
      %c0_86 = arith.constant 0 : index
      %401 = vector.load %arg6[%c0_85, %c0_86] : memref<16x128xf32, #tpu.memory_space<vmem>>, vector<16x128xf32>
      %c0_87 = arith.constant 0 : index
      %c0_88 = arith.constant 0 : index
      %402 = vector.load %arg9[%c0_87, %c0_88] : memref<16x128xf32, #tpu.memory_space<vmem>>, vector<16x128xf32>
      tpu.vector_store %arg9[%c0_87, %c0_88], %401 {strides = array<i32>} : memref<16x128xf32, #tpu.memory_space<vmem>>, vector<16x128xf32>,
      %c0_89 = arith.constant 0 : index
      %c0_90 = arith.constant 0 : index
      %403 = vector.load %arg7[%c0_89, %c0_90] : memref<16x128xf32, #tpu.memory_space<vmem>>, vector<16x128xf32>
      %c0_91 = arith.constant 0 : index
      %c0_92 = arith.constant 0 : index
      %404 = vector.load %arg10[%c0_91, %c0_92] : memref<16x128xf32, #tpu.memory_space<vmem>>, vector<16x128xf32>
      tpu.vector_store %arg10[%c0_91, %c0_92], %403 {strides = array<i32>} : memref<16x128xf32, #tpu.memory_space<vmem>>, vector<16x128xf32>,
    } else {
    }
    %c0 = arith.constant 0 : index
    %c0_1 = arith.constant 0 : index
    %3 = vector.load %arg1[%c0, %c0_1] : memref<128x128xbf16, #tpu.memory_space<vmem>>, vector<128x128xbf16>
    %c0_2 = arith.constant 0 : index
    %c0_3 = arith.constant 0 : index
    %4 = vector.load %arg2[%c0_2, %c0_3] : memref<128x512xbf16, #tpu.memory_space<vmem>>, vector<128x512xbf16>
    %cst = arith.constant dense<0.000000e+00> : vector<128x512xf32>
    %5 = tpu.matmul %3, %4, %cst {dimension_numbers = #tpu.dot_dimension_numbers<[1], [0], [0], [1], [0, 0, 1, 1], [], []>} : vector<128x128xbf16>, vector<128x512xbf16>, vector<128x512xf32> -> vector<128x512xf32>
    %c0_4 = arith.constant 0 : index
    %c0_5 = arith.constant 0 : index
    %6 = vector.load %arg4[%c0_4, %c0_5] : memref<1x512xf32, #tpu.memory_space<vmem>>, vector<1x512xf32>
    %7 = vector.broadcast %6 : vector<1x512xf32> to vector<128x512xf32>
    %8 = arith.addf %5, %7 : vector<128x512xf32>
    %c0_6 = arith.constant 0 : index
    %c0_7 = arith.constant 0 : index
    %9 = vector.load %arg11[%c0_6, %c0_7] : memref<128x512xf32, #tpu.memory_space<vmem>>, vector<128x512xf32>
    tpu.vector_store %arg11[%c0_6, %c0_7], %8 {strides = array<i32>} : memref<128x512xf32, #tpu.memory_space<vmem>>, vector<128x512xf32>,
    %c0_8 = arith.constant 0 : index
    %c0_9 = arith.constant 0 : index
    %10 = vector.load %arg3[%c0_8, %c0_9] : memref<128x512xbf16, #tpu.memory_space<vmem>>, vector<128x512xbf16>
    %c0_10 = arith.constant 0 : index
    %c0_11 = arith.constant 0 : index
    %11 = vector.load %arg5[%c0_10, %c0_11] : memref<16x1xi32, #tpu.memory_space<vmem>>, vector<16x1xi32>
    %c8_i32 = arith.constant 8 : i32
    %12 = arith.muli %arg0, %c8_i32 : i32
    %c0_12 = arith.constant 0 : index
    %c0_13 = arith.constant 0 : index
    %13 = vector.load %arg9[%c0_12, %c0_13] : memref<16x128xf32, #tpu.memory_space<vmem>>, vector<16x128xf32>
    %c0_14 = arith.constant 0 : index
    %c0_15 = arith.constant 0 : index
    %14 = vector.load %arg10[%c0_14, %c0_15] : memref<16x128xf32, #tpu.memory_space<vmem>>, vector<16x128xf32>
    %c0_i32_16 = arith.constant 0 : i32
    %c16_i32 = arith.constant 16 : i32
    %15 = arith.muli %c0_i32_16, %c16_i32 : i32
    %16 = tpu.assume_multiple %15, 8 : i32
    %17 = arith.index_cast %16 : i32 to index
    %c0_17 = arith.constant 0 : index
    %18 = vector.load %arg11[%17, %c0_17] : memref<128x512xf32, #tpu.memory_space<vmem>>, vector<16x512xf32>
    %19 = arith.truncf %13 : vector<16x128xf32> to vector<16x128xbf16>
    %cst_18 = arith.constant dense<0.000000e+00> : vector<16x512xf32>
    %20 = tpu.matmul %19, %10, %cst_18 {dimension_numbers = #tpu.dot_dimension_numbers<[1], [0], [0], [1], [0, 0, 1, 1], [], []>} : vector<16x128xbf16>, vector<128x512xbf16>, vector<16x512xf32> -> vector<16x512xf32>
    %21 = arith.addf %18, %20 : vector<16x512xf32>
    %22 = vector.extract_strided_slice %21 {offsets = [0, 0], sizes = [16, 128], strides = [1, 1]} : vector<16x512xf32> to vector<16x128xf32>
    %23 = arith.negf %22 : vector<16x128xf32>
    %24 = math.exp %23 : vector<16x128xf32>
    %cst_19 = arith.constant 1.000000e+00 : f32
    %25 = vector.broadcast %cst_19 : f32 to vector<16x128xf32>
    %26 = arith.addf %25, %24 : vector<16x128xf32>
    %27 = arith.divf %25, %26 : vector<16x128xf32>
    %28 = vector.extract_strided_slice %21 {offsets = [0, 128], sizes = [16, 128], strides = [1, 1]} : vector<16x512xf32> to vector<16x128xf32>
    %29 = arith.negf %28 : vector<16x128xf32>
    %30 = math.exp %29 : vector<16x128xf32>
    %cst_20 = arith.constant 1.000000e+00 : f32
    %31 = vector.broadcast %cst_20 : f32 to vector<16x128xf32>
    %32 = arith.addf %31, %30 : vector<16x128xf32>
    %33 = arith.divf %31, %32 : vector<16x128xf32>
    %34 = vector.extract_strided_slice %21 {offsets = [0, 256], sizes = [16, 128], strides = [1, 1]} : vector<16x512xf32> to vector<16x128xf32>
    %35 = math.tanh %34 : vector<16x128xf32>
    %36 = vector.extract_strided_slice %21 {offsets = [0, 384], sizes = [16, 128], strides = [1, 1]} : vector<16x512xf32> to vector<16x128xf32>
    %37 = arith.negf %36 : vector<16x128xf32>
    %38 = math.exp %37 : vector<16x128xf32>
    %cst_21 = arith.constant 1.000000e+00 : f32
    %39 = vector.broadcast %cst_21 : f32 to vector<16x128xf32>
    %40 = arith.addf %39, %38 : vector<16x128xf32>
    %41 = arith.divf %39, %40 : vector<16x128xf32>
    %42 = arith.mulf %33, %14 : vector<16x128xf32>
    %43 = arith.mulf %27, %35 : vector<16x128xf32>
    %44 = arith.addf %42, %43 : vector<16x128xf32>
    %45 = math.tanh %44 : vector<16x128xf32>
    %46 = arith.mulf %41, %45 : vector<16x128xf32>
    %47 = arith.addi %12, %c0_i32_16 : i32
    %48 = vector.broadcast %47 : i32 to vector<16x1xi32>
    %49 = arith.cmpi slt, %48, %11 : vector<16x1xi32>
    %cst_22 = arith.constant 0.000000e+00 : f32
    %50 = vector.shape_cast %49 : vector<16x1xi1> to vector<16x1xi1>
    %51 = vector.broadcast %50 : vector<16x1xi1> to vector<16x128xi1>
    %52 = vector.broadcast %cst_22 : f32 to vector<16x128xf32>
    %53 = arith.select %51, %46, %52 : vector<16x128xi1>, vector<16x128xf32>
    %54 = arith.truncf %53 : vector<16x128xf32> to vector<16x128xbf16>
    %55 = arith.index_cast %16 : i32 to index
    %c0_23 = arith.constant 0 : index
    %56 = vector.load %arg8[%55, %c0_23] : memref<128x128xbf16, #tpu.memory_space<vmem>>, vector<16x128xbf16>
    tpu.vector_store %arg8[%55, %c0_23], %54 {strides = array<i32>} : memref<128x128xbf16, #tpu.memory_space<vmem>>, vector<16x128xbf16>,
    %57 = vector.shape_cast %49 : vector<16x1xi1> to vector<16x1xi1>
    %58 = vector.broadcast %57 : vector<16x1xi1> to vector<16x128xi1>
    %59 = arith.select %58, %46, %13 : vector<16x128xi1>, vector<16x128xf32>
    %60 = vector.shape_cast %49 : vector<16x1xi1> to vector<16x1xi1>
    %61 = vector.broadcast %60 : vector<16x1xi1> to vector<16x128xi1>
    %62 = arith.select %61, %44, %14 : vector<16x128xi1>, vector<16x128xf32>
    %c1_i32 = arith.constant 1 : i32
    %c16_i32_24 = arith.constant 16 : i32
    %63 = arith.muli %c1_i32, %c16_i32_24 : i32
    %64 = tpu.assume_multiple %63, 8 : i32
    %65 = arith.index_cast %64 : i32 to index
    %c0_25 = arith.constant 0 : index
    %66 = vector.load %arg11[%65, %c0_25] : memref<128x512xf32, #tpu.memory_space<vmem>>, vector<16x512xf32>
    %67 = arith.truncf %59 : vector<16x128xf32> to vector<16x128xbf16>
    %cst_26 = arith.constant dense<0.000000e+00> : vector<16x512xf32>
    %68 = tpu.matmul %67, %10, %cst_26 {dimension_numbers = #tpu.dot_dimension_numbers<[1], [0], [0], [1], [0, 0, 1, 1], [], []>} : vector<16x128xbf16>, vector<128x512xbf16>, vector<16x512xf32> -> vector<16x512xf32>
    %69 = arith.addf %66, %68 : vector<16x512xf32>
    %70 = vector.extract_strided_slice %69 {offsets = [0, 0], sizes = [16, 128], strides = [1, 1]} : vector<16x512xf32> to vector<16x128xf32>
    %71 = arith.negf %70 : vector<16x128xf32>
    %72 = math.exp %71 : vector<16x128xf32>
    %cst_27 = arith.constant 1.000000e+00 : f32
    %73 = vector.broadcast %cst_27 : f32 to vector<16x128xf32>
    %74 = arith.addf %73, %72 : vector<16x128xf32>
    %75 = arith.divf %73, %74 : vector<16x128xf32>
    %76 = vector.extract_strided_slice %69 {offsets = [0, 128], sizes = [16, 128], strides = [1, 1]} : vector<16x512xf32> to vector<16x128xf32>
    %77 = arith.negf %76 : vector<16x128xf32>
    %78 = math.exp %77 : vector<16x128xf32>
    %cst_28 = arith.constant 1.000000e+00 : f32
    %79 = vector.broadcast %cst_28 : f32 to vector<16x128xf32>
    %80 = arith.addf %79, %78 : vector<16x128xf32>
    %81 = arith.divf %79, %80 : vector<16x128xf32>
    %82 = vector.extract_strided_slice %69 {offsets = [0, 256], sizes = [16, 128], strides = [1, 1]} : vector<16x512xf32> to vector<16x128xf32>
    %83 = math.tanh %82 : vector<16x128xf32>
    %84 = vector.extract_strided_slice %69 {offsets = [0, 384], sizes = [16, 128], strides = [1, 1]} : vector<16x512xf32> to vector<16x128xf32>
    %85 = arith.negf %84 : vector<16x128xf32>
    %86 = math.exp %85 : vector<16x128xf32>
    %cst_29 = arith.constant 1.000000e+00 : f32
    %87 = vector.broadcast %cst_29 : f32 to vector<16x128xf32>
    %88 = arith.addf %87, %86 : vector<16x128xf32>
    %89 = arith.divf %87, %88 : vector<16x128xf32>
    %90 = arith.mulf %81, %62 : vector<16x128xf32>
    %91 = arith.mulf %75, %83 : vector<16x128xf32>
    %92 = arith.addf %90, %91 : vector<16x128xf32>
    %93 = math.tanh %92 : vector<16x128xf32>
    %94 = arith.mulf %89, %93 : vector<16x128xf32>
    %95 = arith.addi %12, %c1_i32 : i32
    %96 = vector.broadcast %95 : i32 to vector<16x1xi32>
    %97 = arith.cmpi slt, %96, %11 : vector<16x1xi32>
    %cst_30 = arith.constant 0.000000e+00 : f32
    %98 = vector.shape_cast %97 : vector<16x1xi1> to vector<16x1xi1>
    %99 = vector.broadcast %98 : vector<16x1xi1> to vector<16x128xi1>
    %100 = vector.broadcast %cst_30 : f32 to vector<16x128xf32>
    %101 = arith.select %99, %94, %100 : vector<16x128xi1>, vector<16x128xf32>
    %102 = arith.truncf %101 : vector<16x128xf32> to vector<16x128xbf16>
    %103 = arith.index_cast %64 : i32 to index
    %c0_31 = arith.constant 0 : index
    %104 = vector.load %arg8[%103, %c0_31] : memref<128x128xbf16, #tpu.memory_space<vmem>>, vector<16x128xbf16>
    tpu.vector_store %arg8[%103, %c0_31], %102 {strides = array<i32>} : memref<128x128xbf16, #tpu.memory_space<vmem>>, vector<16x128xbf16>,
    %105 = vector.shape_cast %97 : vector<16x1xi1> to vector<16x1xi1>
    %106 = vector.broadcast %105 : vector<16x1xi1> to vector<16x128xi1>
    %107 = arith.select %106, %94, %59 : vector<16x128xi1>, vector<16x128xf32>
    %108 = vector.shape_cast %97 : vector<16x1xi1> to vector<16x1xi1>
    %109 = vector.broadcast %108 : vector<16x1xi1> to vector<16x128xi1>
    %110 = arith.select %109, %92, %62 : vector<16x128xi1>, vector<16x128xf32>
    %c2_i32 = arith.constant 2 : i32
    %c16_i32_32 = arith.constant 16 : i32
    %111 = arith.muli %c2_i32, %c16_i32_32 : i32
    %112 = tpu.assume_multiple %111, 8 : i32
    %113 = arith.index_cast %112 : i32 to index
    %c0_33 = arith.constant 0 : index
    %114 = vector.load %arg11[%113, %c0_33] : memref<128x512xf32, #tpu.memory_space<vmem>>, vector<16x512xf32>
    %115 = arith.truncf %107 : vector<16x128xf32> to vector<16x128xbf16>
    %cst_34 = arith.constant dense<0.000000e+00> : vector<16x512xf32>
    %116 = tpu.matmul %115, %10, %cst_34 {dimension_numbers = #tpu.dot_dimension_numbers<[1], [0], [0], [1], [0, 0, 1, 1], [], []>} : vector<16x128xbf16>, vector<128x512xbf16>, vector<16x512xf32> -> vector<16x512xf32>
    %117 = arith.addf %114, %116 : vector<16x512xf32>
    %118 = vector.extract_strided_slice %117 {offsets = [0, 0], sizes = [16, 128], strides = [1, 1]} : vector<16x512xf32> to vector<16x128xf32>
    %119 = arith.negf %118 : vector<16x128xf32>
    %120 = math.exp %119 : vector<16x128xf32>
    %cst_35 = arith.constant 1.000000e+00 : f32
    %121 = vector.broadcast %cst_35 : f32 to vector<16x128xf32>
    %122 = arith.addf %121, %120 : vector<16x128xf32>
    %123 = arith.divf %121, %122 : vector<16x128xf32>
    %124 = vector.extract_strided_slice %117 {offsets = [0, 128], sizes = [16, 128], strides = [1, 1]} : vector<16x512xf32> to vector<16x128xf32>
    %125 = arith.negf %124 : vector<16x128xf32>
    %126 = math.exp %125 : vector<16x128xf32>
    %cst_36 = arith.constant 1.000000e+00 : f32
    %127 = vector.broadcast %cst_36 : f32 to vector<16x128xf32>
    %128 = arith.addf %127, %126 : vector<16x128xf32>
    %129 = arith.divf %127, %128 : vector<16x128xf32>
    %130 = vector.extract_strided_slice %117 {offsets = [0, 256], sizes = [16, 128], strides = [1, 1]} : vector<16x512xf32> to vector<16x128xf32>
    %131 = math.tanh %130 : vector<16x128xf32>
    %132 = vector.extract_strided_slice %117 {offsets = [0, 384], sizes = [16, 128], strides = [1, 1]} : vector<16x512xf32> to vector<16x128xf32>
    %133 = arith.negf %132 : vector<16x128xf32>
    %134 = math.exp %133 : vector<16x128xf32>
    %cst_37 = arith.constant 1.000000e+00 : f32
    %135 = vector.broadcast %cst_37 : f32 to vector<16x128xf32>
    %136 = arith.addf %135, %134 : vector<16x128xf32>
    %137 = arith.divf %135, %136 : vector<16x128xf32>
    %138 = arith.mulf %129, %110 : vector<16x128xf32>
    %139 = arith.mulf %123, %131 : vector<16x128xf32>
    %140 = arith.addf %138, %139 : vector<16x128xf32>
    %141 = math.tanh %140 : vector<16x128xf32>
    %142 = arith.mulf %137, %141 : vector<16x128xf32>
    %143 = arith.addi %12, %c2_i32 : i32
    %144 = vector.broadcast %143 : i32 to vector<16x1xi32>
    %145 = arith.cmpi slt, %144, %11 : vector<16x1xi32>
    %cst_38 = arith.constant 0.000000e+00 : f32
    %146 = vector.shape_cast %145 : vector<16x1xi1> to vector<16x1xi1>
    %147 = vector.broadcast %146 : vector<16x1xi1> to vector<16x128xi1>
    %148 = vector.broadcast %cst_38 : f32 to vector<16x128xf32>
    %149 = arith.select %147, %142, %148 : vector<16x128xi1>, vector<16x128xf32>
    %150 = arith.truncf %149 : vector<16x128xf32> to vector<16x128xbf16>
    %151 = arith.index_cast %112 : i32 to index
    %c0_39 = arith.constant 0 : index
    %152 = vector.load %arg8[%151, %c0_39] : memref<128x128xbf16, #tpu.memory_space<vmem>>, vector<16x128xbf16>
    tpu.vector_store %arg8[%151, %c0_39], %150 {strides = array<i32>} : memref<128x128xbf16, #tpu.memory_space<vmem>>, vector<16x128xbf16>,
    %153 = vector.shape_cast %145 : vector<16x1xi1> to vector<16x1xi1>
    %154 = vector.broadcast %153 : vector<16x1xi1> to vector<16x128xi1>
    %155 = arith.select %154, %142, %107 : vector<16x128xi1>, vector<16x128xf32>
    %156 = vector.shape_cast %145 : vector<16x1xi1> to vector<16x1xi1>
    %157 = vector.broadcast %156 : vector<16x1xi1> to vector<16x128xi1>
    %158 = arith.select %157, %140, %110 : vector<16x128xi1>, vector<16x128xf32>
    %c3_i32 = arith.constant 3 : i32
    %c16_i32_40 = arith.constant 16 : i32
    %159 = arith.muli %c3_i32, %c16_i32_40 : i32
    %160 = tpu.assume_multiple %159, 8 : i32
    %161 = arith.index_cast %160 : i32 to index
    %c0_41 = arith.constant 0 : index
    %162 = vector.load %arg11[%161, %c0_41] : memref<128x512xf32, #tpu.memory_space<vmem>>, vector<16x512xf32>
    %163 = arith.truncf %155 : vector<16x128xf32> to vector<16x128xbf16>
    %cst_42 = arith.constant dense<0.000000e+00> : vector<16x512xf32>
    %164 = tpu.matmul %163, %10, %cst_42 {dimension_numbers = #tpu.dot_dimension_numbers<[1], [0], [0], [1], [0, 0, 1, 1], [], []>} : vector<16x128xbf16>, vector<128x512xbf16>, vector<16x512xf32> -> vector<16x512xf32>
    %165 = arith.addf %162, %164 : vector<16x512xf32>
    %166 = vector.extract_strided_slice %165 {offsets = [0, 0], sizes = [16, 128], strides = [1, 1]} : vector<16x512xf32> to vector<16x128xf32>
    %167 = arith.negf %166 : vector<16x128xf32>
    %168 = math.exp %167 : vector<16x128xf32>
    %cst_43 = arith.constant 1.000000e+00 : f32
    %169 = vector.broadcast %cst_43 : f32 to vector<16x128xf32>
    %170 = arith.addf %169, %168 : vector<16x128xf32>
    %171 = arith.divf %169, %170 : vector<16x128xf32>
    %172 = vector.extract_strided_slice %165 {offsets = [0, 128], sizes = [16, 128], strides = [1, 1]} : vector<16x512xf32> to vector<16x128xf32>
    %173 = arith.negf %172 : vector<16x128xf32>
    %174 = math.exp %173 : vector<16x128xf32>
    %cst_44 = arith.constant 1.000000e+00 : f32
    %175 = vector.broadcast %cst_44 : f32 to vector<16x128xf32>
    %176 = arith.addf %175, %174 : vector<16x128xf32>
    %177 = arith.divf %175, %176 : vector<16x128xf32>
    %178 = vector.extract_strided_slice %165 {offsets = [0, 256], sizes = [16, 128], strides = [1, 1]} : vector<16x512xf32> to vector<16x128xf32>
    %179 = math.tanh %178 : vector<16x128xf32>
    %180 = vector.extract_strided_slice %165 {offsets = [0, 384], sizes = [16, 128], strides = [1, 1]} : vector<16x512xf32> to vector<16x128xf32>
    %181 = arith.negf %180 : vector<16x128xf32>
    %182 = math.exp %181 : vector<16x128xf32>
    %cst_45 = arith.constant 1.000000e+00 : f32
    %183 = vector.broadcast %cst_45 : f32 to vector<16x128xf32>
    %184 = arith.addf %183, %182 : vector<16x128xf32>
    %185 = arith.divf %183, %184 : vector<16x128xf32>
    %186 = arith.mulf %177, %158 : vector<16x128xf32>
    %187 = arith.mulf %171, %179 : vector<16x128xf32>
    %188 = arith.addf %186, %187 : vector<16x128xf32>
    %189 = math.tanh %188 : vector<16x128xf32>
    %190 = arith.mulf %185, %189 : vector<16x128xf32>
    %191 = arith.addi %12, %c3_i32 : i32
    %192 = vector.broadcast %191 : i32 to vector<16x1xi32>
    %193 = arith.cmpi slt, %192, %11 : vector<16x1xi32>
    %cst_46 = arith.constant 0.000000e+00 : f32
    %194 = vector.shape_cast %193 : vector<16x1xi1> to vector<16x1xi1>
    %195 = vector.broadcast %194 : vector<16x1xi1> to vector<16x128xi1>
    %196 = vector.broadcast %cst_46 : f32 to vector<16x128xf32>
    %197 = arith.select %195, %190, %196 : vector<16x128xi1>, vector<16x128xf32>
    %198 = arith.truncf %197 : vector<16x128xf32> to vector<16x128xbf16>
    %199 = arith.index_cast %160 : i32 to index
    %c0_47 = arith.constant 0 : index
    %200 = vector.load %arg8[%199, %c0_47] : memref<128x128xbf16, #tpu.memory_space<vmem>>, vector<16x128xbf16>
    tpu.vector_store %arg8[%199, %c0_47], %198 {strides = array<i32>} : memref<128x128xbf16, #tpu.memory_space<vmem>>, vector<16x128xbf16>,
    %201 = vector.shape_cast %193 : vector<16x1xi1> to vector<16x1xi1>
    %202 = vector.broadcast %201 : vector<16x1xi1> to vector<16x128xi1>
    %203 = arith.select %202, %190, %155 : vector<16x128xi1>, vector<16x128xf32>
    %204 = vector.shape_cast %193 : vector<16x1xi1> to vector<16x1xi1>
    %205 = vector.broadcast %204 : vector<16x1xi1> to vector<16x128xi1>
    %206 = arith.select %205, %188, %158 : vector<16x128xi1>, vector<16x128xf32>
    %c4_i32 = arith.constant 4 : i32
    %c16_i32_48 = arith.constant 16 : i32
    %207 = arith.muli %c4_i32, %c16_i32_48 : i32
    %208 = tpu.assume_multiple %207, 8 : i32
    %209 = arith.index_cast %208 : i32 to index
    %c0_49 = arith.constant 0 : index
    %210 = vector.load %arg11[%209, %c0_49] : memref<128x512xf32, #tpu.memory_space<vmem>>, vector<16x512xf32>
    %211 = arith.truncf %203 : vector<16x128xf32> to vector<16x128xbf16>
    %cst_50 = arith.constant dense<0.000000e+00> : vector<16x512xf32>
    %212 = tpu.matmul %211, %10, %cst_50 {dimension_numbers = #tpu.dot_dimension_numbers<[1], [0], [0], [1], [0, 0, 1, 1], [], []>} : vector<16x128xbf16>, vector<128x512xbf16>, vector<16x512xf32> -> vector<16x512xf32>
    %213 = arith.addf %210, %212 : vector<16x512xf32>
    %214 = vector.extract_strided_slice %213 {offsets = [0, 0], sizes = [16, 128], strides = [1, 1]} : vector<16x512xf32> to vector<16x128xf32>
    %215 = arith.negf %214 : vector<16x128xf32>
    %216 = math.exp %215 : vector<16x128xf32>
    %cst_51 = arith.constant 1.000000e+00 : f32
    %217 = vector.broadcast %cst_51 : f32 to vector<16x128xf32>
    %218 = arith.addf %217, %216 : vector<16x128xf32>
    %219 = arith.divf %217, %218 : vector<16x128xf32>
    %220 = vector.extract_strided_slice %213 {offsets = [0, 128], sizes = [16, 128], strides = [1, 1]} : vector<16x512xf32> to vector<16x128xf32>
    %221 = arith.negf %220 : vector<16x128xf32>
    %222 = math.exp %221 : vector<16x128xf32>
    %cst_52 = arith.constant 1.000000e+00 : f32
    %223 = vector.broadcast %cst_52 : f32 to vector<16x128xf32>
    %224 = arith.addf %223, %222 : vector<16x128xf32>
    %225 = arith.divf %223, %224 : vector<16x128xf32>
    %226 = vector.extract_strided_slice %213 {offsets = [0, 256], sizes = [16, 128], strides = [1, 1]} : vector<16x512xf32> to vector<16x128xf32>
    %227 = math.tanh %226 : vector<16x128xf32>
    %228 = vector.extract_strided_slice %213 {offsets = [0, 384], sizes = [16, 128], strides = [1, 1]} : vector<16x512xf32> to vector<16x128xf32>
    %229 = arith.negf %228 : vector<16x128xf32>
    %230 = math.exp %229 : vector<16x128xf32>
    %cst_53 = arith.constant 1.000000e+00 : f32
    %231 = vector.broadcast %cst_53 : f32 to vector<16x128xf32>
    %232 = arith.addf %231, %230 : vector<16x128xf32>
    %233 = arith.divf %231, %232 : vector<16x128xf32>
    %234 = arith.mulf %225, %206 : vector<16x128xf32>
    %235 = arith.mulf %219, %227 : vector<16x128xf32>
    %236 = arith.addf %234, %235 : vector<16x128xf32>
    %237 = math.tanh %236 : vector<16x128xf32>
    %238 = arith.mulf %233, %237 : vector<16x128xf32>
    %239 = arith.addi %12, %c4_i32 : i32
    %240 = vector.broadcast %239 : i32 to vector<16x1xi32>
    %241 = arith.cmpi slt, %240, %11 : vector<16x1xi32>
    %cst_54 = arith.constant 0.000000e+00 : f32
    %242 = vector.shape_cast %241 : vector<16x1xi1> to vector<16x1xi1>
    %243 = vector.broadcast %242 : vector<16x1xi1> to vector<16x128xi1>
    %244 = vector.broadcast %cst_54 : f32 to vector<16x128xf32>
    %245 = arith.select %243, %238, %244 : vector<16x128xi1>, vector<16x128xf32>
    %246 = arith.truncf %245 : vector<16x128xf32> to vector<16x128xbf16>
    %247 = arith.index_cast %208 : i32 to index
    %c0_55 = arith.constant 0 : index
    %248 = vector.load %arg8[%247, %c0_55] : memref<128x128xbf16, #tpu.memory_space<vmem>>, vector<16x128xbf16>
    tpu.vector_store %arg8[%247, %c0_55], %246 {strides = array<i32>} : memref<128x128xbf16, #tpu.memory_space<vmem>>, vector<16x128xbf16>,
    %249 = vector.shape_cast %241 : vector<16x1xi1> to vector<16x1xi1>
    %250 = vector.broadcast %249 : vector<16x1xi1> to vector<16x128xi1>
    %251 = arith.select %250, %238, %203 : vector<16x128xi1>, vector<16x128xf32>
    %252 = vector.shape_cast %241 : vector<16x1xi1> to vector<16x1xi1>
    %253 = vector.broadcast %252 : vector<16x1xi1> to vector<16x128xi1>
    %254 = arith.select %253, %236, %206 : vector<16x128xi1>, vector<16x128xf32>
    %c5_i32 = arith.constant 5 : i32
    %c16_i32_56 = arith.constant 16 : i32
    %255 = arith.muli %c5_i32, %c16_i32_56 : i32
    %256 = tpu.assume_multiple %255, 8 : i32
    %257 = arith.index_cast %256 : i32 to index
    %c0_57 = arith.constant 0 : index
    %258 = vector.load %arg11[%257, %c0_57] : memref<128x512xf32, #tpu.memory_space<vmem>>, vector<16x512xf32>
    %259 = arith.truncf %251 : vector<16x128xf32> to vector<16x128xbf16>
    %cst_58 = arith.constant dense<0.000000e+00> : vector<16x512xf32>
    %260 = tpu.matmul %259, %10, %cst_58 {dimension_numbers = #tpu.dot_dimension_numbers<[1], [0], [0], [1], [0, 0, 1, 1], [], []>} : vector<16x128xbf16>, vector<128x512xbf16>, vector<16x512xf32> -> vector<16x512xf32>
    %261 = arith.addf %258, %260 : vector<16x512xf32>
    %262 = vector.extract_strided_slice %261 {offsets = [0, 0], sizes = [16, 128], strides = [1, 1]} : vector<16x512xf32> to vector<16x128xf32>
    %263 = arith.negf %262 : vector<16x128xf32>
    %264 = math.exp %263 : vector<16x128xf32>
    %cst_59 = arith.constant 1.000000e+00 : f32
    %265 = vector.broadcast %cst_59 : f32 to vector<16x128xf32>
    %266 = arith.addf %265, %264 : vector<16x128xf32>
    %267 = arith.divf %265, %266 : vector<16x128xf32>
    %268 = vector.extract_strided_slice %261 {offsets = [0, 128], sizes = [16, 128], strides = [1, 1]} : vector<16x512xf32> to vector<16x128xf32>
    %269 = arith.negf %268 : vector<16x128xf32>
    %270 = math.exp %269 : vector<16x128xf32>
    %cst_60 = arith.constant 1.000000e+00 : f32
    %271 = vector.broadcast %cst_60 : f32 to vector<16x128xf32>
    %272 = arith.addf %271, %270 : vector<16x128xf32>
    %273 = arith.divf %271, %272 : vector<16x128xf32>
    %274 = vector.extract_strided_slice %261 {offsets = [0, 256], sizes = [16, 128], strides = [1, 1]} : vector<16x512xf32> to vector<16x128xf32>
    %275 = math.tanh %274 : vector<16x128xf32>
    %276 = vector.extract_strided_slice %261 {offsets = [0, 384], sizes = [16, 128], strides = [1, 1]} : vector<16x512xf32> to vector<16x128xf32>
    %277 = arith.negf %276 : vector<16x128xf32>
    %278 = math.exp %277 : vector<16x128xf32>
    %cst_61 = arith.constant 1.000000e+00 : f32
    %279 = vector.broadcast %cst_61 : f32 to vector<16x128xf32>
    %280 = arith.addf %279, %278 : vector<16x128xf32>
    %281 = arith.divf %279, %280 : vector<16x128xf32>
    %282 = arith.mulf %273, %254 : vector<16x128xf32>
    %283 = arith.mulf %267, %275 : vector<16x128xf32>
    %284 = arith.addf %282, %283 : vector<16x128xf32>
    %285 = math.tanh %284 : vector<16x128xf32>
    %286 = arith.mulf %281, %285 : vector<16x128xf32>
    %287 = arith.addi %12, %c5_i32 : i32
    %288 = vector.broadcast %287 : i32 to vector<16x1xi32>
    %289 = arith.cmpi slt, %288, %11 : vector<16x1xi32>
    %cst_62 = arith.constant 0.000000e+00 : f32
    %290 = vector.shape_cast %289 : vector<16x1xi1> to vector<16x1xi1>
    %291 = vector.broadcast %290 : vector<16x1xi1> to vector<16x128xi1>
    %292 = vector.broadcast %cst_62 : f32 to vector<16x128xf32>
    %293 = arith.select %291, %286, %292 : vector<16x128xi1>, vector<16x128xf32>
    %294 = arith.truncf %293 : vector<16x128xf32> to vector<16x128xbf16>
    %295 = arith.index_cast %256 : i32 to index
    %c0_63 = arith.constant 0 : index
    %296 = vector.load %arg8[%295, %c0_63] : memref<128x128xbf16, #tpu.memory_space<vmem>>, vector<16x128xbf16>
    tpu.vector_store %arg8[%295, %c0_63], %294 {strides = array<i32>} : memref<128x128xbf16, #tpu.memory_space<vmem>>, vector<16x128xbf16>,
    %297 = vector.shape_cast %289 : vector<16x1xi1> to vector<16x1xi1>
    %298 = vector.broadcast %297 : vector<16x1xi1> to vector<16x128xi1>
    %299 = arith.select %298, %286, %251 : vector<16x128xi1>, vector<16x128xf32>
    %300 = vector.shape_cast %289 : vector<16x1xi1> to vector<16x1xi1>
    %301 = vector.broadcast %300 : vector<16x1xi1> to vector<16x128xi1>
    %302 = arith.select %301, %284, %254 : vector<16x128xi1>, vector<16x128xf32>
    %c6_i32 = arith.constant 6 : i32
    %c16_i32_64 = arith.constant 16 : i32
    %303 = arith.muli %c6_i32, %c16_i32_64 : i32
    %304 = tpu.assume_multiple %303, 8 : i32
    %305 = arith.index_cast %304 : i32 to index
    %c0_65 = arith.constant 0 : index
    %306 = vector.load %arg11[%305, %c0_65] : memref<128x512xf32, #tpu.memory_space<vmem>>, vector<16x512xf32>
    %307 = arith.truncf %299 : vector<16x128xf32> to vector<16x128xbf16>
    %cst_66 = arith.constant dense<0.000000e+00> : vector<16x512xf32>
    %308 = tpu.matmul %307, %10, %cst_66 {dimension_numbers = #tpu.dot_dimension_numbers<[1], [0], [0], [1], [0, 0, 1, 1], [], []>} : vector<16x128xbf16>, vector<128x512xbf16>, vector<16x512xf32> -> vector<16x512xf32>
    %309 = arith.addf %306, %308 : vector<16x512xf32>
    %310 = vector.extract_strided_slice %309 {offsets = [0, 0], sizes = [16, 128], strides = [1, 1]} : vector<16x512xf32> to vector<16x128xf32>
    %311 = arith.negf %310 : vector<16x128xf32>
    %312 = math.exp %311 : vector<16x128xf32>
    %cst_67 = arith.constant 1.000000e+00 : f32
    %313 = vector.broadcast %cst_67 : f32 to vector<16x128xf32>
    %314 = arith.addf %313, %312 : vector<16x128xf32>
    %315 = arith.divf %313, %314 : vector<16x128xf32>
    %316 = vector.extract_strided_slice %309 {offsets = [0, 128], sizes = [16, 128], strides = [1, 1]} : vector<16x512xf32> to vector<16x128xf32>
    %317 = arith.negf %316 : vector<16x128xf32>
    %318 = math.exp %317 : vector<16x128xf32>
    %cst_68 = arith.constant 1.000000e+00 : f32
    %319 = vector.broadcast %cst_68 : f32 to vector<16x128xf32>
    %320 = arith.addf %319, %318 : vector<16x128xf32>
    %321 = arith.divf %319, %320 : vector<16x128xf32>
    %322 = vector.extract_strided_slice %309 {offsets = [0, 256], sizes = [16, 128], strides = [1, 1]} : vector<16x512xf32> to vector<16x128xf32>
    %323 = math.tanh %322 : vector<16x128xf32>
    %324 = vector.extract_strided_slice %309 {offsets = [0, 384], sizes = [16, 128], strides = [1, 1]} : vector<16x512xf32> to vector<16x128xf32>
    %325 = arith.negf %324 : vector<16x128xf32>
    %326 = math.exp %325 : vector<16x128xf32>
    %cst_69 = arith.constant 1.000000e+00 : f32
    %327 = vector.broadcast %cst_69 : f32 to vector<16x128xf32>
    %328 = arith.addf %327, %326 : vector<16x128xf32>
    %329 = arith.divf %327, %328 : vector<16x128xf32>
    %330 = arith.mulf %321, %302 : vector<16x128xf32>
    %331 = arith.mulf %315, %323 : vector<16x128xf32>
    %332 = arith.addf %330, %331 : vector<16x128xf32>
    %333 = math.tanh %332 : vector<16x128xf32>
    %334 = arith.mulf %329, %333 : vector<16x128xf32>
    %335 = arith.addi %12, %c6_i32 : i32
    %336 = vector.broadcast %335 : i32 to vector<16x1xi32>
    %337 = arith.cmpi slt, %336, %11 : vector<16x1xi32>
    %cst_70 = arith.constant 0.000000e+00 : f32
    %338 = vector.shape_cast %337 : vector<16x1xi1> to vector<16x1xi1>
    %339 = vector.broadcast %338 : vector<16x1xi1> to vector<16x128xi1>
    %340 = vector.broadcast %cst_70 : f32 to vector<16x128xf32>
    %341 = arith.select %339, %334, %340 : vector<16x128xi1>, vector<16x128xf32>
    %342 = arith.truncf %341 : vector<16x128xf32> to vector<16x128xbf16>
    %343 = arith.index_cast %304 : i32 to index
    %c0_71 = arith.constant 0 : index
    %344 = vector.load %arg8[%343, %c0_71] : memref<128x128xbf16, #tpu.memory_space<vmem>>, vector<16x128xbf16>
    tpu.vector_store %arg8[%343, %c0_71], %342 {strides = array<i32>} : memref<128x128xbf16, #tpu.memory_space<vmem>>, vector<16x128xbf16>,
    %345 = vector.shape_cast %337 : vector<16x1xi1> to vector<16x1xi1>
    %346 = vector.broadcast %345 : vector<16x1xi1> to vector<16x128xi1>
    %347 = arith.select %346, %334, %299 : vector<16x128xi1>, vector<16x128xf32>
    %348 = vector.shape_cast %337 : vector<16x1xi1> to vector<16x1xi1>
    %349 = vector.broadcast %348 : vector<16x1xi1> to vector<16x128xi1>
    %350 = arith.select %349, %332, %302 : vector<16x128xi1>, vector<16x128xf32>
    %c7_i32 = arith.constant 7 : i32
    %c16_i32_72 = arith.constant 16 : i32
    %351 = arith.muli %c7_i32, %c16_i32_72 : i32
    %352 = tpu.assume_multiple %351, 8 : i32
    %353 = arith.index_cast %352 : i32 to index
    %c0_73 = arith.constant 0 : index
    %354 = vector.load %arg11[%353, %c0_73] : memref<128x512xf32, #tpu.memory_space<vmem>>, vector<16x512xf32>
    %355 = arith.truncf %347 : vector<16x128xf32> to vector<16x128xbf16>
    %cst_74 = arith.constant dense<0.000000e+00> : vector<16x512xf32>
    %356 = tpu.matmul %355, %10, %cst_74 {dimension_numbers = #tpu.dot_dimension_numbers<[1], [0], [0], [1], [0, 0, 1, 1], [], []>} : vector<16x128xbf16>, vector<128x512xbf16>, vector<16x512xf32> -> vector<16x512xf32>
    %357 = arith.addf %354, %356 : vector<16x512xf32>
    %358 = vector.extract_strided_slice %357 {offsets = [0, 0], sizes = [16, 128], strides = [1, 1]} : vector<16x512xf32> to vector<16x128xf32>
    %359 = arith.negf %358 : vector<16x128xf32>
    %360 = math.exp %359 : vector<16x128xf32>
    %cst_75 = arith.constant 1.000000e+00 : f32
    %361 = vector.broadcast %cst_75 : f32 to vector<16x128xf32>
    %362 = arith.addf %361, %360 : vector<16x128xf32>
    %363 = arith.divf %361, %362 : vector<16x128xf32>
    %364 = vector.extract_strided_slice %357 {offsets = [0, 128], sizes = [16, 128], strides = [1, 1]} : vector<16x512xf32> to vector<16x128xf32>
    %365 = arith.negf %364 : vector<16x128xf32>
    %366 = math.exp %365 : vector<16x128xf32>
    %cst_76 = arith.constant 1.000000e+00 : f32
    %367 = vector.broadcast %cst_76 : f32 to vector<16x128xf32>
    %368 = arith.addf %367, %366 : vector<16x128xf32>
    %369 = arith.divf %367, %368 : vector<16x128xf32>
    %370 = vector.extract_strided_slice %357 {offsets = [0, 256], sizes = [16, 128], strides = [1, 1]} : vector<16x512xf32> to vector<16x128xf32>
    %371 = math.tanh %370 : vector<16x128xf32>
    %372 = vector.extract_strided_slice %357 {offsets = [0, 384], sizes = [16, 128], strides = [1, 1]} : vector<16x512xf32> to vector<16x128xf32>
    %373 = arith.negf %372 : vector<16x128xf32>
    %374 = math.exp %373 : vector<16x128xf32>
    %cst_77 = arith.constant 1.000000e+00 : f32
    %375 = vector.broadcast %cst_77 : f32 to vector<16x128xf32>
    %376 = arith.addf %375, %374 : vector<16x128xf32>
    %377 = arith.divf %375, %376 : vector<16x128xf32>
    %378 = arith.mulf %369, %350 : vector<16x128xf32>
    %379 = arith.mulf %363, %371 : vector<16x128xf32>
    %380 = arith.addf %378, %379 : vector<16x128xf32>
    %381 = math.tanh %380 : vector<16x128xf32>
    %382 = arith.mulf %377, %381 : vector<16x128xf32>
    %383 = arith.addi %12, %c7_i32 : i32
    %384 = vector.broadcast %383 : i32 to vector<16x1xi32>
    %385 = arith.cmpi slt, %384, %11 : vector<16x1xi32>
    %cst_78 = arith.constant 0.000000e+00 : f32
    %386 = vector.shape_cast %385 : vector<16x1xi1> to vector<16x1xi1>
    %387 = vector.broadcast %386 : vector<16x1xi1> to vector<16x128xi1>
    %388 = vector.broadcast %cst_78 : f32 to vector<16x128xf32>
    %389 = arith.select %387, %382, %388 : vector<16x128xi1>, vector<16x128xf32>
    %390 = arith.truncf %389 : vector<16x128xf32> to vector<16x128xbf16>
    %391 = arith.index_cast %352 : i32 to index
    %c0_79 = arith.constant 0 : index
    %392 = vector.load %arg8[%391, %c0_79] : memref<128x128xbf16, #tpu.memory_space<vmem>>, vector<16x128xbf16>
    tpu.vector_store %arg8[%391, %c0_79], %390 {strides = array<i32>} : memref<128x128xbf16, #tpu.memory_space<vmem>>, vector<16x128xbf16>,
    %393 = vector.shape_cast %385 : vector<16x1xi1> to vector<16x1xi1>
    %394 = vector.broadcast %393 : vector<16x1xi1> to vector<16x128xi1>
    %395 = arith.select %394, %382, %347 : vector<16x128xi1>, vector<16x128xf32>
    %396 = vector.shape_cast %385 : vector<16x1xi1> to vector<16x1xi1>
    %397 = vector.broadcast %396 : vector<16x1xi1> to vector<16x128xi1>
    %398 = arith.select %397, %380, %350 : vector<16x128xi1>, vector<16x128xf32>
    %c8_i32_80 = arith.constant 8 : i32
    %c0_81 = arith.constant 0 : index
    %c0_82 = arith.constant 0 : index
    %399 = vector.load %arg9[%c0_81, %c0_82] : memref<16x128xf32, #tpu.memory_space<vmem>>, vector<16x128xf32>
    tpu.vector_store %arg9[%c0_81, %c0_82], %395 {strides = array<i32>} : memref<16x128xf32, #tpu.memory_space<vmem>>, vector<16x128xf32>,
    %c0_83 = arith.constant 0 : index
    %c0_84 = arith.constant 0 : index
    %400 = vector.load %arg10[%c0_83, %c0_84] : memref<16x128xf32, #tpu.memory_space<vmem>>, vector<16x128xf32>
    tpu.vector_store %arg10[%c0_83, %c0_84], %398 {strides = array<i32>} : memref<16x128xf32, #tpu.memory_space<vmem>>, vector<16x128xf32>,
    return
  }
  func.func @transform_0(%arg0: i32) -> (i32, i32) {
    %c0_i32 = arith.constant 0 : i32
    %c0_i32_0 = arith.constant 0 : i32
    return %arg0, %c0_i32 : i32, i32
  }
  func.func @transform_1(%arg0: i32) -> (i32, i32) {
    %c0_i32 = arith.constant 0 : i32
    %c0_i32_0 = arith.constant 0 : i32
    %c0_i32_1 = arith.constant 0 : i32
    return %c0_i32, %c0_i32_0 : i32, i32
  }
  func.func @transform_2(%arg0: i32) -> (i32, i32) {
    %c0_i32 = arith.constant 0 : i32
    %c0_i32_0 = arith.constant 0 : i32
    %c0_i32_1 = arith.constant 0 : i32
    return %c0_i32, %c0_i32_0 : i32, i32
  }
  func.func @transform_3(%arg0: i32) -> (i32, i32) {
    %c0_i32 = arith.constant 0 : i32
    %c0_i32_0 = arith.constant 0 : i32
    %c0_i32_1 = arith.constant 0 : i32
    return %c0_i32, %c0_i32_0 : i32, i32
  }
  func.func @transform_4(%arg0: i32) -> (i32, i32) {
    %c0_i32 = arith.constant 0 : i32
    %c0_i32_0 = arith.constant 0 : i32
    %c0_i32_1 = arith.constant 0 : i32
    return %c0_i32, %c0_i32_0 : i32, i32
  }
  func.func @transform_5(%arg0: i32) -> (i32, i32) {
    %c0_i32 = arith.constant 0 : i32
    %c0_i32_0 = arith.constant 0 : i32
    %c0_i32_1 = arith.constant 0 : i32
    return %c0_i32, %c0_i32_0 : i32, i32
  }
  func.func @transform_6(%arg0: i32) -> (i32, i32) {
    %c0_i32 = arith.constant 0 : i32
    %c0_i32_0 = arith.constant 0 : i32
    %c0_i32_1 = arith.constant 0 : i32
    return %c0_i32, %c0_i32_0 : i32, i32
  }
  func.func @transform_7(%arg0: i32) -> (i32, i32) {
    %c0_i32 = arith.constant 0 : i32
    %c0_i32_0 = arith.constant 0 : i32
    return %arg0, %c0_i32 : i32, i32
  }
  func.func @transform_8(%arg0: i32) -> (i32, i32) {
    %c0_i32 = arith.constant 0 : i32
    %c0_i32_0 = arith.constant 0 : i32
    %c0_i32_1 = arith.constant 0 : i32
    return %c0_i32, %c0_i32_0 : i32, i32
  }
  func.func @transform_9(%arg0: i32) -> (i32, i32) {
    %c0_i32 = arith.constant 0 : i32
    %c0_i32_0 = arith.constant 0 : i32
    %c0_i32_1 = arith.constant 0 : i32
    return %c0_i32, %c0_i32_0 : i32, i32
  }
}

</mosaic_0001>

<llo_original>
// kernel: neg.1
$region0: #{neg.1}
  #allocation0 [shape = 's32[1]{0}', space=sflag, size = 0x4, scoped, tag = 'scoped memory for neg.1']
  %s0 = inlined_call_operand.vmem [shape: s32[4], index: 0, kind: input, shape index: {}]
  %s1 = inlined_call_operand.vmem [shape: s32[4], index: 1, kind: output, shape index: {}]
  %v2 = vld [vmem:[%s0] sm:$0x1]
  %3 = xla_tuple %v2
  %4 = xla_tuple %3
  %v5 = vsub.s32 0, %v2
  %6 = xla_tuple %v5
  %7 = vst [vmem:[%s1] sm:$0x1] %v5

// kernel: rnn_model_forward.3
$region0: #{rnn_model_forward.3}
  #allocation0 [shape = 'u32[]', space=smem, size = 0x4, offset = 0x4, fixed_abs, tag = 'smem constant byte address 0x4 - core index']
  #allocation1 [shape = 'u32[144,128]{1,0:T(1,128)}', space=vmem, size = 0x12000, scoped, tag = 'internal scratch']
  #allocation2 [shape = 'f32[128,512]{1,0:T(8,128)}', space=vmem, size = 0x40000, scoped, tag = 'scratch operand']
  %s0 = inlined_call_operand.vmem [shape: bf16[128,128], index: 0, kind: input, shape index: {}]
  %s1 = inlined_call_operand.vmem [shape: bf16[128,512], index: 1, kind: input, shape index: {}]
  %s2 = inlined_call_operand.vmem [shape: bf16[128,512], index: 2, kind: input, shape index: {}]
  %s3 = inlined_call_operand.vmem [shape: f32[1,512], index: 3, kind: input, shape index: {}]
  %s4 = inlined_call_operand.vmem [shape: s32[16,1], index: 4, kind: input, shape index: {}]
  %s5 = inlined_call_operand.vmem [shape: f32[16,128], index: 5, kind: input, shape index: {}]
  %s6 = inlined_call_operand.vmem [shape: f32[16,128], index: 6, kind: input, shape index: {}]
  %s7 = inlined_call_operand.vmem [shape: f32[128,128], index: 7, kind: output, shape index: {0}]
  %s8 = inlined_call_operand.vmem [shape: f32[16,128], index: 8, kind: output, shape index: {1}]
  %s9 = inlined_call_operand.vmem [shape: f32[16,128], index: 9, kind: output, shape index: {2}]
  %10 = xla_tuple %s7, %s8, %s9
  %s11 = sld [smem:[#allocation0]]
  $region58: #{rnn_model_forward.3} parent=0
    _
  %s13 = ssub.s32 1, %s11
  %s14 = scalar_select 0, %s13, %s11
  // Predicated region
  $region2: #{rnn_model_forward.3} parent=0 // pred_check
    _
  $region3: #{rnn_model_forward.3} parent=0 // pred_check_branch
    %16 = sbr.rel (0) target = $region5
  $region4: #{rnn_model_forward.3} parent=0 // pred_region
    _
  $region5: #{rnn_model_forward.3} parent=0 // pred_fallthru
    _
  // Predicated region
  $region6: #{rnn_model_forward.3} parent=0 // pred_check
    _
  $region7: #{rnn_model_forward.3} parent=0 // pred_check_branch
    %18 = sbr.rel (0) target = $region9
  $region8: #{rnn_model_forward.3} parent=0 // pred_region
    _
  $region9: #{rnn_model_forward.3} parent=0 // pred_fallthru
    _
  // Predicated region
  $region10: #{rnn_model_forward.3} parent=0 // pred_check
    _
  $region11: #{rnn_model_forward.3} parent=0 // pred_check_branch
    %20 = sbr.rel (0) target = $region13
  $region12: #{rnn_model_forward.3} parent=0 // pred_region
    _
  $region13: #{rnn_model_forward.3} parent=0 // pred_fallthru
    _
  // Predicated region
  $region14: #{rnn_model_forward.3} parent=0 // pred_check
    _
  $region15: #{rnn_model_forward.3} parent=0 // pred_check_branch
    %22 = sbr.rel (0) target = $region17
  $region16: #{rnn_model_forward.3} parent=0 // pred_region
    _
  $region17: #{rnn_model_forward.3} parent=0 // pred_fallthru
    _
  // Predicated region
  $region18: #{rnn_model_forward.3} parent=0 // pred_check
    _
  $region19: #{rnn_model_forward.3} parent=0 // pred_check_branch
    %24 = sbr.rel (0) target = $region21
  $region20: #{rnn_model_forward.3} parent=0 // pred_region
    _
  $region21: #{rnn_model_forward.3} parent=0 // pred_fallthru
    _
  // Predicated region
  $region22: #{rnn_model_forward.3} parent=0 // pred_check
    _
  $region23: #{rnn_model_forward.3} parent=0 // pred_check_branch
    %26 = sbr.rel (0) target = $region25
  $region24: #{rnn_model_forward.3} parent=0 // pred_region
    _
  $region25: #{rnn_model_forward.3} parent=0 // pred_fallthru
    _
  // Predicated region
  $region26: #{rnn_model_forward.3} parent=0 // pred_check
    _
  $region27: #{rnn_model_forward.3} parent=0 // pred_check_branch
    %28 = sbr.rel (0) target = $region29
  $region28: #{rnn_model_forward.3} parent=0 // pred_region
    _
  $region29: #{rnn_model_forward.3} parent=0 // pred_fallthru
    _
  %p30 = scmp.eq.s32.totalorder 0, 0
  // Predicated region
  $region30: #{rnn_model_forward.3} parent=0 // pred_check
    %p31 = pneg %p30
  $region31: #{rnn_model_forward.3} parent=0 // pred_check_branch
    %33 = sbr.rel (%p31) target = $region33
  $region32: #{rnn_model_forward.3} parent=0 // pred_region
    %v34 = vld [vmem:[%s5] sm:$0xff]
    %v35 = vld [vmem:[%s5 + $0x8] sm:$0xff]
    %36 = vst [vmem:[%s8] sm:$0xff] %v34
    %37 = vst [vmem:[%s8 + $0x8] sm:$0xff] %v35
    %v38 = vld [vmem:[%s6] sm:$0xff]
    %v39 = vld [vmem:[%s6 + $0x8] sm:$0xff]
    %40 = vst [vmem:[%s9] sm:$0xff] %v38
    %41 = vst [vmem:[%s9 + $0x8] sm:$0xff] %v39
  $region33: #{rnn_model_forward.3} parent=0 // pred_fallthru
    _
  %v42 = vld [vmem:[%s0] sm:$0xf]
  %v43 = vld [vmem:[%s0 + $0x4] sm:$0xf]
  %v44 = vld [vmem:[%s0 + $0x8] sm:$0xf]
  %v45 = vld [vmem:[%s0 + $0xc] sm:$0xf]
  %v46 = vld [vmem:[%s0 + $0x10] sm:$0xf]
  %v47 = vld [vmem:[%s0 + $0x14] sm:$0xf]
  %v48 = vld [vmem:[%s0 + $0x18] sm:$0xf]
  %v49 = vld [vmem:[%s0 + $0x1c] sm:$0xf]
  %v50 = vld [vmem:[%s0 + $0x20] sm:$0xf]
  %v51 = vld [vmem:[%s0 + $0x24] sm:$0xf]
  %v52 = vld [vmem:[%s0 + $0x28] sm:$0xf]
  %v53 = vld [vmem:[%s0 + $0x2c] sm:$0xf]
  %v54 = vld [vmem:[%s0 + $0x30] sm:$0xf]
  %v55 = vld [vmem:[%s0 + $0x34] sm:$0xf]
  %v56 = vld [vmem:[%s0 + $0x38] sm:$0xf]
  %v57 = vld [vmem:[%s0 + $0x3c] sm:$0xf]
  %v58 = vld [vmem:[%s1] sm:$0xff]
  %v59 = vld [vmem:[%s1 + $0x8] sm:$0xff]
  %v60 = vld [vmem:[%s1 + $0x10] sm:$0xff]
  %v61 = vld [vmem:[%s1 + $0x18] sm:$0xff]
  %v62 = vld [vmem:[%s1 + $0x20] sm:$0xff]
  %v63 = vld [vmem:[%s1 + $0x28] sm:$0xff]
  %v64 = vld [vmem:[%s1 + $0x30] sm:$0xff]
  %v65 = vld [vmem:[%s1 + $0x38] sm:$0xff]
  %v66 = vld [vmem:[%s1 + $0x40] sm:$0xff]
  %v67 = vld [vmem:[%s1 + $0x48] sm:$0xff]
  %v68 = vld [vmem:[%s1 + $0x50] sm:$0xff]
  %v69 = vld [vmem:[%s1 + $0x58] sm:$0xff]
  %v70 = vld [vmem:[%s1 + $0x60] sm:$0xff]
  %v71 = vld [vmem:[%s1 + $0x68] sm:$0xff]
  %v72 = vld [vmem:[%s1 + $0x70] sm:$0xff]
  %v73 = vld [vmem:[%s1 + $0x78] sm:$0xff]
  %v74 = vld [vmem:[%s1 + $0x80] sm:$0xff]
  %v75 = vld [vmem:[%s1 + $0x88] sm:$0xff]
  %v76 = vld [vmem:[%s1 + $0x90] sm:$0xff]
  %v77 = vld [vmem:[%s1 + $0x98] sm:$0xff]
  %v78 = vld [vmem:[%s1 + $0xa0] sm:$0xff]
  %v79 = vld [vmem:[%s1 + $0xa8] sm:$0xff]
  %v80 = vld [vmem:[%s1 + $0xb0] sm:$0xff]
  %v81 = vld [vmem:[%s1 + $0xb8] sm:$0xff]
  %v82 = vld [vmem:[%s1 + $0xc0] sm:$0xff]
  %v83 = vld [vmem:[%s1 + $0xc8] sm:$0xff]
  %v84 = vld [vmem:[%s1 + $0xd0] sm:$0xff]
  %v85 = vld [vmem:[%s1 + $0xd8] sm:$0xff]
  %v86 = vld [vmem:[%s1 + $0xe0] sm:$0xff]
  %v87 = vld [vmem:[%s1 + $0xe8] sm:$0xff]
  %v88 = vld [vmem:[%s1 + $0xf0] sm:$0xff]
  %v89 = vld [vmem:[%s1 + $0xf8] sm:$0xff]
  %v90 = vld [vmem:[%s3] sm:$0xf]
  %v92 = vlaneseq
  %v93 = vshrl.u32 %v92, 7
  %v94 = vsub.s32 0, %v93
  %v95 = vrot.slane %v90, %v94
  %v96 = vlaneseq
  %v97 = vshrl.u32 %v96, 7
  %v98 = vsub.s32 1, %v97
  %v99 = vrot.slane %v90, %v98
  %v100 = vlaneseq
  %v101 = vshrl.u32 %v100, 7
  %v102 = vsub.s32 2, %v101
  %v103 = vrot.slane %v90, %v102
  %v104 = vlaneseq
  %v105 = vshrl.u32 %v104, 7
  %v106 = vsub.s32 3, %v105
  %v107 = vrot.slane %v90, %v106
  %v128 = vunpack.c.l.b16 %v42
  %v129 = vunpack.c.l.b16 %v43
  %v130 = vunpack.c.l.b16 %v44
  %v131 = vunpack.c.l.b16 %v45
  %v132 = vunpack.c.l.b16 %v46
  %v133 = vunpack.c.l.b16 %v47
  %v134 = vunpack.c.l.b16 %v48
  %v135 = vunpack.c.l.b16 %v49
  %v136 = vunpack.c.l.b16 %v50
  %v137 = vunpack.c.l.b16 %v51
  %v138 = vunpack.c.l.b16 %v52
  %v139 = vunpack.c.l.b16 %v53
  %v140 = vunpack.c.l.b16 %v54
  %v141 = vunpack.c.l.b16 %v55
  %v142 = vunpack.c.l.b16 %v56
  %v143 = vunpack.c.l.b16 %v57
  %v144 = vpack.c.b16 %v129, %v128
  %v145 = vpack.c.b16 %v131, %v130
  %v146 = vpack.c.b16 %v133, %v132
  %v147 = vpack.c.b16 %v135, %v134
  %v148 = vpack.c.b16 %v137, %v136
  %v149 = vpack.c.b16 %v139, %v138
  %v150 = vpack.c.b16 %v141, %v140
  %v151 = vpack.c.b16 %v143, %v142
  %v192 = vunpack.c.l.b16 %v58
  %v193 = vunpack.c.h.b16 %v58
  %v194 = vunpack.c.l.b16 %v59
  %v195 = vunpack.c.h.b16 %v59
  %v196 = vunpack.c.l.b16 %v60
  %v197 = vunpack.c.h.b16 %v60
  %v198 = vunpack.c.l.b16 %v61
  %v199 = vunpack.c.h.b16 %v61
  %v200 = vunpack.c.l.b16 %v62
  %v201 = vunpack.c.h.b16 %v62
  %v202 = vunpack.c.l.b16 %v63
  %v203 = vunpack.c.h.b16 %v63
  %v204 = vunpack.c.l.b16 %v64
  %v205 = vunpack.c.h.b16 %v64
  %v206 = vunpack.c.l.b16 %v65
  %v207 = vunpack.c.h.b16 %v65
  %v208 = vunpack.c.l.b16 %v66
  %v209 = vunpack.c.h.b16 %v66
  %v210 = vunpack.c.l.b16 %v67
  %v211 = vunpack.c.h.b16 %v67
  %v212 = vunpack.c.l.b16 %v68
  %v213 = vunpack.c.h.b16 %v68
  %v214 = vunpack.c.l.b16 %v69
  %v215 = vunpack.c.h.b16 %v69
  %v216 = vunpack.c.l.b16 %v70
  %v217 = vunpack.c.h.b16 %v70
  %v218 = vunpack.c.l.b16 %v71
  %v219 = vunpack.c.h.b16 %v71
  %v220 = vunpack.c.l.b16 %v72
  %v221 = vunpack.c.h.b16 %v72
  %v222 = vunpack.c.l.b16 %v73
  %v223 = vunpack.c.h.b16 %v73
  %v224 = vunpack.c.l.b16 %v74
  %v225 = vunpack.c.h.b16 %v74
  %v226 = vunpack.c.l.b16 %v75
  %v227 = vunpack.c.h.b16 %v75
  %v228 = vunpack.c.l.b16 %v76
  %v229 = vunpack.c.h.b16 %v76
  %v230 = vunpack.c.l.b16 %v77
  %v231 = vunpack.c.h.b16 %v77
  %v232 = vunpack.c.l.b16 %v78
  %v233 = vunpack.c.h.b16 %v78
  %v234 = vunpack.c.l.b16 %v79
  %v235 = vunpack.c.h.b16 %v79
  %v236 = vunpack.c.l.b16 %v80
  %v237 = vunpack.c.h.b16 %v80
  %v238 = vunpack.c.l.b16 %v81
  %v239 = vunpack.c.h.b16 %v81
  %v240 = vunpack.c.l.b16 %v82
  %v241 = vunpack.c.h.b16 %v82
  %v242 = vunpack.c.l.b16 %v83
  %v243 = vunpack.c.h.b16 %v83
  %v244 = vunpack.c.l.b16 %v84
  %v245 = vunpack.c.h.b16 %v84
  %v246 = vunpack.c.l.b16 %v85
  %v247 = vunpack.c.h.b16 %v85
  %v248 = vunpack.c.l.b16 %v86
  %v249 = vunpack.c.h.b16 %v86
  %v250 = vunpack.c.l.b16 %v87
  %v251 = vunpack.c.h.b16 %v87
  %v252 = vunpack.c.l.b16 %v88
  %v253 = vunpack.c.h.b16 %v88
  %v254 = vunpack.c.l.b16 %v89
  %v255 = vunpack.c.h.b16 %v89
  %v256 = vpack.c.b16 %v196, %v192
  %v257 = vpack.c.b16 %v197, %v193
  %v258 = vpack.c.b16 %v198, %v194
  %v259 = vpack.c.b16 %v199, %v195
  %v260 = vpack.c.b16 %v204, %v200
  %v261 = vpack.c.b16 %v205, %v201
  %v262 = vpack.c.b16 %v206, %v202
  %v263 = vpack.c.b16 %v207, %v203
  %v264 = vpack.c.b16 %v212, %v208
  %v265 = vpack.c.b16 %v213, %v209
  %v266 = vpack.c.b16 %v214, %v210
  %v267 = vpack.c.b16 %v215, %v211
  %v268 = vpack.c.b16 %v220, %v216
  %v269 = vpack.c.b16 %v221, %v217
  %v270 = vpack.c.b16 %v222, %v218
  %v271 = vpack.c.b16 %v223, %v219
  %v272 = vpack.c.b16 %v228, %v224
  %v273 = vpack.c.b16 %v229, %v225
  %v274 = vpack.c.b16 %v230, %v226
  %v275 = vpack.c.b16 %v231, %v227
  %v276 = vpack.c.b16 %v236, %v232
  %v277 = vpack.c.b16 %v237, %v233
  %v278 = vpack.c.b16 %v238, %v234
  %v279 = vpack.c.b16 %v239, %v235
  %v280 = vpack.c.b16 %v244, %v240
  %v281 = vpack.c.b16 %v245, %v241
  %v282 = vpack.c.b16 %v246, %v242
  %v283 = vpack.c.b16 %v247, %v243
  %v284 = vpack.c.b16 %v252, %v248
  %v285 = vpack.c.b16 %v253, %v249
  %v286 = vpack.c.b16 %v254, %v250
  %v287 = vpack.c.b16 %v255, %v251
  %320 = vmatprep.subr.bf16.mxu0 %v285
  %321 = vmatpush1.bf16.msra.mxu0 %v284
  %322 = vmatprep.subr.bf16.mxu0 %v281
  %323 = vmatpush1.bf16.msra.mxu0 %v280
  %324 = vmatprep.subr.bf16.mxu0 %v277
  %325 = vmatpush1.bf16.msra.mxu0 %v276
  %326 = vmatprep.subr.bf16.mxu0 %v273
  %327 = vmatpush1.bf16.msra.mxu0 %v272
  %328 = vmatprep.subr.bf16.mxu0 %v269
  %329 = vmatpush1.bf16.msra.mxu0 %v268
  %330 = vmatprep.subr.bf16.mxu0 %v265
  %331 = vmatpush1.bf16.msra.mxu0 %v264
  %332 = vmatprep.subr.bf16.mxu0 %v261
  %333 = vmatpush1.bf16.msra.mxu0 %v260
  %334 = vmatprep.subr.bf16.mxu0 %v257
  %335 = vmatpush1.bf16.msra.mxu0 %v256
  %336 = vmatprep.subr.bf16.mxu0 0
  %337 = vmatpush2.bf16.msra.mxu0 0
  %338 = vmatprep.subr.bf16.mxu0 0
  %339 = vmatpush2.bf16.msra.mxu0 0
  %340 = vmatprep.subr.bf16.mxu0 0
  %341 = vmatpush2.bf16.msra.mxu0 0
  %342 = vmatprep.subr.bf16.mxu0 0
  %343 = vmatpush2.bf16.msra.mxu0 0
  %344 = vmatprep.subr.bf16.mxu0 0
  %345 = vmatpush2.bf16.msra.mxu0 0
  %346 = vmatprep.subr.bf16.mxu0 0
  %347 = vmatpush2.bf16.msra.mxu0 0
  %348 = vmatprep.subr.bf16.mxu0 0
  %349 = vmatpush2.bf16.msra.mxu0 0
  %350 = vmatprep.subr.bf16.mxu0 0
  %351 = vmatpush2.bf16.msra.mxu0 0
  %352 = vmatprep.mubr.bf16.mxu0 0
  %353 = vmatmul.mubr.bf16.gmra.mxu0 %v144
  %v354 = vpop.f32.mrf.mxu0
  %v355 = vadd.f32 %v95, %v354
  %v356 = vpop.f32.mrf.mxu0
  %v357 = vadd.f32 %v99, %v356
  %v358 = vpop.f32.mrf.mxu0
  %v359 = vadd.f32 %v95, %v358
  %v360 = vpop.f32.mrf.mxu0
  %v361 = vadd.f32 %v99, %v360
  %362 = vmatprep.mubr.bf16.mxu0 0
  %363 = vmatmul.mubr.bf16.gmra.mxu0 %v145
  %v364 = vpop.f32.mrf.mxu0
  %v365 = vadd.f32 %v95, %v364
  %v366 = vpop.f32.mrf.mxu0
  %v367 = vadd.f32 %v99, %v366
  %v368 = vpop.f32.mrf.mxu0
  %v369 = vadd.f32 %v95, %v368
  %v370 = vpop.f32.mrf.mxu0
  %v371 = vadd.f32 %v99, %v370
  %372 = vmatprep.mubr.bf16.mxu0 0
  %373 = vmatmul.mubr.bf16.gmra.mxu0 %v146
  %v374 = vpop.f32.mrf.mxu0
  %v375 = vadd.f32 %v95, %v374
  %v376 = vpop.f32.mrf.mxu0
  %v377 = vadd.f32 %v99, %v376
  %v378 = vpop.f32.mrf.mxu0
  %v379 = vadd.f32 %v95, %v378
  %v380 = vpop.f32.mrf.mxu0
  %v381 = vadd.f32 %v99, %v380
  %382 = vmatprep.mubr.bf16.mxu0 0
  %383 = vmatmul.mubr.bf16.gmra.mxu0 %v147
  %v384 = vpop.f32.mrf.mxu0
  %v385 = vadd.f32 %v95, %v384
  %v386 = vpop.f32.mrf.mxu0
  %v387 = vadd.f32 %v99, %v386
  %v388 = vpop.f32.mrf.mxu0
  %v389 = vadd.f32 %v95, %v388
  %v390 = vpop.f32.mrf.mxu0
  %v391 = vadd.f32 %v99, %v390
  %392 = vmatprep.mubr.bf16.mxu0 0
  %393 = vmatmul.mubr.bf16.gmra.mxu0 %v148
  %v394 = vpop.f32.mrf.mxu0
  %v395 = vadd.f32 %v95, %v394
  %v396 = vpop.f32.mrf.mxu0
  %v397 = vadd.f32 %v99, %v396
  %v398 = vpop.f32.mrf.mxu0
  %v399 = vadd.f32 %v95, %v398
  %v400 = vpop.f32.mrf.mxu0
  %v401 = vadd.f32 %v99, %v400
  %402 = vmatprep.mubr.bf16.mxu0 0
  %403 = vmatmul.mubr.bf16.gmra.mxu0 %v149
  %v404 = vpop.f32.mrf.mxu0
  %v405 = vadd.f32 %v95, %v404
  %v406 = vpop.f32.mrf.mxu0
  %v407 = vadd.f32 %v99, %v406
  %v408 = vpop.f32.mrf.mxu0
  %v409 = vadd.f32 %v95, %v408
  %v410 = vpop.f32.mrf.mxu0
  %v411 = vadd.f32 %v99, %v410
  %412 = vmatprep.mubr.bf16.mxu0 0
  %413 = vmatmul.mubr.bf16.gmra.mxu0 %v150
  %v414 = vpop.f32.mrf.mxu0
  %v415 = vadd.f32 %v95, %v414
  %v416 = vpop.f32.mrf.mxu0
  %v417 = vadd.f32 %v99, %v416
  %v418 = vpop.f32.mrf.mxu0
  %v419 = vadd.f32 %v95, %v418
  %v420 = vpop.f32.mrf.mxu0
  %v421 = vadd.f32 %v99, %v420
  %422 = vmatprep.mubr.bf16.mxu0 0
  %423 = vmatmul.mubr.bf16.gmra.mxu0 %v151
  %v424 = vpop.f32.mrf.mxu0
  %v425 = vadd.f32 %v95, %v424
  %v426 = vpop.f32.mrf.mxu0
  %v427 = vadd.f32 %v99, %v426
  %v428 = vpop.f32.mrf.mxu0
  %v429 = vadd.f32 %v95, %v428
  %v430 = vpop.f32.mrf.mxu0
  %v431 = vadd.f32 %v99, %v430
  %432 = vdwg.mxu0
  %433 = vmatprep.subr.bf16.mxu0 %v287
  %434 = vmatpush1.bf16.msra.mxu0 %v286
  %435 = vmatprep.subr.bf16.mxu0 %v283
  %436 = vmatpush1.bf16.msra.mxu0 %v282
  %437 = vmatprep.subr.bf16.mxu0 %v279
  %438 = vmatpush1.bf16.msra.mxu0 %v278
  %439 = vmatprep.subr.bf16.mxu0 %v275
  %440 = vmatpush1.bf16.msra.mxu0 %v274
  %441 = vmatprep.subr.bf16.mxu0 %v271
  %442 = vmatpush1.bf16.msra.mxu0 %v270
  %443 = vmatprep.subr.bf16.mxu0 %v267
  %444 = vmatpush1.bf16.msra.mxu0 %v266
  %445 = vmatprep.subr.bf16.mxu0 %v263
  %446 = vmatpush1.bf16.msra.mxu0 %v262
  %447 = vmatprep.subr.bf16.mxu0 %v259
  %448 = vmatpush1.bf16.msra.mxu0 %v258
  %449 = vmatprep.subr.bf16.mxu0 0
  %450 = vmatpush2.bf16.msra.mxu0 0
  %451 = vmatprep.subr.bf16.mxu0 0
  %452 = vmatpush2.bf16.msra.mxu0 0
  %453 = vmatprep.subr.bf16.mxu0 0
  %454 = vmatpush2.bf16.msra.mxu0 0
  %455 = vmatprep.subr.bf16.mxu0 0
  %456 = vmatpush2.bf16.msra.mxu0 0
  %457 = vmatprep.subr.bf16.mxu0 0
  %458 = vmatpush2.bf16.msra.mxu0 0
  %459 = vmatprep.subr.bf16.mxu0 0
  %460 = vmatpush2.bf16.msra.mxu0 0
  %461 = vmatprep.subr.bf16.mxu0 0
  %462 = vmatpush2.bf16.msra.mxu0 0
  %463 = vmatprep.subr.bf16.mxu0 0
  %464 = vmatpush2.bf16.msra.mxu0 0
  %465 = vmatprep.mubr.bf16.mxu0 0
  %466 = vmatmul.mubr.bf16.gmra.mxu0 %v144
  %v467 = vpop.f32.mrf.mxu0
  %v468 = vadd.f32 %v103, %v467
  %v469 = vpop.f32.mrf.mxu0
  %v470 = vadd.f32 %v107, %v469
  %v471 = vpop.f32.mrf.mxu0
  %v472 = vadd.f32 %v103, %v471
  %v473 = vpop.f32.mrf.mxu0
  %v474 = vadd.f32 %v107, %v473
  %475 = vmatprep.mubr.bf16.mxu0 0
  %476 = vmatmul.mubr.bf16.gmra.mxu0 %v145
  %v477 = vpop.f32.mrf.mxu0
  %v478 = vadd.f32 %v103, %v477
  %v479 = vpop.f32.mrf.mxu0
  %v480 = vadd.f32 %v107, %v479
  %v481 = vpop.f32.mrf.mxu0
  %v482 = vadd.f32 %v103, %v481
  %v483 = vpop.f32.mrf.mxu0
  %v484 = vadd.f32 %v107, %v483
  %485 = vmatprep.mubr.bf16.mxu0 0
  %486 = vmatmul.mubr.bf16.gmra.mxu0 %v146
  %v487 = vpop.f32.mrf.mxu0
  %v488 = vadd.f32 %v103, %v487
  %v489 = vpop.f32.mrf.mxu0
  %v490 = vadd.f32 %v107, %v489
  %v491 = vpop.f32.mrf.mxu0
  %v492 = vadd.f32 %v103, %v491
  %v493 = vpop.f32.mrf.mxu0
  %v494 = vadd.f32 %v107, %v493
  %495 = vmatprep.mubr.bf16.mxu0 0
  %496 = vmatmul.mubr.bf16.gmra.mxu0 %v147
  %v497 = vpop.f32.mrf.mxu0
  %v498 = vadd.f32 %v103, %v497
  %v499 = vpop.f32.mrf.mxu0
  %v500 = vadd.f32 %v107, %v499
  %v501 = vpop.f32.mrf.mxu0
  %v502 = vadd.f32 %v103, %v501
  %v503 = vpop.f32.mrf.mxu0
  %v504 = vadd.f32 %v107, %v503
  %505 = vmatprep.mubr.bf16.mxu0 0
  %506 = vmatmul.mubr.bf16.gmra.mxu0 %v148
  %v507 = vpop.f32.mrf.mxu0
  %v508 = vadd.f32 %v103, %v507
  %v509 = vpop.f32.mrf.mxu0
  %v510 = vadd.f32 %v107, %v509
  %v511 = vpop.f32.mrf.mxu0
  %v512 = vadd.f32 %v103, %v511
  %v513 = vpop.f32.mrf.mxu0
  %v514 = vadd.f32 %v107, %v513
  %515 = vmatprep.mubr.bf16.mxu0 0
  %516 = vmatmul.mubr.bf16.gmra.mxu0 %v149
  %v517 = vpop.f32.mrf.mxu0
  %v518 = vadd.f32 %v103, %v517
  %v519 = vpop.f32.mrf.mxu0
  %v520 = vadd.f32 %v107, %v519
  %v521 = vpop.f32.mrf.mxu0
  %v522 = vadd.f32 %v103, %v521
  %v523 = vpop.f32.mrf.mxu0
  %v524 = vadd.f32 %v107, %v523
  %525 = vmatprep.mubr.bf16.mxu0 0
  %526 = vmatmul.mubr.bf16.gmra.mxu0 %v150
  %v527 = vpop.f32.mrf.mxu0
  %v528 = vadd.f32 %v103, %v527
  %v529 = vpop.f32.mrf.mxu0
  %v530 = vadd.f32 %v107, %v529
  %v531 = vpop.f32.mrf.mxu0
  %v532 = vadd.f32 %v103, %v531
  %v533 = vpop.f32.mrf.mxu0
  %v534 = vadd.f32 %v107, %v533
  %535 = vmatprep.mubr.bf16.mxu0 0
  %536 = vmatmul.mubr.bf16.gmra.mxu0 %v151
  %v537 = vpop.f32.mrf.mxu0
  %v538 = vadd.f32 %v103, %v537
  %v539 = vpop.f32.mrf.mxu0
  %v540 = vadd.f32 %v107, %v539
  %v541 = vpop.f32.mrf.mxu0
  %v542 = vadd.f32 %v103, %v541
  %v543 = vpop.f32.mrf.mxu0
  %v544 = vadd.f32 %v107, %v543
  %545 = vdwg.mxu0
  %546 = vst [vmem:[#allocation2] sm:$0xff] %v355
  %547 = vst [vmem:[#allocation2 + $0x8] sm:$0xff] %v357
  %548 = vst [vmem:[#allocation2 + $0x10] sm:$0xff] %v468
  %549 = vst [vmem:[#allocation2 + $0x18] sm:$0xff] %v470
  %550 = vst [vmem:[#allocation2 + $0x20] sm:$0xff] %v359
  %551 = vst [vmem:[#allocation2 + $0x28] sm:$0xff] %v361
  %552 = vst [vmem:[#allocation2 + $0x30] sm:$0xff] %v472
  %553 = vst [vmem:[#allocation2 + $0x38] sm:$0xff] %v474
  %554 = vst [vmem:[#allocation2 + $0x40] sm:$0xff] %v365
  %555 = vst [vmem:[#allocation2 + $0x48] sm:$0xff] %v367
  %556 = vst [vmem:[#allocation2 + $0x50] sm:$0xff] %v478
  %557 = vst [vmem:[#allocation2 + $0x58] sm:$0xff] %v480
  %558 = vst [vmem:[#allocation2 + $0x60] sm:$0xff] %v369
  %559 = vst [vmem:[#allocation2 + $0x68] sm:$0xff] %v371
  %560 = vst [vmem:[#allocation2 + $0x70] sm:$0xff] %v482
  %561 = vst [vmem:[#allocation2 + $0x78] sm:$0xff] %v484
  %562 = vst [vmem:[#allocation2 + $0x80] sm:$0xff] %v375
  %563 = vst [vmem:[#allocation2 + $0x88] sm:$0xff] %v377
  %564 = vst [vmem:[#allocation2 + $0x90] sm:$0xff] %v488
  %565 = vst [vmem:[#allocation2 + $0x98] sm:$0xff] %v490
  %566 = vst [vmem:[#allocation2 + $0xa0] sm:$0xff] %v379
  %567 = vst [vmem:[#allocation2 + $0xa8] sm:$0xff] %v381
  %568 = vst [vmem:[#allocation2 + $0xb0] sm:$0xff] %v492
  %569 = vst [vmem:[#allocation2 + $0xb8] sm:$0xff] %v494
  %570 = vst [vmem:[#allocation2 + $0xc0] sm:$0xff] %v385
  %571 = vst [vmem:[#allocation2 + $0xc8] sm:$0xff] %v387
  %572 = vst [vmem:[#allocation2 + $0xd0] sm:$0xff] %v498
  %573 = vst [vmem:[#allocation2 + $0xd8] sm:$0xff] %v500
  %574 = vst [vmem:[#allocation2 + $0xe0] sm:$0xff] %v389
  %575 = vst [vmem:[#allocation2 + $0xe8] sm:$0xff] %v391
  %576 = vst [vmem:[#allocation2 + $0xf0] sm:$0xff] %v502
  %577 = vst [vmem:[#allocation2 + $0xf8] sm:$0xff] %v504
  %578 = vst [vmem:[#allocation2 + $0x100] sm:$0xff] %v395
  %579 = vst [vmem:[#allocation2 + $0x108] sm:$0xff] %v397
  %580 = vst [vmem:[#allocation2 + $0x110] sm:$0xff] %v508
  %581 = vst [vmem:[#allocation2 + $0x118] sm:$0xff] %v510
  %582 = vst [vmem:[#allocation2 + $0x120] sm:$0xff] %v399
  %583 = vst [vmem:[#allocation2 + $0x128] sm:$0xff] %v401
  %584 = vst [vmem:[#allocation2 + $0x130] sm:$0xff] %v512
  %585 = vst [vmem:[#allocation2 + $0x138] sm:$0xff] %v514
  %586 = vst [vmem:[#allocation2 + $0x140] sm:$0xff] %v405
  %587 = vst [vmem:[#allocation2 + $0x148] sm:$0xff] %v407
  %588 = vst [vmem:[#allocation2 + $0x150] sm:$0xff] %v518
  %589 = vst [vmem:[#allocation2 + $0x158] sm:$0xff] %v520
  %590 = vst [vmem:[#allocation2 + $0x160] sm:$0xff] %v409
  %591 = vst [vmem:[#allocation2 + $0x168] sm:$0xff] %v411
  %592 = vst [vmem:[#allocation2 + $0x170] sm:$0xff] %v522
  %593 = vst [vmem:[#allocation2 + $0x178] sm:$0xff] %v524
  %594 = vst [vmem:[#allocation2 + $0x180] sm:$0xff] %v415
  %595 = vst [vmem:[#allocation2 + $0x188] sm:$0xff] %v417
  %596 = vst [vmem:[#allocation2 + $0x190] sm:$0xff] %v528
  %597 = vst [vmem:[#allocation2 + $0x198] sm:$0xff] %v530
  %598 = vst [vmem:[#allocation2 + $0x1a0] sm:$0xff] %v419
  %599 = vst [vmem:[#allocation2 + $0x1a8] sm:$0xff] %v421
  %600 = vst [vmem:[#allocation2 + $0x1b0] sm:$0xff] %v532
  %601 = vst [vmem:[#allocation2 + $0x1b8] sm:$0xff] %v534
  %602 = vst [vmem:[#allocation2 + $0x1c0] sm:$0xff] %v425
  %603 = vst [vmem:[#allocation2 + $0x1c8] sm:$0xff] %v427
  %604 = vst [vmem:[#allocation2 + $0x1d0] sm:$0xff] %v538
  %605 = vst [vmem:[#allocation2 + $0x1d8] sm:$0xff] %v540
  %606 = vst [vmem:[#allocation2 + $0x1e0] sm:$0xff] %v429
  %607 = vst [vmem:[#allocation2 + $0x1e8] sm:$0xff] %v431
  %608 = vst [vmem:[#allocation2 + $0x1f0] sm:$0xff] %v542
  %609 = vst [vmem:[#allocation2 + $0x1f8] sm:$0xff] %v544
  %v610 = vld [vmem:[%s2] sm:$0xff]
  %v611 = vld [vmem:[%s2 + $0x8] sm:$0xff]
  %v612 = vld [vmem:[%s2 + $0x10] sm:$0xff]
  %v613 = vld [vmem:[%s2 + $0x18] sm:$0xff]
  %v614 = vld [vmem:[%s2 + $0x20] sm:$0xff]
  %v615 = vld [vmem:[%s2 + $0x28] sm:$0xff]
  %v616 = vld [vmem:[%s2 + $0x30] sm:$0xff]
  %v617 = vld [vmem:[%s2 + $0x38] sm:$0xff]
  %v618 = vld [vmem:[%s2 + $0x40] sm:$0xff]
  %v619 = vld [vmem:[%s2 + $0x48] sm:$0xff]
  %v620 = vld [vmem:[%s2 + $0x50] sm:$0xff]
  %v621 = vld [vmem:[%s2 + $0x58] sm:$0xff]
  %v622 = vld [vmem:[%s2 + $0x60] sm:$0xff]
  %v623 = vld [vmem:[%s2 + $0x68] sm:$0xff]
  %v624 = vld [vmem:[%s2 + $0x70] sm:$0xff]
  %v625 = vld [vmem:[%s2 + $0x78] sm:$0xff]
  %v626 = vld [vmem:[%s2 + $0x80] sm:$0xff]
  %v627 = vld [vmem:[%s2 + $0x88] sm:$0xff]
  %v628 = vld [vmem:[%s2 + $0x90] sm:$0xff]
  %v629 = vld [vmem:[%s2 + $0x98] sm:$0xff]
  %v630 = vld [vmem:[%s2 + $0xa0] sm:$0xff]
  %v631 = vld [vmem:[%s2 + $0xa8] sm:$0xff]
  %v632 = vld [vmem:[%s2 + $0xb0] sm:$0xff]
  %v633 = vld [vmem:[%s2 + $0xb8] sm:$0xff]
  %v634 = vld [vmem:[%s2 + $0xc0] sm:$0xff]
  %v635 = vld [vmem:[%s2 + $0xc8] sm:$0xff]
  %v636 = vld [vmem:[%s2 + $0xd0] sm:$0xff]
  %v637 = vld [vmem:[%s2 + $0xd8] sm:$0xff]
  %v638 = vld [vmem:[%s2 + $0xe0] sm:$0xff]
  %v639 = vld [vmem:[%s2 + $0xe8] sm:$0xff]
  %v640 = vld [vmem:[%s2 + $0xf0] sm:$0xff]
  %v641 = vld [vmem:[%s2 + $0xf8] sm:$0xff]
  %v642 = vld [vmem:[%s4] sm:$0xff]
  %v643 = vld [vmem:[%s4 + $0x8] sm:$0xff]
  %s644 = smul.u32 0, 8
  %v645 = vld [vmem:[%s8] sm:$0xff]
  %v646 = vld [vmem:[%s8 + $0x8] sm:$0xff]
  %v647 = vld [vmem:[%s9] sm:$0xff]
  %v648 = vld [vmem:[%s9 + $0x8] sm:$0xff]
  %s649 = smul.u32 0, 4
  %s650 = smul.addr %s649, 8
  %s651 = scalar_lea.vmem [#allocation2], %s650
  %v652 = vld [vmem:[%s651] sm:$0xff]
  %v653 = vld [vmem:[%s651 + $0x8] sm:$0xff]
  %v654 = vld [vmem:[%s651 + $0x10] sm:$0xff]
  %v655 = vld [vmem:[%s651 + $0x18] sm:$0xff]
  %v656 = vld [vmem:[%s651 + $0x20] sm:$0xff]
  %v657 = vld [vmem:[%s651 + $0x28] sm:$0xff]
  %v658 = vld [vmem:[%s651 + $0x30] sm:$0xff]
  %v659 = vld [vmem:[%s651 + $0x38] sm:$0xff]
  %v660 = vpack.c.bf16 %v646, %v645
  %v693 = vunpack.c.l.b16 %v610
  %v694 = vunpack.c.h.b16 %v610
  %v695 = vunpack.c.l.b16 %v611
  %v696 = vunpack.c.h.b16 %v611
  %v697 = vunpack.c.l.b16 %v612
  %v698 = vunpack.c.h.b16 %v612
  %v699 = vunpack.c.l.b16 %v613
  %v700 = vunpack.c.h.b16 %v613
  %v701 = vunpack.c.l.b16 %v614
  %v702 = vunpack.c.h.b16 %v614
  %v703 = vunpack.c.l.b16 %v615
  %v704 = vunpack.c.h.b16 %v615
  %v705 = vunpack.c.l.b16 %v616
  %v706 = vunpack.c.h.b16 %v616
  %v707 = vunpack.c.l.b16 %v617
  %v708 = vunpack.c.h.b16 %v617
  %v709 = vunpack.c.l.b16 %v618
  %v710 = vunpack.c.h.b16 %v618
  %v711 = vunpack.c.l.b16 %v619
  %v712 = vunpack.c.h.b16 %v619
  %v713 = vunpack.c.l.b16 %v620
  %v714 = vunpack.c.h.b16 %v620
  %v715 = vunpack.c.l.b16 %v621
  %v716 = vunpack.c.h.b16 %v621
  %v717 = vunpack.c.l.b16 %v622
  %v718 = vunpack.c.h.b16 %v622
  %v719 = vunpack.c.l.b16 %v623
  %v720 = vunpack.c.h.b16 %v623
  %v721 = vunpack.c.l.b16 %v624
  %v722 = vunpack.c.h.b16 %v624
  %v723 = vunpack.c.l.b16 %v625
  %v724 = vunpack.c.h.b16 %v625
  %v725 = vunpack.c.l.b16 %v626
  %v726 = vunpack.c.h.b16 %v626
  %v727 = vunpack.c.l.b16 %v627
  %v728 = vunpack.c.h.b16 %v627
  %v729 = vunpack.c.l.b16 %v628
  %v730 = vunpack.c.h.b16 %v628
  %v731 = vunpack.c.l.b16 %v629
  %v732 = vunpack.c.h.b16 %v629
  %v733 = vunpack.c.l.b16 %v630
  %v734 = vunpack.c.h.b16 %v630
  %v735 = vunpack.c.l.b16 %v631
  %v736 = vunpack.c.h.b16 %v631
  %v737 = vunpack.c.l.b16 %v632
  %v738 = vunpack.c.h.b16 %v632
  %v739 = vunpack.c.l.b16 %v633
  %v740 = vunpack.c.h.b16 %v633
  %v741 = vunpack.c.l.b16 %v634
  %v742 = vunpack.c.h.b16 %v634
  %v743 = vunpack.c.l.b16 %v635
  %v744 = vunpack.c.h.b16 %v635
  %v745 = vunpack.c.l.b16 %v636
  %v746 = vunpack.c.h.b16 %v636
  %v747 = vunpack.c.l.b16 %v637
  %v748 = vunpack.c.h.b16 %v637
  %v749 = vunpack.c.l.b16 %v638
  %v750 = vunpack.c.h.b16 %v638
  %v751 = vunpack.c.l.b16 %v639
  %v752 = vunpack.c.h.b16 %v639
  %v753 = vunpack.c.l.b16 %v640
  %v754 = vunpack.c.h.b16 %v640
  %v755 = vunpack.c.l.b16 %v641
  %v756 = vunpack.c.h.b16 %v641
  %v757 = vpack.c.b16 %v697, %v693
  %v758 = vpack.c.b16 %v698, %v694
  %v759 = vpack.c.b16 %v699, %v695
  %v760 = vpack.c.b16 %v700, %v696
  %v761 = vpack.c.b16 %v705, %v701
  %v762 = vpack.c.b16 %v706, %v702
  %v763 = vpack.c.b16 %v707, %v703
  %v764 = vpack.c.b16 %v708, %v704
  %v765 = vpack.c.b16 %v713, %v709
  %v766 = vpack.c.b16 %v714, %v710
  %v767 = vpack.c.b16 %v715, %v711
  %v768 = vpack.c.b16 %v716, %v712
  %v769 = vpack.c.b16 %v721, %v717
  %v770 = vpack.c.b16 %v722, %v718
  %v771 = vpack.c.b16 %v723, %v719
  %v772 = vpack.c.b16 %v724, %v720
  %v773 = vpack.c.b16 %v729, %v725
  %v774 = vpack.c.b16 %v730, %v726
  %v775 = vpack.c.b16 %v731, %v727
  %v776 = vpack.c.b16 %v732, %v728
  %v777 = vpack.c.b16 %v737, %v733
  %v778 = vpack.c.b16 %v738, %v734
  %v779 = vpack.c.b16 %v739, %v735
  %v780 = vpack.c.b16 %v740, %v736
  %v781 = vpack.c.b16 %v745, %v741
  %v782 = vpack.c.b16 %v746, %v742
  %v783 = vpack.c.b16 %v747, %v743
  %v784 = vpack.c.b16 %v748, %v744
  %v785 = vpack.c.b16 %v753, %v749
  %v786 = vpack.c.b16 %v754, %v750
  %v787 = vpack.c.b16 %v755, %v751
  %v788 = vpack.c.b16 %v756, %v752
  %821 = vmatprep.subr.bf16.mxu0 %v786
  %822 = vmatpush1.bf16.msra.mxu0 %v785
  %823 = vmatprep.subr.bf16.mxu0 %v782
  %824 = vmatpush1.bf16.msra.mxu0 %v781
  %825 = vmatprep.subr.bf16.mxu0 %v778
  %826 = vmatpush1.bf16.msra.mxu0 %v777
  %827 = vmatprep.subr.bf16.mxu0 %v774
  %828 = vmatpush1.bf16.msra.mxu0 %v773
  %829 = vmatprep.subr.bf16.mxu0 %v770
  %830 = vmatpush1.bf16.msra.mxu0 %v769
  %831 = vmatprep.subr.bf16.mxu0 %v766
  %832 = vmatpush1.bf16.msra.mxu0 %v765
  %833 = vmatprep.subr.bf16.mxu0 %v762
  %834 = vmatpush1.bf16.msra.mxu0 %v761
  %835 = vmatprep.subr.bf16.mxu0 %v758
  %836 = vmatpush1.bf16.msra.mxu0 %v757
  %837 = vmatprep.subr.bf16.mxu0 0
  %838 = vmatpush2.bf16.msra.mxu0 0
  %839 = vmatprep.subr.bf16.mxu0 0
  %840 = vmatpush2.bf16.msra.mxu0 0
  %841 = vmatprep.subr.bf16.mxu0 0
  %842 = vmatpush2.bf16.msra.mxu0 0
  %843 = vmatprep.subr.bf16.mxu0 0
  %844 = vmatpush2.bf16.msra.mxu0 0
  %845 = vmatprep.subr.bf16.mxu0 0
  %846 = vmatpush2.bf16.msra.mxu0 0
  %847 = vmatprep.subr.bf16.mxu0 0
  %848 = vmatpush2.bf16.msra.mxu0 0
  %849 = vmatprep.subr.bf16.mxu0 0
  %850 = vmatpush2.bf16.msra.mxu0 0
  %851 = vmatprep.subr.bf16.mxu0 0
  %852 = vmatpush2.bf16.msra.mxu0 0
  %853 = vmatprep.mubr.bf16.mxu0 0
  %854 = vmatmul.mubr.bf16.gmra.mxu0 %v660
  %v855 = vpop.f32.mrf.mxu0
  %v856 = vadd.f32 0.0, %v855
  %v857 = vpop.f32.mrf.mxu0
  %v858 = vadd.f32 0.0, %v857
  %v859 = vpop.f32.mrf.mxu0
  %v860 = vadd.f32 0.0, %v859
  %v861 = vpop.f32.mrf.mxu0
  %v862 = vadd.f32 0.0, %v861
  %863 = vdwg.mxu0
  %864 = vmatprep.subr.bf16.mxu0 %v788
  %865 = vmatpush1.bf16.msra.mxu0 %v787
  %866 = vmatprep.subr.bf16.mxu0 %v784
  %867 = vmatpush1.bf16.msra.mxu0 %v783
  %868 = vmatprep.subr.bf16.mxu0 %v780
  %869 = vmatpush1.bf16.msra.mxu0 %v779
  %870 = vmatprep.subr.bf16.mxu0 %v776
  %871 = vmatpush1.bf16.msra.mxu0 %v775
  %872 = vmatprep.subr.bf16.mxu0 %v772
  %873 = vmatpush1.bf16.msra.mxu0 %v771
  %874 = vmatprep.subr.bf16.mxu0 %v768
  %875 = vmatpush1.bf16.msra.mxu0 %v767
  %876 = vmatprep.subr.bf16.mxu0 %v764
  %877 = vmatpush1.bf16.msra.mxu0 %v763
  %878 = vmatprep.subr.bf16.mxu0 %v760
  %879 = vmatpush1.bf16.msra.mxu0 %v759
  %880 = vmatprep.subr.bf16.mxu0 0
  %881 = vmatpush2.bf16.msra.mxu0 0
  %882 = vmatprep.subr.bf16.mxu0 0
  %883 = vmatpush2.bf16.msra.mxu0 0
  %884 = vmatprep.subr.bf16.mxu0 0
  %885 = vmatpush2.bf16.msra.mxu0 0
  %886 = vmatprep.subr.bf16.mxu0 0
  %887 = vmatpush2.bf16.msra.mxu0 0
  %888 = vmatprep.subr.bf16.mxu0 0
  %889 = vmatpush2.bf16.msra.mxu0 0
  %890 = vmatprep.subr.bf16.mxu0 0
  %891 = vmatpush2.bf16.msra.mxu0 0
  %892 = vmatprep.subr.bf16.mxu0 0
  %893 = vmatpush2.bf16.msra.mxu0 0
  %894 = vmatprep.subr.bf16.mxu0 0
  %895 = vmatpush2.bf16.msra.mxu0 0
  %896 = vmatprep.mubr.bf16.mxu0 0
  %897 = vmatmul.mubr.bf16.gmra.mxu0 %v660
  %v898 = vpop.f32.mrf.mxu0
  %v899 = vadd.f32 0.0, %v898
  %v900 = vpop.f32.mrf.mxu0
  %v901 = vadd.f32 0.0, %v900
  %v902 = vpop.f32.mrf.mxu0
  %v903 = vadd.f32 0.0, %v902
  %v904 = vpop.f32.mrf.mxu0
  %v905 = vadd.f32 0.0, %v904
  %906 = vdwg.mxu0
  %v907 = vadd.f32 %v652, %v856
  %v908 = vadd.f32 %v653, %v858
  %v909 = vadd.f32 %v654, %v899
  %v910 = vadd.f32 %v655, %v901
  %v911 = vadd.f32 %v656, %v860
  %v912 = vadd.f32 %v657, %v862
  %v913 = vadd.f32 %v658, %v903
  %v914 = vadd.f32 %v659, %v905
  %v915 = vxor.u32 %v907, 2147483648
  %v916 = vxor.u32 %v911, 2147483648
  %v917 = vmul.f32 %v915, 1.442695
  %v918 = vpow.pop %v917
  %v919 = vmul.f32 %v916, 1.442695
  %v920 = vpow.pop %v919
  %v921 = vadd.f32 %v918, 1.0
  %v922 = vadd.f32 %v920, 1.0
  %v923 = vrcp.pop %v921
  %v924 = vmul.f32 1.0, %v923
  %v925 = vrcp.pop %v922
  %v926 = vmul.f32 1.0, %v925
  %v927 = vxor.u32 %v908, 2147483648
  %v928 = vxor.u32 %v912, 2147483648
  %v929 = vmul.f32 %v927, 1.442695
  %v930 = vpow.pop %v929
  %v931 = vmul.f32 %v928, 1.442695
  %v932 = vpow.pop %v931
  %v933 = vadd.f32 %v930, 1.0
  %v934 = vadd.f32 %v932, 1.0
  %v935 = vrcp.pop %v933
  %v936 = vmul.f32 1.0, %v935
  %v937 = vrcp.pop %v934
  %v938 = vmul.f32 1.0, %v937
  %v939 = vtanh.pop %v909
  %v940 = vtanh.pop %v913
  %v941 = vxor.u32 %v910, 2147483648
  %v942 = vxor.u32 %v914, 2147483648
  %v943 = vmul.f32 %v941, 1.442695
  %v944 = vpow.pop %v943
  %v945 = vmul.f32 %v942, 1.442695
  %v946 = vpow.pop %v945
  %v947 = vadd.f32 %v944, 1.0
  %v948 = vadd.f32 %v946, 1.0
  %v949 = vrcp.pop %v947
  %v950 = vmul.f32 1.0, %v949
  %v951 = vrcp.pop %v948
  %v952 = vmul.f32 1.0, %v951
  %v953 = vmul.f32 %v936, %v647
  %v954 = vmul.f32 %v938, %v648
  %v955 = vmul.f32 %v924, %v939
  %v956 = vmul.f32 %v926, %v940
  %v957 = vadd.f32 %v953, %v955
  %v958 = vadd.f32 %v954, %v956
  %v959 = vtanh.pop %v957
  %v960 = vtanh.pop %v958
  %v961 = vmul.f32 %v950, %v959
  %v962 = vmul.f32 %v952, %v960
  %v963 = vstv %s644
  %vm964 = vcmp.lt.s32.totalorder %v963, %v642
  %vm965 = vcmp.lt.s32.totalorder %v963, %v643
  %v966 = vsel %vm964, 1, 0
  %v967 = vsel %vm965, 1, 0
  %968 = vset.pattern.permute.xlu0 0
  %969 = vperm.xlu0 %968, %v966
  %v970 = vpop.permute.xlu0 %969
  %971 = vset.pattern.permute.xlu0 0
  %972 = vperm.xlu0 %971, %v967
  %v973 = vpop.permute.xlu0 %972
  %vm974 = vcmp.eq.s32.totalorder %v970, 1
  %vm975 = vcmp.eq.s32.totalorder %v973, 1
  %v976 = vsel %vm974, %v961, 0.0
  %v977 = vsel %vm975, %v962, 0.0
  %978 = vst [vmem:[%s7] sm:$0xff] %v976
  %979 = vst [vmem:[%s7 + $0x8] sm:$0xff] %v977
  %v980 = vsel %vm974, %v961, %v645
  %v981 = vsel %vm975, %v962, %v646
  %v982 = vsel %vm974, %v957, %v647
  %v983 = vsel %vm975, %v958, %v648
  %s984 = smul.u32 2, 4
  %s985 = smul.addr %s984, 8
  %s986 = scalar_lea.vmem [#allocation2], %s985
  %v987 = vld [vmem:[%s986] sm:$0xff]
  %v988 = vld [vmem:[%s986 + $0x8] sm:$0xff]
  %v989 = vld [vmem:[%s986 + $0x10] sm:$0xff]
  %v990 = vld [vmem:[%s986 + $0x18] sm:$0xff]
  %v991 = vld [vmem:[%s986 + $0x20] sm:$0xff]
  %v992 = vld [vmem:[%s986 + $0x28] sm:$0xff]
  %v993 = vld [vmem:[%s986 + $0x30] sm:$0xff]
  %v994 = vld [vmem:[%s986 + $0x38] sm:$0xff]
  %v995 = vpack.c.bf16 %v981, %v980
  %996 = vmatprep.subr.bf16.mxu0 %v786
  %997 = vmatpush1.bf16.msra.mxu0 %v785
  %998 = vmatprep.subr.bf16.mxu0 %v782
  %999 = vmatpush1.bf16.msra.mxu0 %v781
  %1000 = vmatprep.subr.bf16.mxu0 %v778
  %1001 = vmatpush1.bf16.msra.mxu0 %v777
  %1002 = vmatprep.subr.bf16.mxu0 %v774
  %1003 = vmatpush1.bf16.msra.mxu0 %v773
  %1004 = vmatprep.subr.bf16.mxu0 %v770
  %1005 = vmatpush1.bf16.msra.mxu0 %v769
  %1006 = vmatprep.subr.bf16.mxu0 %v766
  %1007 = vmatpush1.bf16.msra.mxu0 %v765
  %1008 = vmatprep.subr.bf16.mxu0 %v762
  %1009 = vmatpush1.bf16.msra.mxu0 %v761
  %1010 = vmatprep.subr.bf16.mxu0 %v758
  %1011 = vmatpush1.bf16.msra.mxu0 %v757
  %1012 = vmatprep.subr.bf16.mxu0 0
  %1013 = vmatpush2.bf16.msra.mxu0 0
  %1014 = vmatprep.subr.bf16.mxu0 0
  %1015 = vmatpush2.bf16.msra.mxu0 0
  %1016 = vmatprep.subr.bf16.mxu0 0
  %1017 = vmatpush2.bf16.msra.mxu0 0
  %1018 = vmatprep.subr.bf16.mxu0 0
  %1019 = vmatpush2.bf16.msra.mxu0 0
  %1020 = vmatprep.subr.bf16.mxu0 0
  %1021 = vmatpush2.bf16.msra.mxu0 0
  %1022 = vmatprep.subr.bf16.mxu0 0
  %1023 = vmatpush2.bf16.msra.mxu0 0
  %1024 = vmatprep.subr.bf16.mxu0 0
  %1025 = vmatpush2.bf16.msra.mxu0 0
  %1026 = vmatprep.subr.bf16.mxu0 0
  %1027 = vmatpush2.bf16.msra.mxu0 0
  %1028 = vmatprep.mubr.bf16.mxu0 0
  %1029 = vmatmul.mubr.bf16.gmra.mxu0 %v995
  %v1030 = vpop.f32.mrf.mxu0
  %v1031 = vadd.f32 0.0, %v1030
  %v1032 = vpop.f32.mrf.mxu0
  %v1033 = vadd.f32 0.0, %v1032
  %v1034 = vpop.f32.mrf.mxu0
  %v1035 = vadd.f32 0.0, %v1034
  %v1036 = vpop.f32.mrf.mxu0
  %v1037 = vadd.f32 0.0, %v1036
  %1038 = vdwg.mxu0
  %1039 = vmatprep.subr.bf16.mxu0 %v788
  %1040 = vmatpush1.bf16.msra.mxu0 %v787
  %1041 = vmatprep.subr.bf16.mxu0 %v784
  %1042 = vmatpush1.bf16.msra.mxu0 %v783
  %1043 = vmatprep.subr.bf16.mxu0 %v780
  %1044 = vmatpush1.bf16.msra.mxu0 %v779
  %1045 = vmatprep.subr.bf16.mxu0 %v776
  %1046 = vmatpush1.bf16.msra.mxu0 %v775
  %1047 = vmatprep.subr.bf16.mxu0 %v772
  %1048 = vmatpush1.bf16.msra.mxu0 %v771
  %1049 = vmatprep.subr.bf16.mxu0 %v768
  %1050 = vmatpush1.bf16.msra.mxu0 %v767
  %1051 = vmatprep.subr.bf16.mxu0 %v764
  %1052 = vmatpush1.bf16.msra.mxu0 %v763
  %1053 = vmatprep.subr.bf16.mxu0 %v760
  %1054 = vmatpush1.bf16.msra.mxu0 %v759
  %1055 = vmatprep.subr.bf16.mxu0 0
  %1056 = vmatpush2.bf16.msra.mxu0 0
  %1057 = vmatprep.subr.bf16.mxu0 0
  %1058 = vmatpush2.bf16.msra.mxu0 0
  %1059 = vmatprep.subr.bf16.mxu0 0
  %1060 = vmatpush2.bf16.msra.mxu0 0
  %1061 = vmatprep.subr.bf16.mxu0 0
  %1062 = vmatpush2.bf16.msra.mxu0 0
  %1063 = vmatprep.subr.bf16.mxu0 0
  %1064 = vmatpush2.bf16.msra.mxu0 0
  %1065 = vmatprep.subr.bf16.mxu0 0
  %1066 = vmatpush2.bf16.msra.mxu0 0
  %1067 = vmatprep.subr.bf16.mxu0 0
  %1068 = vmatpush2.bf16.msra.mxu0 0
  %1069 = vmatprep.subr.bf16.mxu0 0
  %1070 = vmatpush2.bf16.msra.mxu0 0
  %1071 = vmatprep.mubr.bf16.mxu0 0
  %1072 = vmatmul.mubr.bf16.gmra.mxu0 %v995
  %v1073 = vpop.f32.mrf.mxu0
  %v1074 = vadd.f32 0.0, %v1073
  %v1075 = vpop.f32.mrf.mxu0
  %v1076 = vadd.f32 0.0, %v1075
  %v1077 = vpop.f32.mrf.mxu0
  %v1078 = vadd.f32 0.0, %v1077
  %v1079 = vpop.f32.mrf.mxu0
  %v1080 = vadd.f32 0.0, %v1079
  %1081 = vdwg.mxu0
  %v1082 = vadd.f32 %v987, %v1031
  %v1083 = vadd.f32 %v988, %v1033
  %v1084 = vadd.f32 %v989, %v1074
  %v1085 = vadd.f32 %v990, %v1076
  %v1086 = vadd.f32 %v991, %v1035
  %v1087 = vadd.f32 %v992, %v1037
  %v1088 = vadd.f32 %v993, %v1078
  %v1089 = vadd.f32 %v994, %v1080
  %v1090 = vxor.u32 %v1082, 2147483648
  %v1091 = vxor.u32 %v1086, 2147483648
  %v1092 = vmul.f32 %v1090, 1.442695
  %v1093 = vpow.pop %v1092
  %v1094 = vmul.f32 %v1091, 1.442695
  %v1095 = vpow.pop %v1094
  %v1096 = vadd.f32 %v1093, 1.0
  %v1097 = vadd.f32 %v1095, 1.0
  %v1098 = vrcp.pop %v1096
  %v1099 = vmul.f32 1.0, %v1098
  %v1100 = vrcp.pop %v1097
  %v1101 = vmul.f32 1.0, %v1100
  %v1102 = vxor.u32 %v1083, 2147483648
  %v1103 = vxor.u32 %v1087, 2147483648
  %v1104 = vmul.f32 %v1102, 1.442695
  %v1105 = vpow.pop %v1104
  %v1106 = vmul.f32 %v1103, 1.442695
  %v1107 = vpow.pop %v1106
  %v1108 = vadd.f32 %v1105, 1.0
  %v1109 = vadd.f32 %v1107, 1.0
  %v1110 = vrcp.pop %v1108
  %v1111 = vmul.f32 1.0, %v1110
  %v1112 = vrcp.pop %v1109
  %v1113 = vmul.f32 1.0, %v1112
  %v1114 = vtanh.pop %v1084
  %v1115 = vtanh.pop %v1088
  %v1116 = vxor.u32 %v1085, 2147483648
  %v1117 = vxor.u32 %v1089, 2147483648
  %v1118 = vmul.f32 %v1116, 1.442695
  %v1119 = vpow.pop %v1118
  %v1120 = vmul.f32 %v1117, 1.442695
  %v1121 = vpow.pop %v1120
  %v1122 = vadd.f32 %v1119, 1.0
  %v1123 = vadd.f32 %v1121, 1.0
  %v1124 = vrcp.pop %v1122
  %v1125 = vmul.f32 1.0, %v1124
  %v1126 = vrcp.pop %v1123
  %v1127 = vmul.f32 1.0, %v1126
  %v1128 = vmul.f32 %v1111, %v982
  %v1129 = vmul.f32 %v1113, %v983
  %v1130 = vmul.f32 %v1099, %v1114
  %v1131 = vmul.f32 %v1101, %v1115
  %v1132 = vadd.f32 %v1128, %v1130
  %v1133 = vadd.f32 %v1129, %v1131
  %v1134 = vtanh.pop %v1132
  %v1135 = vtanh.pop %v1133
  %v1136 = vmul.f32 %v1125, %v1134
  %v1137 = vmul.f32 %v1127, %v1135
  %s1138 = sadd.s32 %s644, 1
  %v1139 = vstv %s1138
  %vm1140 = vcmp.lt.s32.totalorder %v1139, %v642
  %vm1141 = vcmp.lt.s32.totalorder %v1139, %v643
  %v1142 = vsel %vm1140, 1, 0
  %v1143 = vsel %vm1141, 1, 0
  %1144 = vset.pattern.permute.xlu0 0
  %1145 = vperm.xlu0 %1144, %v1142
  %v1146 = vpop.permute.xlu0 %1145
  %1147 = vset.pattern.permute.xlu0 0
  %1148 = vperm.xlu0 %1147, %v1143
  %v1149 = vpop.permute.xlu0 %1148
  %vm1150 = vcmp.eq.s32.totalorder %v1146, 1
  %vm1151 = vcmp.eq.s32.totalorder %v1149, 1
  %v1152 = vsel %vm1150, %v1136, 0.0
  %v1153 = vsel %vm1151, %v1137, 0.0
  %s1154 = scalar_lea.vmem %s7, 16
  %1155 = vst [vmem:[%s1154] sm:$0xff] %v1152
  %1156 = vst [vmem:[%s1154 + $0x8] sm:$0xff] %v1153
  %v1157 = vsel %vm1150, %v1136, %v980
  %v1158 = vsel %vm1151, %v1137, %v981
  %v1159 = vsel %vm1150, %v1132, %v982
  %v1160 = vsel %vm1151, %v1133, %v983
  %s1161 = smul.u32 4, 4
  %s1162 = smul.addr %s1161, 8
  %s1163 = scalar_lea.vmem [#allocation2], %s1162
  %v1164 = vld [vmem:[%s1163] sm:$0xff]
  %v1165 = vld [vmem:[%s1163 + $0x8] sm:$0xff]
  %v1166 = vld [vmem:[%s1163 + $0x10] sm:$0xff]
  %v1167 = vld [vmem:[%s1163 + $0x18] sm:$0xff]
  %v1168 = vld [vmem:[%s1163 + $0x20] sm:$0xff]
  %v1169 = vld [vmem:[%s1163 + $0x28] sm:$0xff]
  %v1170 = vld [vmem:[%s1163 + $0x30] sm:$0xff]
  %v1171 = vld [vmem:[%s1163 + $0x38] sm:$0xff]
  %v1172 = vpack.c.bf16 %v1158, %v1157
  %1173 = vmatprep.subr.bf16.mxu0 %v786
  %1174 = vmatpush1.bf16.msra.mxu0 %v785
  %1175 = vmatprep.subr.bf16.mxu0 %v782
  %1176 = vmatpush1.bf16.msra.mxu0 %v781
  %1177 = vmatprep.subr.bf16.mxu0 %v778
  %1178 = vmatpush1.bf16.msra.mxu0 %v777
  %1179 = vmatprep.subr.bf16.mxu0 %v774
  %1180 = vmatpush1.bf16.msra.mxu0 %v773
  %1181 = vmatprep.subr.bf16.mxu0 %v770
  %1182 = vmatpush1.bf16.msra.mxu0 %v769
  %1183 = vmatprep.subr.bf16.mxu0 %v766
  %1184 = vmatpush1.bf16.msra.mxu0 %v765
  %1185 = vmatprep.subr.bf16.mxu0 %v762
  %1186 = vmatpush1.bf16.msra.mxu0 %v761
  %1187 = vmatprep.subr.bf16.mxu0 %v758
  %1188 = vmatpush1.bf16.msra.mxu0 %v757
  %1189 = vmatprep.subr.bf16.mxu0 0
  %1190 = vmatpush2.bf16.msra.mxu0 0
  %1191 = vmatprep.subr.bf16.mxu0 0
  %1192 = vmatpush2.bf16.msra.mxu0 0
  %1193 = vmatprep.subr.bf16.mxu0 0
  %1194 = vmatpush2.bf16.msra.mxu0 0
  %1195 = vmatprep.subr.bf16.mxu0 0
  %1196 = vmatpush2.bf16.msra.mxu0 0
  %1197 = vmatprep.subr.bf16.mxu0 0
  %1198 = vmatpush2.bf16.msra.mxu0 0
  %1199 = vmatprep.subr.bf16.mxu0 0
  %1200 = vmatpush2.bf16.msra.mxu0 0
  %1201 = vmatprep.subr.bf16.mxu0 0
  %1202 = vmatpush2.bf16.msra.mxu0 0
  %1203 = vmatprep.subr.bf16.mxu0 0
  %1204 = vmatpush2.bf16.msra.mxu0 0
  %1205 = vmatprep.mubr.bf16.mxu0 0
  %1206 = vmatmul.mubr.bf16.gmra.mxu0 %v1172
  %v1207 = vpop.f32.mrf.mxu0
  %v1208 = vadd.f32 0.0, %v1207
  %v1209 = vpop.f32.mrf.mxu0
  %v1210 = vadd.f32 0.0, %v1209
  %v1211 = vpop.f32.mrf.mxu0
  %v1212 = vadd.f32 0.0, %v1211
  %v1213 = vpop.f32.mrf.mxu0
  %v1214 = vadd.f32 0.0, %v1213
  %1215 = vdwg.mxu0
  %1216 = vmatprep.subr.bf16.mxu0 %v788
  %1217 = vmatpush1.bf16.msra.mxu0 %v787
  %1218 = vmatprep.subr.bf16.mxu0 %v784
  %1219 = vmatpush1.bf16.msra.mxu0 %v783
  %1220 = vmatprep.subr.bf16.mxu0 %v780
  %1221 = vmatpush1.bf16.msra.mxu0 %v779
  %1222 = vmatprep.subr.bf16.mxu0 %v776
  %1223 = vmatpush1.bf16.msra.mxu0 %v775
  %1224 = vmatprep.subr.bf16.mxu0 %v772
  %1225 = vmatpush1.bf16.msra.mxu0 %v771
  %1226 = vmatprep.subr.bf16.mxu0 %v768
  %1227 = vmatpush1.bf16.msra.mxu0 %v767
  %1228 = vmatprep.subr.bf16.mxu0 %v764
  %1229 = vmatpush1.bf16.msra.mxu0 %v763
  %1230 = vmatprep.subr.bf16.mxu0 %v760
  %1231 = vmatpush1.bf16.msra.mxu0 %v759
  %1232 = vmatprep.subr.bf16.mxu0 0
  %1233 = vmatpush2.bf16.msra.mxu0 0
  %1234 = vmatprep.subr.bf16.mxu0 0
  %1235 = vmatpush2.bf16.msra.mxu0 0
  %1236 = vmatprep.subr.bf16.mxu0 0
  %1237 = vmatpush2.bf16.msra.mxu0 0
  %1238 = vmatprep.subr.bf16.mxu0 0
  %1239 = vmatpush2.bf16.msra.mxu0 0
  %1240 = vmatprep.subr.bf16.mxu0 0
  %1241 = vmatpush2.bf16.msra.mxu0 0
  %1242 = vmatprep.subr.bf16.mxu0 0
  %1243 = vmatpush2.bf16.msra.mxu0 0
  %1244 = vmatprep.subr.bf16.mxu0 0
  %1245 = vmatpush2.bf16.msra.mxu0 0
  %1246 = vmatprep.subr.bf16.mxu0 0
  %1247 = vmatpush2.bf16.msra.mxu0 0
  %1248 = vmatprep.mubr.bf16.mxu0 0
  %1249 = vmatmul.mubr.bf16.gmra.mxu0 %v1172
  %v1250 = vpop.f32.mrf.mxu0
  %v1251 = vadd.f32 0.0, %v1250
  %v1252 = vpop.f32.mrf.mxu0
  %v1253 = vadd.f32 0.0, %v1252
  %v1254 = vpop.f32.mrf.mxu0
  %v1255 = vadd.f32 0.0, %v1254
  %v1256 = vpop.f32.mrf.mxu0
  %v1257 = vadd.f32 0.0, %v1256
  %1258 = vdwg.mxu0
  %v1259 = vadd.f32 %v1164, %v1208
  %v1260 = vadd.f32 %v1165, %v1210
  %v1261 = vadd.f32 %v1166, %v1251
  %v1262 = vadd.f32 %v1167, %v1253
  %v1263 = vadd.f32 %v1168, %v1212
  %v1264 = vadd.f32 %v1169, %v1214
  %v1265 = vadd.f32 %v1170, %v1255
  %v1266 = vadd.f32 %v1171, %v1257
  %v1267 = vxor.u32 %v1259, 2147483648
  %v1268 = vxor.u32 %v1263, 2147483648
  %v1269 = vmul.f32 %v1267, 1.442695
  %v1270 = vpow.pop %v1269
  %v1271 = vmul.f32 %v1268, 1.442695
  %v1272 = vpow.pop %v1271
  %v1273 = vadd.f32 %v1270, 1.0
  %v1274 = vadd.f32 %v1272, 1.0
  %v1275 = vrcp.pop %v1273
  %v1276 = vmul.f32 1.0, %v1275
  %v1277 = vrcp.pop %v1274
  %v1278 = vmul.f32 1.0, %v1277
  %v1279 = vxor.u32 %v1260, 2147483648
  %v1280 = vxor.u32 %v1264, 2147483648
  %v1281 = vmul.f32 %v1279, 1.442695
  %v1282 = vpow.pop %v1281
  %v1283 = vmul.f32 %v1280, 1.442695
  %v1284 = vpow.pop %v1283
  %v1285 = vadd.f32 %v1282, 1.0
  %v1286 = vadd.f32 %v1284, 1.0
  %v1287 = vrcp.pop %v1285
  %v1288 = vmul.f32 1.0, %v1287
  %v1289 = vrcp.pop %v1286
  %v1290 = vmul.f32 1.0, %v1289
  %v1291 = vtanh.pop %v1261
  %v1292 = vtanh.pop %v1265
  %v1293 = vxor.u32 %v1262, 2147483648
  %v1294 = vxor.u32 %v1266, 2147483648
  %v1295 = vmul.f32 %v1293, 1.442695
  %v1296 = vpow.pop %v1295
  %v1297 = vmul.f32 %v1294, 1.442695
  %v1298 = vpow.pop %v1297
  %v1299 = vadd.f32 %v1296, 1.0
  %v1300 = vadd.f32 %v1298, 1.0
  %v1301 = vrcp.pop %v1299
  %v1302 = vmul.f32 1.0, %v1301
  %v1303 = vrcp.pop %v1300
  %v1304 = vmul.f32 1.0, %v1303
  %v1305 = vmul.f32 %v1288, %v1159
  %v1306 = vmul.f32 %v1290, %v1160
  %v1307 = vmul.f32 %v1276, %v1291
  %v1308 = vmul.f32 %v1278, %v1292
  %v1309 = vadd.f32 %v1305, %v1307
  %v1310 = vadd.f32 %v1306, %v1308
  %v1311 = vtanh.pop %v1309
  %v1312 = vtanh.pop %v1310
  %v1313 = vmul.f32 %v1302, %v1311
  %v1314 = vmul.f32 %v1304, %v1312
  %s1315 = sadd.s32 %s644, 2
  %v1316 = vstv %s1315
  %vm1317 = vcmp.lt.s32.totalorder %v1316, %v642
  %vm1318 = vcmp.lt.s32.totalorder %v1316, %v643
  %v1319 = vsel %vm1317, 1, 0
  %v1320 = vsel %vm1318, 1, 0
  %1321 = vset.pattern.permute.xlu0 0
  %1322 = vperm.xlu0 %1321, %v1319
  %v1323 = vpop.permute.xlu0 %1322
  %1324 = vset.pattern.permute.xlu0 0
  %1325 = vperm.xlu0 %1324, %v1320
  %v1326 = vpop.permute.xlu0 %1325
  %vm1327 = vcmp.eq.s32.totalorder %v1323, 1
  %vm1328 = vcmp.eq.s32.totalorder %v1326, 1
  %v1329 = vsel %vm1327, %v1313, 0.0
  %v1330 = vsel %vm1328, %v1314, 0.0
  %s1331 = scalar_lea.vmem %s7, 32
  %1332 = vst [vmem:[%s1331] sm:$0xff] %v1329
  %1333 = vst [vmem:[%s1331 + $0x8] sm:$0xff] %v1330
  %v1334 = vsel %vm1327, %v1313, %v1157
  %v1335 = vsel %vm1328, %v1314, %v1158
  %v1336 = vsel %vm1327, %v1309, %v1159
  %v1337 = vsel %vm1328, %v1310, %v1160
  %s1338 = smul.u32 6, 4
  %s1339 = smul.addr %s1338, 8
  %s1340 = scalar_lea.vmem [#allocation2], %s1339
  %v1341 = vld [vmem:[%s1340] sm:$0xff]
  %v1342 = vld [vmem:[%s1340 + $0x8] sm:$0xff]
  %v1343 = vld [vmem:[%s1340 + $0x10] sm:$0xff]
  %v1344 = vld [vmem:[%s1340 + $0x18] sm:$0xff]
  %v1345 = vld [vmem:[%s1340 + $0x20] sm:$0xff]
  %v1346 = vld [vmem:[%s1340 + $0x28] sm:$0xff]
  %v1347 = vld [vmem:[%s1340 + $0x30] sm:$0xff]
  %v1348 = vld [vmem:[%s1340 + $0x38] sm:$0xff]
  %v1349 = vpack.c.bf16 %v1335, %v1334
  %1350 = vmatprep.subr.bf16.mxu0 %v786
  %1351 = vmatpush1.bf16.msra.mxu0 %v785
  %1352 = vmatprep.subr.bf16.mxu0 %v782
  %1353 = vmatpush1.bf16.msra.mxu0 %v781
  %1354 = vmatprep.subr.bf16.mxu0 %v778
  %1355 = vmatpush1.bf16.msra.mxu0 %v777
  %1356 = vmatprep.subr.bf16.mxu0 %v774
  %1357 = vmatpush1.bf16.msra.mxu0 %v773
  %1358 = vmatprep.subr.bf16.mxu0 %v770
  %1359 = vmatpush1.bf16.msra.mxu0 %v769
  %1360 = vmatprep.subr.bf16.mxu0 %v766
  %1361 = vmatpush1.bf16.msra.mxu0 %v765
  %1362 = vmatprep.subr.bf16.mxu0 %v762
  %1363 = vmatpush1.bf16.msra.mxu0 %v761
  %1364 = vmatprep.subr.bf16.mxu0 %v758
  %1365 = vmatpush1.bf16.msra.mxu0 %v757
  %1366 = vmatprep.subr.bf16.mxu0 0
  %1367 = vmatpush2.bf16.msra.mxu0 0
  %1368 = vmatprep.subr.bf16.mxu0 0
  %1369 = vmatpush2.bf16.msra.mxu0 0
  %1370 = vmatprep.subr.bf16.mxu0 0
  %1371 = vmatpush2.bf16.msra.mxu0 0
  %1372 = vmatprep.subr.bf16.mxu0 0
  %1373 = vmatpush2.bf16.msra.mxu0 0
  %1374 = vmatprep.subr.bf16.mxu0 0
  %1375 = vmatpush2.bf16.msra.mxu0 0
  %1376 = vmatprep.subr.bf16.mxu0 0
  %1377 = vmatpush2.bf16.msra.mxu0 0
  %1378 = vmatprep.subr.bf16.mxu0 0
  %1379 = vmatpush2.bf16.msra.mxu0 0
  %1380 = vmatprep.subr.bf16.mxu0 0
  %1381 = vmatpush2.bf16.msra.mxu0 0
  %1382 = vmatprep.mubr.bf16.mxu0 0
  %1383 = vmatmul.mubr.bf16.gmra.mxu0 %v1349
  %v1384 = vpop.f32.mrf.mxu0
  %v1385 = vadd.f32 0.0, %v1384
  %v1386 = vpop.f32.mrf.mxu0
  %v1387 = vadd.f32 0.0, %v1386
  %v1388 = vpop.f32.mrf.mxu0
  %v1389 = vadd.f32 0.0, %v1388
  %v1390 = vpop.f32.mrf.mxu0
  %v1391 = vadd.f32 0.0, %v1390
  %1392 = vdwg.mxu0
  %1393 = vmatprep.subr.bf16.mxu0 %v788
  %1394 = vmatpush1.bf16.msra.mxu0 %v787
  %1395 = vmatprep.subr.bf16.mxu0 %v784
  %1396 = vmatpush1.bf16.msra.mxu0 %v783
  %1397 = vmatprep.subr.bf16.mxu0 %v780
  %1398 = vmatpush1.bf16.msra.mxu0 %v779
  %1399 = vmatprep.subr.bf16.mxu0 %v776
  %1400 = vmatpush1.bf16.msra.mxu0 %v775
  %1401 = vmatprep.subr.bf16.mxu0 %v772
  %1402 = vmatpush1.bf16.msra.mxu0 %v771
  %1403 = vmatprep.subr.bf16.mxu0 %v768
  %1404 = vmatpush1.bf16.msra.mxu0 %v767
  %1405 = vmatprep.subr.bf16.mxu0 %v764
  %1406 = vmatpush1.bf16.msra.mxu0 %v763
  %1407 = vmatprep.subr.bf16.mxu0 %v760
  %1408 = vmatpush1.bf16.msra.mxu0 %v759
  %1409 = vmatprep.subr.bf16.mxu0 0
  %1410 = vmatpush2.bf16.msra.mxu0 0
  %1411 = vmatprep.subr.bf16.mxu0 0
  %1412 = vmatpush2.bf16.msra.mxu0 0
  %1413 = vmatprep.subr.bf16.mxu0 0
  %1414 = vmatpush2.bf16.msra.mxu0 0
  %1415 = vmatprep.subr.bf16.mxu0 0
  %1416 = vmatpush2.bf16.msra.mxu0 0
  %1417 = vmatprep.subr.bf16.mxu0 0
  %1418 = vmatpush2.bf16.msra.mxu0 0
  %1419 = vmatprep.subr.bf16.mxu0 0
  %1420 = vmatpush2.bf16.msra.mxu0 0
  %1421 = vmatprep.subr.bf16.mxu0 0
  %1422 = vmatpush2.bf16.msra.mxu0 0
  %1423 = vmatprep.subr.bf16.mxu0 0
  %1424 = vmatpush2.bf16.msra.mxu0 0
  %1425 = vmatprep.mubr.bf16.mxu0 0
  %1426 = vmatmul.mubr.bf16.gmra.mxu0 %v1349
  %v1427 = vpop.f32.mrf.mxu0
  %v1428 = vadd.f32 0.0, %v1427
  %v1429 = vpop.f32.mrf.mxu0
  %v1430 = vadd.f32 0.0, %v1429
  %v1431 = vpop.f32.mrf.mxu0
  %v1432 = vadd.f32 0.0, %v1431
  %v1433 = vpop.f32.mrf.mxu0
  %v1434 = vadd.f32 0.0, %v1433
  %1435 = vdwg.mxu0
  %v1436 = vadd.f32 %v1341, %v1385
  %v1437 = vadd.f32 %v1342, %v1387
  %v1438 = vadd.f32 %v1343, %v1428
  %v1439 = vadd.f32 %v1344, %v1430
  %v1440 = vadd.f32 %v1345, %v1389
  %v1441 = vadd.f32 %v1346, %v1391
  %v1442 = vadd.f32 %v1347, %v1432
  %v1443 = vadd.f32 %v1348, %v1434
  %v1444 = vxor.u32 %v1436, 2147483648
  %v1445 = vxor.u32 %v1440, 2147483648
  %v1446 = vmul.f32 %v1444, 1.442695
  %v1447 = vpow.pop %v1446
  %v1448 = vmul.f32 %v1445, 1.442695
  %v1449 = vpow.pop %v1448
  %v1450 = vadd.f32 %v1447, 1.0
  %v1451 = vadd.f32 %v1449, 1.0
  %v1452 = vrcp.pop %v1450
  %v1453 = vmul.f32 1.0, %v1452
  %v1454 = vrcp.pop %v1451
  %v1455 = vmul.f32 1.0, %v1454
  %v1456 = vxor.u32 %v1437, 2147483648
  %v1457 = vxor.u32 %v1441, 2147483648
  %v1458 = vmul.f32 %v1456, 1.442695
  %v1459 = vpow.pop %v1458
  %v1460 = vmul.f32 %v1457, 1.442695
  %v1461 = vpow.pop %v1460
  %v1462 = vadd.f32 %v1459, 1.0
  %v1463 = vadd.f32 %v1461, 1.0
  %v1464 = vrcp.pop %v1462
  %v1465 = vmul.f32 1.0, %v1464
  %v1466 = vrcp.pop %v1463
  %v1467 = vmul.f32 1.0, %v1466
  %v1468 = vtanh.pop %v1438
  %v1469 = vtanh.pop %v1442
  %v1470 = vxor.u32 %v1439, 2147483648
  %v1471 = vxor.u32 %v1443, 2147483648
  %v1472 = vmul.f32 %v1470, 1.442695
  %v1473 = vpow.pop %v1472
  %v1474 = vmul.f32 %v1471, 1.442695
  %v1475 = vpow.pop %v1474
  %v1476 = vadd.f32 %v1473, 1.0
  %v1477 = vadd.f32 %v1475, 1.0
  %v1478 = vrcp.pop %v1476
  %v1479 = vmul.f32 1.0, %v1478
  %v1480 = vrcp.pop %v1477
  %v1481 = vmul.f32 1.0, %v1480
  %v1482 = vmul.f32 %v1465, %v1336
  %v1483 = vmul.f32 %v1467, %v1337
  %v1484 = vmul.f32 %v1453, %v1468
  %v1485 = vmul.f32 %v1455, %v1469
  %v1486 = vadd.f32 %v1482, %v1484
  %v1487 = vadd.f32 %v1483, %v1485
  %v1488 = vtanh.pop %v1486
  %v1489 = vtanh.pop %v1487
  %v1490 = vmul.f32 %v1479, %v1488
  %v1491 = vmul.f32 %v1481, %v1489
  %s1492 = sadd.s32 %s644, 3
  %v1493 = vstv %s1492
  %vm1494 = vcmp.lt.s32.totalorder %v1493, %v642
  %vm1495 = vcmp.lt.s32.totalorder %v1493, %v643
  %v1496 = vsel %vm1494, 1, 0
  %v1497 = vsel %vm1495, 1, 0
  %1498 = vset.pattern.permute.xlu0 0
  %1499 = vperm.xlu0 %1498, %v1496
  %v1500 = vpop.permute.xlu0 %1499
  %1501 = vset.pattern.permute.xlu0 0
  %1502 = vperm.xlu0 %1501, %v1497
  %v1503 = vpop.permute.xlu0 %1502
  %vm1504 = vcmp.eq.s32.totalorder %v1500, 1
  %vm1505 = vcmp.eq.s32.totalorder %v1503, 1
  %v1506 = vsel %vm1504, %v1490, 0.0
  %v1507 = vsel %vm1505, %v1491, 0.0
  %s1508 = scalar_lea.vmem %s7, 48
  %1509 = vst [vmem:[%s1508] sm:$0xff] %v1506
  %1510 = vst [vmem:[%s1508 + $0x8] sm:$0xff] %v1507
  %v1511 = vsel %vm1504, %v1490, %v1334
  %v1512 = vsel %vm1505, %v1491, %v1335
  %v1513 = vsel %vm1504, %v1486, %v1336
  %v1514 = vsel %vm1505, %v1487, %v1337
  %s1515 = smul.u32 8, 4
  %s1516 = smul.addr %s1515, 8
  %s1517 = scalar_lea.vmem [#allocation2], %s1516
  %v1518 = vld [vmem:[%s1517] sm:$0xff]
  %v1519 = vld [vmem:[%s1517 + $0x8] sm:$0xff]
  %v1520 = vld [vmem:[%s1517 + $0x10] sm:$0xff]
  %v1521 = vld [vmem:[%s1517 + $0x18] sm:$0xff]
  %v1522 = vld [vmem:[%s1517 + $0x20] sm:$0xff]
  %v1523 = vld [vmem:[%s1517 + $0x28] sm:$0xff]
  %v1524 = vld [vmem:[%s1517 + $0x30] sm:$0xff]
  %v1525 = vld [vmem:[%s1517 + $0x38] sm:$0xff]
  %v1526 = vpack.c.bf16 %v1512, %v1511
  %1527 = vmatprep.subr.bf16.mxu0 %v786
  %1528 = vmatpush1.bf16.msra.mxu0 %v785
  %1529 = vmatprep.subr.bf16.mxu0 %v782
  %1530 = vmatpush1.bf16.msra.mxu0 %v781
  %1531 = vmatprep.subr.bf16.mxu0 %v778
  %1532 = vmatpush1.bf16.msra.mxu0 %v777
  %1533 = vmatprep.subr.bf16.mxu0 %v774
  %1534 = vmatpush1.bf16.msra.mxu0 %v773
  %1535 = vmatprep.subr.bf16.mxu0 %v770
  %1536 = vmatpush1.bf16.msra.mxu0 %v769
  %1537 = vmatprep.subr.bf16.mxu0 %v766
  %1538 = vmatpush1.bf16.msra.mxu0 %v765
  %1539 = vmatprep.subr.bf16.mxu0 %v762
  %1540 = vmatpush1.bf16.msra.mxu0 %v761
  %1541 = vmatprep.subr.bf16.mxu0 %v758
  %1542 = vmatpush1.bf16.msra.mxu0 %v757
  %1543 = vmatprep.subr.bf16.mxu0 0
  %1544 = vmatpush2.bf16.msra.mxu0 0
  %1545 = vmatprep.subr.bf16.mxu0 0
  %1546 = vmatpush2.bf16.msra.mxu0 0
  %1547 = vmatprep.subr.bf16.mxu0 0
  %1548 = vmatpush2.bf16.msra.mxu0 0
  %1549 = vmatprep.subr.bf16.mxu0 0
  %1550 = vmatpush2.bf16.msra.mxu0 0
  %1551 = vmatprep.subr.bf16.mxu0 0
  %1552 = vmatpush2.bf16.msra.mxu0 0
  %1553 = vmatprep.subr.bf16.mxu0 0
  %1554 = vmatpush2.bf16.msra.mxu0 0
  %1555 = vmatprep.subr.bf16.mxu0 0
  %1556 = vmatpush2.bf16.msra.mxu0 0
  %1557 = vmatprep.subr.bf16.mxu0 0
  %1558 = vmatpush2.bf16.msra.mxu0 0
  %1559 = vmatprep.mubr.bf16.mxu0 0
  %1560 = vmatmul.mubr.bf16.gmra.mxu0 %v1526
  %v1561 = vpop.f32.mrf.mxu0
  %v1562 = vadd.f32 0.0, %v1561
  %v1563 = vpop.f32.mrf.mxu0
  %v1564 = vadd.f32 0.0, %v1563
  %v1565 = vpop.f32.mrf.mxu0
  %v1566 = vadd.f32 0.0, %v1565
  %v1567 = vpop.f32.mrf.mxu0
  %v1568 = vadd.f32 0.0, %v1567
  %1569 = vdwg.mxu0
  %1570 = vmatprep.subr.bf16.mxu0 %v788
  %1571 = vmatpush1.bf16.msra.mxu0 %v787
  %1572 = vmatprep.subr.bf16.mxu0 %v784
  %1573 = vmatpush1.bf16.msra.mxu0 %v783
  %1574 = vmatprep.subr.bf16.mxu0 %v780
  %1575 = vmatpush1.bf16.msra.mxu0 %v779
  %1576 = vmatprep.subr.bf16.mxu0 %v776
  %1577 = vmatpush1.bf16.msra.mxu0 %v775
  %1578 = vmatprep.subr.bf16.mxu0 %v772
  %1579 = vmatpush1.bf16.msra.mxu0 %v771
  %1580 = vmatprep.subr.bf16.mxu0 %v768
  %1581 = vmatpush1.bf16.msra.mxu0 %v767
  %1582 = vmatprep.subr.bf16.mxu0 %v764
  %1583 = vmatpush1.bf16.msra.mxu0 %v763
  %1584 = vmatprep.subr.bf16.mxu0 %v760
  %1585 = vmatpush1.bf16.msra.mxu0 %v759
  %1586 = vmatprep.subr.bf16.mxu0 0
  %1587 = vmatpush2.bf16.msra.mxu0 0
  %1588 = vmatprep.subr.bf16.mxu0 0
  %1589 = vmatpush2.bf16.msra.mxu0 0
  %1590 = vmatprep.subr.bf16.mxu0 0
  %1591 = vmatpush2.bf16.msra.mxu0 0
  %1592 = vmatprep.subr.bf16.mxu0 0
  %1593 = vmatpush2.bf16.msra.mxu0 0
  %1594 = vmatprep.subr.bf16.mxu0 0
  %1595 = vmatpush2.bf16.msra.mxu0 0
  %1596 = vmatprep.subr.bf16.mxu0 0
  %1597 = vmatpush2.bf16.msra.mxu0 0
  %1598 = vmatprep.subr.bf16.mxu0 0
  %1599 = vmatpush2.bf16.msra.mxu0 0
  %1600 = vmatprep.subr.bf16.mxu0 0
  %1601 = vmatpush2.bf16.msra.mxu0 0
  %1602 = vmatprep.mubr.bf16.mxu0 0
  %1603 = vmatmul.mubr.bf16.gmra.mxu0 %v1526
  %v1604 = vpop.f32.mrf.mxu0
  %v1605 = vadd.f32 0.0, %v1604
  %v1606 = vpop.f32.mrf.mxu0
  %v1607 = vadd.f32 0.0, %v1606
  %v1608 = vpop.f32.mrf.mxu0
  %v1609 = vadd.f32 0.0, %v1608
  %v1610 = vpop.f32.mrf.mxu0
  %v1611 = vadd.f32 0.0, %v1610
  %1612 = vdwg.mxu0
  %v1613 = vadd.f32 %v1518, %v1562
  %v1614 = vadd.f32 %v1519, %v1564
  %v1615 = vadd.f32 %v1520, %v1605
  %v1616 = vadd.f32 %v1521, %v1607
  %v1617 = vadd.f32 %v1522, %v1566
  %v1618 = vadd.f32 %v1523, %v1568
  %v1619 = vadd.f32 %v1524, %v1609
  %v1620 = vadd.f32 %v1525, %v1611
  %v1621 = vxor.u32 %v1613, 2147483648
  %v1622 = vxor.u32 %v1617, 2147483648
  %v1623 = vmul.f32 %v1621, 1.442695
  %v1624 = vpow.pop %v1623
  %v1625 = vmul.f32 %v1622, 1.442695
  %v1626 = vpow.pop %v1625
  %v1627 = vadd.f32 %v1624, 1.0
  %v1628 = vadd.f32 %v1626, 1.0
  %v1629 = vrcp.pop %v1627
  %v1630 = vmul.f32 1.0, %v1629
  %v1631 = vrcp.pop %v1628
  %v1632 = vmul.f32 1.0, %v1631
  %v1633 = vxor.u32 %v1614, 2147483648
  %v1634 = vxor.u32 %v1618, 2147483648
  %v1635 = vmul.f32 %v1633, 1.442695
  %v1636 = vpow.pop %v1635
  %v1637 = vmul.f32 %v1634, 1.442695
  %v1638 = vpow.pop %v1637
  %v1639 = vadd.f32 %v1636, 1.0
  %v1640 = vadd.f32 %v1638, 1.0
  %v1641 = vrcp.pop %v1639
  %v1642 = vmul.f32 1.0, %v1641
  %v1643 = vrcp.pop %v1640
  %v1644 = vmul.f32 1.0, %v1643
  %v1645 = vtanh.pop %v1615
  %v1646 = vtanh.pop %v1619
  %v1647 = vxor.u32 %v1616, 2147483648
  %v1648 = vxor.u32 %v1620, 2147483648
  %v1649 = vmul.f32 %v1647, 1.442695
  %v1650 = vpow.pop %v1649
  %v1651 = vmul.f32 %v1648, 1.442695
  %v1652 = vpow.pop %v1651
  %v1653 = vadd.f32 %v1650, 1.0
  %v1654 = vadd.f32 %v1652, 1.0
  %v1655 = vrcp.pop %v1653
  %v1656 = vmul.f32 1.0, %v1655
  %v1657 = vrcp.pop %v1654
  %v1658 = vmul.f32 1.0, %v1657
  %v1659 = vmul.f32 %v1642, %v1513
  %v1660 = vmul.f32 %v1644, %v1514
  %v1661 = vmul.f32 %v1630, %v1645
  %v1662 = vmul.f32 %v1632, %v1646
  %v1663 = vadd.f32 %v1659, %v1661
  %v1664 = vadd.f32 %v1660, %v1662
  %v1665 = vtanh.pop %v1663
  %v1666 = vtanh.pop %v1664
  %v1667 = vmul.f32 %v1656, %v1665
  %v1668 = vmul.f32 %v1658, %v1666
  %s1669 = sadd.s32 %s644, 4
  %v1670 = vstv %s1669
  %vm1671 = vcmp.lt.s32.totalorder %v1670, %v642
  %vm1672 = vcmp.lt.s32.totalorder %v1670, %v643
  %v1673 = vsel %vm1671, 1, 0
  %v1674 = vsel %vm1672, 1, 0
  %1675 = vset.pattern.permute.xlu0 0
  %1676 = vperm.xlu0 %1675, %v1673
  %v1677 = vpop.permute.xlu0 %1676
  %1678 = vset.pattern.permute.xlu0 0
  %1679 = vperm.xlu0 %1678, %v1674
  %v1680 = vpop.permute.xlu0 %1679
  %vm1681 = vcmp.eq.s32.totalorder %v1677, 1
  %vm1682 = vcmp.eq.s32.totalorder %v1680, 1
  %v1683 = vsel %vm1681, %v1667, 0.0
  %v1684 = vsel %vm1682, %v1668, 0.0
  %s1685 = scalar_lea.vmem %s7, 64
  %1686 = vst [vmem:[%s1685] sm:$0xff] %v1683
  %1687 = vst [vmem:[%s1685 + $0x8] sm:$0xff] %v1684
  %v1688 = vsel %vm1681, %v1667, %v1511
  %v1689 = vsel %vm1682, %v1668, %v1512
  %v1690 = vsel %vm1681, %v1663, %v1513
  %v1691 = vsel %vm1682, %v1664, %v1514
  %s1692 = smul.u32 10, 4
  %s1693 = smul.addr %s1692, 8
  %s1694 = scalar_lea.vmem [#allocation2], %s1693
  %v1695 = vld [vmem:[%s1694] sm:$0xff]
  %v1696 = vld [vmem:[%s1694 + $0x8] sm:$0xff]
  %v1697 = vld [vmem:[%s1694 + $0x10] sm:$0xff]
  %v1698 = vld [vmem:[%s1694 + $0x18] sm:$0xff]
  %v1699 = vld [vmem:[%s1694 + $0x20] sm:$0xff]
  %v1700 = vld [vmem:[%s1694 + $0x28] sm:$0xff]
  %v1701 = vld [vmem:[%s1694 + $0x30] sm:$0xff]
  %v1702 = vld [vmem:[%s1694 + $0x38] sm:$0xff]
  %v1703 = vpack.c.bf16 %v1689, %v1688
  %1704 = vmatprep.subr.bf16.mxu0 %v786
  %1705 = vmatpush1.bf16.msra.mxu0 %v785
  %1706 = vmatprep.subr.bf16.mxu0 %v782
  %1707 = vmatpush1.bf16.msra.mxu0 %v781
  %1708 = vmatprep.subr.bf16.mxu0 %v778
  %1709 = vmatpush1.bf16.msra.mxu0 %v777
  %1710 = vmatprep.subr.bf16.mxu0 %v774
  %1711 = vmatpush1.bf16.msra.mxu0 %v773
  %1712 = vmatprep.subr.bf16.mxu0 %v770
  %1713 = vmatpush1.bf16.msra.mxu0 %v769
  %1714 = vmatprep.subr.bf16.mxu0 %v766
  %1715 = vmatpush1.bf16.msra.mxu0 %v765
  %1716 = vmatprep.subr.bf16.mxu0 %v762
  %1717 = vmatpush1.bf16.msra.mxu0 %v761
  %1718 = vmatprep.subr.bf16.mxu0 %v758
  %1719 = vmatpush1.bf16.msra.mxu0 %v757
  %1720 = vmatprep.subr.bf16.mxu0 0
  %1721 = vmatpush2.bf16.msra.mxu0 0
  %1722 = vmatprep.subr.bf16.mxu0 0
  %1723 = vmatpush2.bf16.msra.mxu0 0
  %1724 = vmatprep.subr.bf16.mxu0 0
  %1725 = vmatpush2.bf16.msra.mxu0 0
  %1726 = vmatprep.subr.bf16.mxu0 0
  %1727 = vmatpush2.bf16.msra.mxu0 0
  %1728 = vmatprep.subr.bf16.mxu0 0
  %1729 = vmatpush2.bf16.msra.mxu0 0
  %1730 = vmatprep.subr.bf16.mxu0 0
  %1731 = vmatpush2.bf16.msra.mxu0 0
  %1732 = vmatprep.subr.bf16.mxu0 0
  %1733 = vmatpush2.bf16.msra.mxu0 0
  %1734 = vmatprep.subr.bf16.mxu0 0
  %1735 = vmatpush2.bf16.msra.mxu0 0
  %1736 = vmatprep.mubr.bf16.mxu0 0
  %1737 = vmatmul.mubr.bf16.gmra.mxu0 %v1703
  %v1738 = vpop.f32.mrf.mxu0
  %v1739 = vadd.f32 0.0, %v1738
  %v1740 = vpop.f32.mrf.mxu0
  %v1741 = vadd.f32 0.0, %v1740
  %v1742 = vpop.f32.mrf.mxu0
  %v1743 = vadd.f32 0.0, %v1742
  %v1744 = vpop.f32.mrf.mxu0
  %v1745 = vadd.f32 0.0, %v1744
  %1746 = vdwg.mxu0
  %1747 = vmatprep.subr.bf16.mxu0 %v788
  %1748 = vmatpush1.bf16.msra.mxu0 %v787
  %1749 = vmatprep.subr.bf16.mxu0 %v784
  %1750 = vmatpush1.bf16.msra.mxu0 %v783
  %1751 = vmatprep.subr.bf16.mxu0 %v780
  %1752 = vmatpush1.bf16.msra.mxu0 %v779
  %1753 = vmatprep.subr.bf16.mxu0 %v776
  %1754 = vmatpush1.bf16.msra.mxu0 %v775
  %1755 = vmatprep.subr.bf16.mxu0 %v772
  %1756 = vmatpush1.bf16.msra.mxu0 %v771
  %1757 = vmatprep.subr.bf16.mxu0 %v768
  %1758 = vmatpush1.bf16.msra.mxu0 %v767
  %1759 = vmatprep.subr.bf16.mxu0 %v764
  %1760 = vmatpush1.bf16.msra.mxu0 %v763
  %1761 = vmatprep.subr.bf16.mxu0 %v760
  %1762 = vmatpush1.bf16.msra.mxu0 %v759
  %1763 = vmatprep.subr.bf16.mxu0 0
  %1764 = vmatpush2.bf16.msra.mxu0 0
  %1765 = vmatprep.subr.bf16.mxu0 0
  %1766 = vmatpush2.bf16.msra.mxu0 0
  %1767 = vmatprep.subr.bf16.mxu0 0
  %1768 = vmatpush2.bf16.msra.mxu0 0
  %1769 = vmatprep.subr.bf16.mxu0 0
  %1770 = vmatpush2.bf16.msra.mxu0 0
  %1771 = vmatprep.subr.bf16.mxu0 0
  %1772 = vmatpush2.bf16.msra.mxu0 0
  %1773 = vmatprep.subr.bf16.mxu0 0
  %1774 = vmatpush2.bf16.msra.mxu0 0
  %1775 = vmatprep.subr.bf16.mxu0 0
  %1776 = vmatpush2.bf16.msra.mxu0 0
  %1777 = vmatprep.subr.bf16.mxu0 0
  %1778 = vmatpush2.bf16.msra.mxu0 0
  %1779 = vmatprep.mubr.bf16.mxu0 0
  %1780 = vmatmul.mubr.bf16.gmra.mxu0 %v1703
  %v1781 = vpop.f32.mrf.mxu0
  %v1782 = vadd.f32 0.0, %v1781
  %v1783 = vpop.f32.mrf.mxu0
  %v1784 = vadd.f32 0.0, %v1783
  %v1785 = vpop.f32.mrf.mxu0
  %v1786 = vadd.f32 0.0, %v1785
  %v1787 = vpop.f32.mrf.mxu0
  %v1788 = vadd.f32 0.0, %v1787
  %1789 = vdwg.mxu0
  %v1790 = vadd.f32 %v1695, %v1739
  %v1791 = vadd.f32 %v1696, %v1741
  %v1792 = vadd.f32 %v1697, %v1782
  %v1793 = vadd.f32 %v1698, %v1784
  %v1794 = vadd.f32 %v1699, %v1743
  %v1795 = vadd.f32 %v1700, %v1745
  %v1796 = vadd.f32 %v1701, %v1786
  %v1797 = vadd.f32 %v1702, %v1788
  %v1798 = vxor.u32 %v1790, 2147483648
  %v1799 = vxor.u32 %v1794, 2147483648
  %v1800 = vmul.f32 %v1798, 1.442695
  %v1801 = vpow.pop %v1800
  %v1802 = vmul.f32 %v1799, 1.442695
  %v1803 = vpow.pop %v1802
  %v1804 = vadd.f32 %v1801, 1.0
  %v1805 = vadd.f32 %v1803, 1.0
  %v1806 = vrcp.pop %v1804
  %v1807 = vmul.f32 1.0, %v1806
  %v1808 = vrcp.pop %v1805
  %v1809 = vmul.f32 1.0, %v1808
  %v1810 = vxor.u32 %v1791, 2147483648
  %v1811 = vxor.u32 %v1795, 2147483648
  %v1812 = vmul.f32 %v1810, 1.442695
  %v1813 = vpow.pop %v1812
  %v1814 = vmul.f32 %v1811, 1.442695
  %v1815 = vpow.pop %v1814
  %v1816 = vadd.f32 %v1813, 1.0
  %v1817 = vadd.f32 %v1815, 1.0
  %v1818 = vrcp.pop %v1816
  %v1819 = vmul.f32 1.0, %v1818
  %v1820 = vrcp.pop %v1817
  %v1821 = vmul.f32 1.0, %v1820
  %v1822 = vtanh.pop %v1792
  %v1823 = vtanh.pop %v1796
  %v1824 = vxor.u32 %v1793, 2147483648
  %v1825 = vxor.u32 %v1797, 2147483648
  %v1826 = vmul.f32 %v1824, 1.442695
  %v1827 = vpow.pop %v1826
  %v1828 = vmul.f32 %v1825, 1.442695
  %v1829 = vpow.pop %v1828
  %v1830 = vadd.f32 %v1827, 1.0
  %v1831 = vadd.f32 %v1829, 1.0
  %v1832 = vrcp.pop %v1830
  %v1833 = vmul.f32 1.0, %v1832
  %v1834 = vrcp.pop %v1831
  %v1835 = vmul.f32 1.0, %v1834
  %v1836 = vmul.f32 %v1819, %v1690
  %v1837 = vmul.f32 %v1821, %v1691
  %v1838 = vmul.f32 %v1807, %v1822
  %v1839 = vmul.f32 %v1809, %v1823
  %v1840 = vadd.f32 %v1836, %v1838
  %v1841 = vadd.f32 %v1837, %v1839
  %v1842 = vtanh.pop %v1840
  %v1843 = vtanh.pop %v1841
  %v1844 = vmul.f32 %v1833, %v1842
  %v1845 = vmul.f32 %v1835, %v1843
  %s1846 = sadd.s32 %s644, 5
  %v1847 = vstv %s1846
  %vm1848 = vcmp.lt.s32.totalorder %v1847, %v642
  %vm1849 = vcmp.lt.s32.totalorder %v1847, %v643
  %v1850 = vsel %vm1848, 1, 0
  %v1851 = vsel %vm1849, 1, 0
  %1852 = vset.pattern.permute.xlu0 0
  %1853 = vperm.xlu0 %1852, %v1850
  %v1854 = vpop.permute.xlu0 %1853
  %1855 = vset.pattern.permute.xlu0 0
  %1856 = vperm.xlu0 %1855, %v1851
  %v1857 = vpop.permute.xlu0 %1856
  %vm1858 = vcmp.eq.s32.totalorder %v1854, 1
  %vm1859 = vcmp.eq.s32.totalorder %v1857, 1
  %v1860 = vsel %vm1858, %v1844, 0.0
  %v1861 = vsel %vm1859, %v1845, 0.0
  %s1862 = scalar_lea.vmem %s7, 80
  %1863 = vst [vmem:[%s1862] sm:$0xff] %v1860
  %1864 = vst [vmem:[%s1862 + $0x8] sm:$0xff] %v1861
  %v1865 = vsel %vm1858, %v1844, %v1688
  %v1866 = vsel %vm1859, %v1845, %v1689
  %v1867 = vsel %vm1858, %v1840, %v1690
  %v1868 = vsel %vm1859, %v1841, %v1691
  %s1869 = smul.u32 12, 4
  %s1870 = smul.addr %s1869, 8
  %s1871 = scalar_lea.vmem [#allocation2], %s1870
  %v1872 = vld [vmem:[%s1871] sm:$0xff]
  %v1873 = vld [vmem:[%s1871 + $0x8] sm:$0xff]
  %v1874 = vld [vmem:[%s1871 + $0x10] sm:$0xff]
  %v1875 = vld [vmem:[%s1871 + $0x18] sm:$0xff]
  %v1876 = vld [vmem:[%s1871 + $0x20] sm:$0xff]
  %v1877 = vld [vmem:[%s1871 + $0x28] sm:$0xff]
  %v1878 = vld [vmem:[%s1871 + $0x30] sm:$0xff]
  %v1879 = vld [vmem:[%s1871 + $0x38] sm:$0xff]
  %v1880 = vpack.c.bf16 %v1866, %v1865
  %1881 = vmatprep.subr.bf16.mxu0 %v786
  %1882 = vmatpush1.bf16.msra.mxu0 %v785
  %1883 = vmatprep.subr.bf16.mxu0 %v782
  %1884 = vmatpush1.bf16.msra.mxu0 %v781
  %1885 = vmatprep.subr.bf16.mxu0 %v778
  %1886 = vmatpush1.bf16.msra.mxu0 %v777
  %1887 = vmatprep.subr.bf16.mxu0 %v774
  %1888 = vmatpush1.bf16.msra.mxu0 %v773
  %1889 = vmatprep.subr.bf16.mxu0 %v770
  %1890 = vmatpush1.bf16.msra.mxu0 %v769
  %1891 = vmatprep.subr.bf16.mxu0 %v766
  %1892 = vmatpush1.bf16.msra.mxu0 %v765
  %1893 = vmatprep.subr.bf16.mxu0 %v762
  %1894 = vmatpush1.bf16.msra.mxu0 %v761
  %1895 = vmatprep.subr.bf16.mxu0 %v758
  %1896 = vmatpush1.bf16.msra.mxu0 %v757
  %1897 = vmatprep.subr.bf16.mxu0 0
  %1898 = vmatpush2.bf16.msra.mxu0 0
  %1899 = vmatprep.subr.bf16.mxu0 0
  %1900 = vmatpush2.bf16.msra.mxu0 0
  %1901 = vmatprep.subr.bf16.mxu0 0
  %1902 = vmatpush2.bf16.msra.mxu0 0
  %1903 = vmatprep.subr.bf16.mxu0 0
  %1904 = vmatpush2.bf16.msra.mxu0 0
  %1905 = vmatprep.subr.bf16.mxu0 0
  %1906 = vmatpush2.bf16.msra.mxu0 0
  %1907 = vmatprep.subr.bf16.mxu0 0
  %1908 = vmatpush2.bf16.msra.mxu0 0
  %1909 = vmatprep.subr.bf16.mxu0 0
  %1910 = vmatpush2.bf16.msra.mxu0 0
  %1911 = vmatprep.subr.bf16.mxu0 0
  %1912 = vmatpush2.bf16.msra.mxu0 0
  %1913 = vmatprep.mubr.bf16.mxu0 0
  %1914 = vmatmul.mubr.bf16.gmra.mxu0 %v1880
  %v1915 = vpop.f32.mrf.mxu0
  %v1916 = vadd.f32 0.0, %v1915
  %v1917 = vpop.f32.mrf.mxu0
  %v1918 = vadd.f32 0.0, %v1917
  %v1919 = vpop.f32.mrf.mxu0
  %v1920 = vadd.f32 0.0, %v1919
  %v1921 = vpop.f32.mrf.mxu0
  %v1922 = vadd.f32 0.0, %v1921
  %1923 = vdwg.mxu0
  %1924 = vmatprep.subr.bf16.mxu0 %v788
  %1925 = vmatpush1.bf16.msra.mxu0 %v787
  %1926 = vmatprep.subr.bf16.mxu0 %v784
  %1927 = vmatpush1.bf16.msra.mxu0 %v783
  %1928 = vmatprep.subr.bf16.mxu0 %v780
  %1929 = vmatpush1.bf16.msra.mxu0 %v779
  %1930 = vmatprep.subr.bf16.mxu0 %v776
  %1931 = vmatpush1.bf16.msra.mxu0 %v775
  %1932 = vmatprep.subr.bf16.mxu0 %v772
  %1933 = vmatpush1.bf16.msra.mxu0 %v771
  %1934 = vmatprep.subr.bf16.mxu0 %v768
  %1935 = vmatpush1.bf16.msra.mxu0 %v767
  %1936 = vmatprep.subr.bf16.mxu0 %v764
  %1937 = vmatpush1.bf16.msra.mxu0 %v763
  %1938 = vmatprep.subr.bf16.mxu0 %v760
  %1939 = vmatpush1.bf16.msra.mxu0 %v759
  %1940 = vmatprep.subr.bf16.mxu0 0
  %1941 = vmatpush2.bf16.msra.mxu0 0
  %1942 = vmatprep.subr.bf16.mxu0 0
  %1943 = vmatpush2.bf16.msra.mxu0 0
  %1944 = vmatprep.subr.bf16.mxu0 0
  %1945 = vmatpush2.bf16.msra.mxu0 0
  %1946 = vmatprep.subr.bf16.mxu0 0
  %1947 = vmatpush2.bf16.msra.mxu0 0
  %1948 = vmatprep.subr.bf16.mxu0 0
  %1949 = vmatpush2.bf16.msra.mxu0 0
  %1950 = vmatprep.subr.bf16.mxu0 0
  %1951 = vmatpush2.bf16.msra.mxu0 0
  %1952 = vmatprep.subr.bf16.mxu0 0
  %1953 = vmatpush2.bf16.msra.mxu0 0
  %1954 = vmatprep.subr.bf16.mxu0 0
  %1955 = vmatpush2.bf16.msra.mxu0 0
  %1956 = vmatprep.mubr.bf16.mxu0 0
  %1957 = vmatmul.mubr.bf16.gmra.mxu0 %v1880
  %v1958 = vpop.f32.mrf.mxu0
  %v1959 = vadd.f32 0.0, %v1958
  %v1960 = vpop.f32.mrf.mxu0
  %v1961 = vadd.f32 0.0, %v1960
  %v1962 = vpop.f32.mrf.mxu0
  %v1963 = vadd.f32 0.0, %v1962
  %v1964 = vpop.f32.mrf.mxu0
  %v1965 = vadd.f32 0.0, %v1964
  %1966 = vdwg.mxu0
  %v1967 = vadd.f32 %v1872, %v1916
  %v1968 = vadd.f32 %v1873, %v1918
  %v1969 = vadd.f32 %v1874, %v1959
  %v1970 = vadd.f32 %v1875, %v1961
  %v1971 = vadd.f32 %v1876, %v1920
  %v1972 = vadd.f32 %v1877, %v1922
  %v1973 = vadd.f32 %v1878, %v1963
  %v1974 = vadd.f32 %v1879, %v1965
  %v1975 = vxor.u32 %v1967, 2147483648
  %v1976 = vxor.u32 %v1971, 2147483648
  %v1977 = vmul.f32 %v1975, 1.442695
  %v1978 = vpow.pop %v1977
  %v1979 = vmul.f32 %v1976, 1.442695
  %v1980 = vpow.pop %v1979
  %v1981 = vadd.f32 %v1978, 1.0
  %v1982 = vadd.f32 %v1980, 1.0
  %v1983 = vrcp.pop %v1981
  %v1984 = vmul.f32 1.0, %v1983
  %v1985 = vrcp.pop %v1982
  %v1986 = vmul.f32 1.0, %v1985
  %v1987 = vxor.u32 %v1968, 2147483648
  %v1988 = vxor.u32 %v1972, 2147483648
  %v1989 = vmul.f32 %v1987, 1.442695
  %v1990 = vpow.pop %v1989
  %v1991 = vmul.f32 %v1988, 1.442695
  %v1992 = vpow.pop %v1991
  %v1993 = vadd.f32 %v1990, 1.0
  %v1994 = vadd.f32 %v1992, 1.0
  %v1995 = vrcp.pop %v1993
  %v1996 = vmul.f32 1.0, %v1995
  %v1997 = vrcp.pop %v1994
  %v1998 = vmul.f32 1.0, %v1997
  %v1999 = vtanh.pop %v1969
  %v2000 = vtanh.pop %v1973
  %v2001 = vxor.u32 %v1970, 2147483648
  %v2002 = vxor.u32 %v1974, 2147483648
  %v2003 = vmul.f32 %v2001, 1.442695
  %v2004 = vpow.pop %v2003
  %v2005 = vmul.f32 %v2002, 1.442695
  %v2006 = vpow.pop %v2005
  %v2007 = vadd.f32 %v2004, 1.0
  %v2008 = vadd.f32 %v2006, 1.0
  %v2009 = vrcp.pop %v2007
  %v2010 = vmul.f32 1.0, %v2009
  %v2011 = vrcp.pop %v2008
  %v2012 = vmul.f32 1.0, %v2011
  %v2013 = vmul.f32 %v1996, %v1867
  %v2014 = vmul.f32 %v1998, %v1868
  %v2015 = vmul.f32 %v1984, %v1999
  %v2016 = vmul.f32 %v1986, %v2000
  %v2017 = vadd.f32 %v2013, %v2015
  %v2018 = vadd.f32 %v2014, %v2016
  %v2019 = vtanh.pop %v2017
  %v2020 = vtanh.pop %v2018
  %v2021 = vmul.f32 %v2010, %v2019
  %v2022 = vmul.f32 %v2012, %v2020
  %s2023 = sadd.s32 %s644, 6
  %v2024 = vstv %s2023
  %vm2025 = vcmp.lt.s32.totalorder %v2024, %v642
  %vm2026 = vcmp.lt.s32.totalorder %v2024, %v643
  %v2027 = vsel %vm2025, 1, 0
  %v2028 = vsel %vm2026, 1, 0
  %2029 = vset.pattern.permute.xlu0 0
  %2030 = vperm.xlu0 %2029, %v2027
  %v2031 = vpop.permute.xlu0 %2030
  %2032 = vset.pattern.permute.xlu0 0
  %2033 = vperm.xlu0 %2032, %v2028
  %v2034 = vpop.permute.xlu0 %2033
  %vm2035 = vcmp.eq.s32.totalorder %v2031, 1
  %vm2036 = vcmp.eq.s32.totalorder %v2034, 1
  %v2037 = vsel %vm2035, %v2021, 0.0
  %v2038 = vsel %vm2036, %v2022, 0.0
  %s2039 = scalar_lea.vmem %s7, 96
  %2040 = vst [vmem:[%s2039] sm:$0xff] %v2037
  %2041 = vst [vmem:[%s2039 + $0x8] sm:$0xff] %v2038
  %v2042 = vsel %vm2035, %v2021, %v1865
  %v2043 = vsel %vm2036, %v2022, %v1866
  %v2044 = vsel %vm2035, %v2017, %v1867
  %v2045 = vsel %vm2036, %v2018, %v1868
  %s2046 = smul.u32 14, 4
  %s2047 = smul.addr %s2046, 8
  %s2048 = scalar_lea.vmem [#allocation2], %s2047
  %v2049 = vld [vmem:[%s2048] sm:$0xff]
  %v2050 = vld [vmem:[%s2048 + $0x8] sm:$0xff]
  %v2051 = vld [vmem:[%s2048 + $0x10] sm:$0xff]
  %v2052 = vld [vmem:[%s2048 + $0x18] sm:$0xff]
  %v2053 = vld [vmem:[%s2048 + $0x20] sm:$0xff]
  %v2054 = vld [vmem:[%s2048 + $0x28] sm:$0xff]
  %v2055 = vld [vmem:[%s2048 + $0x30] sm:$0xff]
  %v2056 = vld [vmem:[%s2048 + $0x38] sm:$0xff]
  %v2057 = vpack.c.bf16 %v2043, %v2042
  %2058 = vmatprep.subr.bf16.mxu0 %v786
  %2059 = vmatpush1.bf16.msra.mxu0 %v785
  %2060 = vmatprep.subr.bf16.mxu0 %v782
  %2061 = vmatpush1.bf16.msra.mxu0 %v781
  %2062 = vmatprep.subr.bf16.mxu0 %v778
  %2063 = vmatpush1.bf16.msra.mxu0 %v777
  %2064 = vmatprep.subr.bf16.mxu0 %v774
  %2065 = vmatpush1.bf16.msra.mxu0 %v773
  %2066 = vmatprep.subr.bf16.mxu0 %v770
  %2067 = vmatpush1.bf16.msra.mxu0 %v769
  %2068 = vmatprep.subr.bf16.mxu0 %v766
  %2069 = vmatpush1.bf16.msra.mxu0 %v765
  %2070 = vmatprep.subr.bf16.mxu0 %v762
  %2071 = vmatpush1.bf16.msra.mxu0 %v761
  %2072 = vmatprep.subr.bf16.mxu0 %v758
  %2073 = vmatpush1.bf16.msra.mxu0 %v757
  %2074 = vmatprep.subr.bf16.mxu0 0
  %2075 = vmatpush2.bf16.msra.mxu0 0
  %2076 = vmatprep.subr.bf16.mxu0 0
  %2077 = vmatpush2.bf16.msra.mxu0 0
  %2078 = vmatprep.subr.bf16.mxu0 0
  %2079 = vmatpush2.bf16.msra.mxu0 0
  %2080 = vmatprep.subr.bf16.mxu0 0
  %2081 = vmatpush2.bf16.msra.mxu0 0
  %2082 = vmatprep.subr.bf16.mxu0 0
  %2083 = vmatpush2.bf16.msra.mxu0 0
  %2084 = vmatprep.subr.bf16.mxu0 0
  %2085 = vmatpush2.bf16.msra.mxu0 0
  %2086 = vmatprep.subr.bf16.mxu0 0
  %2087 = vmatpush2.bf16.msra.mxu0 0
  %2088 = vmatprep.subr.bf16.mxu0 0
  %2089 = vmatpush2.bf16.msra.mxu0 0
  %2090 = vmatprep.mubr.bf16.mxu0 0
  %2091 = vmatmul.mubr.bf16.gmra.mxu0 %v2057
  %v2092 = vpop.f32.mrf.mxu0
  %v2093 = vadd.f32 0.0, %v2092
  %v2094 = vpop.f32.mrf.mxu0
  %v2095 = vadd.f32 0.0, %v2094
  %v2096 = vpop.f32.mrf.mxu0
  %v2097 = vadd.f32 0.0, %v2096
  %v2098 = vpop.f32.mrf.mxu0
  %v2099 = vadd.f32 0.0, %v2098
  %2100 = vdwg.mxu0
  %2101 = vmatprep.subr.bf16.mxu0 %v788
  %2102 = vmatpush1.bf16.msra.mxu0 %v787
  %2103 = vmatprep.subr.bf16.mxu0 %v784
  %2104 = vmatpush1.bf16.msra.mxu0 %v783
  %2105 = vmatprep.subr.bf16.mxu0 %v780
  %2106 = vmatpush1.bf16.msra.mxu0 %v779
  %2107 = vmatprep.subr.bf16.mxu0 %v776
  %2108 = vmatpush1.bf16.msra.mxu0 %v775
  %2109 = vmatprep.subr.bf16.mxu0 %v772
  %2110 = vmatpush1.bf16.msra.mxu0 %v771
  %2111 = vmatprep.subr.bf16.mxu0 %v768
  %2112 = vmatpush1.bf16.msra.mxu0 %v767
  %2113 = vmatprep.subr.bf16.mxu0 %v764
  %2114 = vmatpush1.bf16.msra.mxu0 %v763
  %2115 = vmatprep.subr.bf16.mxu0 %v760
  %2116 = vmatpush1.bf16.msra.mxu0 %v759
  %2117 = vmatprep.subr.bf16.mxu0 0
  %2118 = vmatpush2.bf16.msra.mxu0 0
  %2119 = vmatprep.subr.bf16.mxu0 0
  %2120 = vmatpush2.bf16.msra.mxu0 0
  %2121 = vmatprep.subr.bf16.mxu0 0
  %2122 = vmatpush2.bf16.msra.mxu0 0
  %2123 = vmatprep.subr.bf16.mxu0 0
  %2124 = vmatpush2.bf16.msra.mxu0 0
  %2125 = vmatprep.subr.bf16.mxu0 0
  %2126 = vmatpush2.bf16.msra.mxu0 0
  %2127 = vmatprep.subr.bf16.mxu0 0
  %2128 = vmatpush2.bf16.msra.mxu0 0
  %2129 = vmatprep.subr.bf16.mxu0 0
  %2130 = vmatpush2.bf16.msra.mxu0 0
  %2131 = vmatprep.subr.bf16.mxu0 0
  %2132 = vmatpush2.bf16.msra.mxu0 0
  %2133 = vmatprep.mubr.bf16.mxu0 0
  %2134 = vmatmul.mubr.bf16.gmra.mxu0 %v2057
  %v2135 = vpop.f32.mrf.mxu0
  %v2136 = vadd.f32 0.0, %v2135
  %v2137 = vpop.f32.mrf.mxu0
  %v2138 = vadd.f32 0.0, %v2137
  %v2139 = vpop.f32.mrf.mxu0
  %v2140 = vadd.f32 0.0, %v2139
  %v2141 = vpop.f32.mrf.mxu0
  %v2142 = vadd.f32 0.0, %v2141
  %2143 = vdwg.mxu0
  %v2144 = vadd.f32 %v2049, %v2093
  %v2145 = vadd.f32 %v2050, %v2095
  %v2146 = vadd.f32 %v2051, %v2136
  %v2147 = vadd.f32 %v2052, %v2138
  %v2148 = vadd.f32 %v2053, %v2097
  %v2149 = vadd.f32 %v2054, %v2099
  %v2150 = vadd.f32 %v2055, %v2140
  %v2151 = vadd.f32 %v2056, %v2142
  %v2152 = vxor.u32 %v2144, 2147483648
  %v2153 = vxor.u32 %v2148, 2147483648
  %v2154 = vmul.f32 %v2152, 1.442695
  %v2155 = vpow.pop %v2154
  %v2156 = vmul.f32 %v2153, 1.442695
  %v2157 = vpow.pop %v2156
  %v2158 = vadd.f32 %v2155, 1.0
  %v2159 = vadd.f32 %v2157, 1.0
  %v2160 = vrcp.pop %v2158
  %v2161 = vmul.f32 1.0, %v2160
  %v2162 = vrcp.pop %v2159
  %v2163 = vmul.f32 1.0, %v2162
  %v2164 = vxor.u32 %v2145, 2147483648
  %v2165 = vxor.u32 %v2149, 2147483648
  %v2166 = vmul.f32 %v2164, 1.442695
  %v2167 = vpow.pop %v2166
  %v2168 = vmul.f32 %v2165, 1.442695
  %v2169 = vpow.pop %v2168
  %v2170 = vadd.f32 %v2167, 1.0
  %v2171 = vadd.f32 %v2169, 1.0
  %v2172 = vrcp.pop %v2170
  %v2173 = vmul.f32 1.0, %v2172
  %v2174 = vrcp.pop %v2171
  %v2175 = vmul.f32 1.0, %v2174
  %v2176 = vtanh.pop %v2146
  %v2177 = vtanh.pop %v2150
  %v2178 = vxor.u32 %v2147, 2147483648
  %v2179 = vxor.u32 %v2151, 2147483648
  %v2180 = vmul.f32 %v2178, 1.442695
  %v2181 = vpow.pop %v2180
  %v2182 = vmul.f32 %v2179, 1.442695
  %v2183 = vpow.pop %v2182
  %v2184 = vadd.f32 %v2181, 1.0
  %v2185 = vadd.f32 %v2183, 1.0
  %v2186 = vrcp.pop %v2184
  %v2187 = vmul.f32 1.0, %v2186
  %v2188 = vrcp.pop %v2185
  %v2189 = vmul.f32 1.0, %v2188
  %v2190 = vmul.f32 %v2173, %v2044
  %v2191 = vmul.f32 %v2175, %v2045
  %v2192 = vmul.f32 %v2161, %v2176
  %v2193 = vmul.f32 %v2163, %v2177
  %v2194 = vadd.f32 %v2190, %v2192
  %v2195 = vadd.f32 %v2191, %v2193
  %v2196 = vtanh.pop %v2194
  %v2197 = vtanh.pop %v2195
  %v2198 = vmul.f32 %v2187, %v2196
  %v2199 = vmul.f32 %v2189, %v2197
  %s2200 = sadd.s32 %s644, 7
  %v2201 = vstv %s2200
  %vm2202 = vcmp.lt.s32.totalorder %v2201, %v642
  %vm2203 = vcmp.lt.s32.totalorder %v2201, %v643
  %v2204 = vsel %vm2202, 1, 0
  %v2205 = vsel %vm2203, 1, 0
  %2206 = vset.pattern.permute.xlu0 0
  %2207 = vperm.xlu0 %2206, %v2204
  %v2208 = vpop.permute.xlu0 %2207
  %2209 = vset.pattern.permute.xlu0 0
  %2210 = vperm.xlu0 %2209, %v2205
  %v2211 = vpop.permute.xlu0 %2210
  %vm2212 = vcmp.eq.s32.totalorder %v2208, 1
  %vm2213 = vcmp.eq.s32.totalorder %v2211, 1
  %v2214 = vsel %vm2212, %v2198, 0.0
  %v2215 = vsel %vm2213, %v2199, 0.0
  %s2216 = scalar_lea.vmem %s7, 112
  %2217 = vst [vmem:[%s2216] sm:$0xff] %v2214
  %2218 = vst [vmem:[%s2216 + $0x8] sm:$0xff] %v2215
  %v2219 = vsel %vm2212, %v2198, %v2042
  %v2220 = vsel %vm2213, %v2199, %v2043
  %v2221 = vsel %vm2212, %v2194, %v2044
  %v2222 = vsel %vm2213, %v2195, %v2045
  %2223 = vst [vmem:[%s8] sm:$0xff] %v2219
  %2224 = vst [vmem:[%s8 + $0x8] sm:$0xff] %v2220
  %2225 = vst [vmem:[%s9] sm:$0xff] %v2221
  %2226 = vst [vmem:[%s9 + $0x8] sm:$0xff] %v2222
  // Predicated region
  $region34: #{rnn_model_forward.3} parent=0 // pred_check
    _
  $region35: #{rnn_model_forward.3} parent=0 // pred_check_branch
    %2228 = sbr.rel (0) target = $region37
  $region36: #{rnn_model_forward.3} parent=0 // pred_region
    _
  $region37: #{rnn_model_forward.3} parent=0 // pred_fallthru
    _
  // Predicated region
  $region38: #{rnn_model_forward.3} parent=0 // pred_check
    _
  $region39: #{rnn_model_forward.3} parent=0 // pred_check_branch
    %2230 = sbr.rel (0) target = $region41
  $region40: #{rnn_model_forward.3} parent=0 // pred_region
    _
  $region41: #{rnn_model_forward.3} parent=0 // pred_fallthru
    _
  // Predicated region
  $region42: #{rnn_model_forward.3} parent=0 // pred_check
    _
  $region43: #{rnn_model_forward.3} parent=0 // pred_check_branch
    %2232 = sbr.rel (0) target = $region45
  $region44: #{rnn_model_forward.3} parent=0 // pred_region
    _
  $region45: #{rnn_model_forward.3} parent=0 // pred_fallthru
    _
  // Predicated region
  $region46: #{rnn_model_forward.3} parent=0 // pred_check
    _
  $region47: #{rnn_model_forward.3} parent=0 // pred_check_branch
    %2234 = sbr.rel (0) target = $region49
  $region48: #{rnn_model_forward.3} parent=0 // pred_region
    _
  $region49: #{rnn_model_forward.3} parent=0 // pred_fallthru
    _
  // Predicated region
  $region50: #{rnn_model_forward.3} parent=0 // pred_check
    _
  $region51: #{rnn_model_forward.3} parent=0 // pred_check_branch
    %2236 = sbr.rel (0) target = $region53
  $region52: #{rnn_model_forward.3} parent=0 // pred_region
    _
  $region53: #{rnn_model_forward.3} parent=0 // pred_fallthru
    _
  // Predicated region
  $region54: #{rnn_model_forward.3} parent=0 // pred_check
    _
  $region55: #{rnn_model_forward.3} parent=0 // pred_check_branch
    %2238 = sbr.rel (0) target = $region57
  $region56: #{rnn_model_forward.3} parent=0 // pred_region
    _
  $region57: #{rnn_model_forward.3} parent=0 // pred_fallthru
    _

// kernel: rnn_model_forward.2
$region0: #{rnn_model_forward.2}
  #allocation0 [shape = 'u32[]', space=smem, size = 0x4, offset = 0x4, fixed_abs, tag = 'smem constant byte address 0x4 - core index']
  #allocation1 [shape = 'u32[144,128]{1,0:T(1,128)}', space=vmem, size = 0x12000, scoped, tag = 'internal scratch']
  #allocation2 [shape = 'f32[128,512]{1,0:T(8,128)}', space=vmem, size = 0x40000, scoped, tag = 'scratch operand']
  %s0 = inlined_call_operand.vmem [shape: bf16[128,128], index: 0, kind: input, shape index: {}]
  %s1 = inlined_call_operand.vmem [shape: bf16[128,512], index: 1, kind: input, shape index: {}]
  %s2 = inlined_call_operand.vmem [shape: bf16[128,512], index: 2, kind: input, shape index: {}]
  %s3 = inlined_call_operand.vmem [shape: f32[1,512], index: 3, kind: input, shape index: {}]
  %s4 = inlined_call_operand.vmem [shape: s32[16,1], index: 4, kind: input, shape index: {}]
  %s5 = inlined_call_operand.vmem [shape: f32[16,128], index: 5, kind: input, shape index: {}]
  %s6 = inlined_call_operand.vmem [shape: f32[16,128], index: 6, kind: input, shape index: {}]
  %s7 = inlined_call_operand.vmem [shape: bf16[128,128], index: 7, kind: output, shape index: {0}]
  %s8 = inlined_call_operand.vmem [shape: f32[16,128], index: 8, kind: output, shape index: {1}]
  %s9 = inlined_call_operand.vmem [shape: f32[16,128], index: 9, kind: output, shape index: {2}]
  %10 = xla_tuple %s7, %s8, %s9
  %s11 = sld [smem:[#allocation0]]
  $region58: #{rnn_model_forward.2} parent=0
    _
  %s13 = ssub.s32 1, %s11
  %s14 = scalar_select 0, %s13, %s11
  // Predicated region
  $region2: #{rnn_model_forward.2} parent=0 // pred_check
    _
  $region3: #{rnn_model_forward.2} parent=0 // pred_check_branch
    %16 = sbr.rel (0) target = $region5
  $region4: #{rnn_model_forward.2} parent=0 // pred_region
    _
  $region5: #{rnn_model_forward.2} parent=0 // pred_fallthru
    _
  // Predicated region
  $region6: #{rnn_model_forward.2} parent=0 // pred_check
    _
  $region7: #{rnn_model_forward.2} parent=0 // pred_check_branch
    %18 = sbr.rel (0) target = $region9
  $region8: #{rnn_model_forward.2} parent=0 // pred_region
    _
  $region9: #{rnn_model_forward.2} parent=0 // pred_fallthru
    _
  // Predicated region
  $region10: #{rnn_model_forward.2} parent=0 // pred_check
    _
  $region11: #{rnn_model_forward.2} parent=0 // pred_check_branch
    %20 = sbr.rel (0) target = $region13
  $region12: #{rnn_model_forward.2} parent=0 // pred_region
    _
  $region13: #{rnn_model_forward.2} parent=0 // pred_fallthru
    _
  // Predicated region
  $region14: #{rnn_model_forward.2} parent=0 // pred_check
    _
  $region15: #{rnn_model_forward.2} parent=0 // pred_check_branch
    %22 = sbr.rel (0) target = $region17
  $region16: #{rnn_model_forward.2} parent=0 // pred_region
    _
  $region17: #{rnn_model_forward.2} parent=0 // pred_fallthru
    _
  // Predicated region
  $region18: #{rnn_model_forward.2} parent=0 // pred_check
    _
  $region19: #{rnn_model_forward.2} parent=0 // pred_check_branch
    %24 = sbr.rel (0) target = $region21
  $region20: #{rnn_model_forward.2} parent=0 // pred_region
    _
  $region21: #{rnn_model_forward.2} parent=0 // pred_fallthru
    _
  // Predicated region
  $region22: #{rnn_model_forward.2} parent=0 // pred_check
    _
  $region23: #{rnn_model_forward.2} parent=0 // pred_check_branch
    %26 = sbr.rel (0) target = $region25
  $region24: #{rnn_model_forward.2} parent=0 // pred_region
    _
  $region25: #{rnn_model_forward.2} parent=0 // pred_fallthru
    _
  // Predicated region
  $region26: #{rnn_model_forward.2} parent=0 // pred_check
    _
  $region27: #{rnn_model_forward.2} parent=0 // pred_check_branch
    %28 = sbr.rel (0) target = $region29
  $region28: #{rnn_model_forward.2} parent=0 // pred_region
    _
  $region29: #{rnn_model_forward.2} parent=0 // pred_fallthru
    _
  %p30 = scmp.eq.s32.totalorder 0, 0
  // Predicated region
  $region30: #{rnn_model_forward.2} parent=0 // pred_check
    %p31 = pneg %p30
  $region31: #{rnn_model_forward.2} parent=0 // pred_check_branch
    %33 = sbr.rel (%p31) target = $region33
  $region32: #{rnn_model_forward.2} parent=0 // pred_region
    %v34 = vld [vmem:[%s5] sm:$0xff]
    %v35 = vld [vmem:[%s5 + $0x8] sm:$0xff]
    %36 = vst [vmem:[%s8] sm:$0xff] %v34
    %37 = vst [vmem:[%s8 + $0x8] sm:$0xff] %v35
    %v38 = vld [vmem:[%s6] sm:$0xff]
    %v39 = vld [vmem:[%s6 + $0x8] sm:$0xff]
    %40 = vst [vmem:[%s9] sm:$0xff] %v38
    %41 = vst [vmem:[%s9 + $0x8] sm:$0xff] %v39
  $region33: #{rnn_model_forward.2} parent=0 // pred_fallthru
    _
  %v42 = vld [vmem:[%s0] sm:$0xf]
  %v43 = vld [vmem:[%s0 + $0x4] sm:$0xf]
  %v44 = vld [vmem:[%s0 + $0x8] sm:$0xf]
  %v45 = vld [vmem:[%s0 + $0xc] sm:$0xf]
  %v46 = vld [vmem:[%s0 + $0x10] sm:$0xf]
  %v47 = vld [vmem:[%s0 + $0x14] sm:$0xf]
  %v48 = vld [vmem:[%s0 + $0x18] sm:$0xf]
  %v49 = vld [vmem:[%s0 + $0x1c] sm:$0xf]
  %v50 = vld [vmem:[%s0 + $0x20] sm:$0xf]
  %v51 = vld [vmem:[%s0 + $0x24] sm:$0xf]
  %v52 = vld [vmem:[%s0 + $0x28] sm:$0xf]
  %v53 = vld [vmem:[%s0 + $0x2c] sm:$0xf]
  %v54 = vld [vmem:[%s0 + $0x30] sm:$0xf]
  %v55 = vld [vmem:[%s0 + $0x34] sm:$0xf]
  %v56 = vld [vmem:[%s0 + $0x38] sm:$0xf]
  %v57 = vld [vmem:[%s0 + $0x3c] sm:$0xf]
  %v58 = vld [vmem:[%s1] sm:$0xff]
  %v59 = vld [vmem:[%s1 + $0x8] sm:$0xff]
  %v60 = vld [vmem:[%s1 + $0x10] sm:$0xff]
  %v61 = vld [vmem:[%s1 + $0x18] sm:$0xff]
  %v62 = vld [vmem:[%s1 + $0x20] sm:$0xff]
  %v63 = vld [vmem:[%s1 + $0x28] sm:$0xff]
  %v64 = vld [vmem:[%s1 + $0x30] sm:$0xff]
  %v65 = vld [vmem:[%s1 + $0x38] sm:$0xff]
  %v66 = vld [vmem:[%s1 + $0x40] sm:$0xff]
  %v67 = vld [vmem:[%s1 + $0x48] sm:$0xff]
  %v68 = vld [vmem:[%s1 + $0x50] sm:$0xff]
  %v69 = vld [vmem:[%s1 + $0x58] sm:$0xff]
  %v70 = vld [vmem:[%s1 + $0x60] sm:$0xff]
  %v71 = vld [vmem:[%s1 + $0x68] sm:$0xff]
  %v72 = vld [vmem:[%s1 + $0x70] sm:$0xff]
  %v73 = vld [vmem:[%s1 + $0x78] sm:$0xff]
  %v74 = vld [vmem:[%s1 + $0x80] sm:$0xff]
  %v75 = vld [vmem:[%s1 + $0x88] sm:$0xff]
  %v76 = vld [vmem:[%s1 + $0x90] sm:$0xff]
  %v77 = vld [vmem:[%s1 + $0x98] sm:$0xff]
  %v78 = vld [vmem:[%s1 + $0xa0] sm:$0xff]
  %v79 = vld [vmem:[%s1 + $0xa8] sm:$0xff]
  %v80 = vld [vmem:[%s1 + $0xb0] sm:$0xff]
  %v81 = vld [vmem:[%s1 + $0xb8] sm:$0xff]
  %v82 = vld [vmem:[%s1 + $0xc0] sm:$0xff]
  %v83 = vld [vmem:[%s1 + $0xc8] sm:$0xff]
  %v84 = vld [vmem:[%s1 + $0xd0] sm:$0xff]
  %v85 = vld [vmem:[%s1 + $0xd8] sm:$0xff]
  %v86 = vld [vmem:[%s1 + $0xe0] sm:$0xff]
  %v87 = vld [vmem:[%s1 + $0xe8] sm:$0xff]
  %v88 = vld [vmem:[%s1 + $0xf0] sm:$0xff]
  %v89 = vld [vmem:[%s1 + $0xf8] sm:$0xff]
  %v90 = vld [vmem:[%s3] sm:$0xf]
  %v92 = vlaneseq
  %v93 = vshrl.u32 %v92, 7
  %v94 = vsub.s32 0, %v93
  %v95 = vrot.slane %v90, %v94
  %v96 = vlaneseq
  %v97 = vshrl.u32 %v96, 7
  %v98 = vsub.s32 1, %v97
  %v99 = vrot.slane %v90, %v98
  %v100 = vlaneseq
  %v101 = vshrl.u32 %v100, 7
  %v102 = vsub.s32 2, %v101
  %v103 = vrot.slane %v90, %v102
  %v104 = vlaneseq
  %v105 = vshrl.u32 %v104, 7
  %v106 = vsub.s32 3, %v105
  %v107 = vrot.slane %v90, %v106
  %v128 = vunpack.c.l.b16 %v42
  %v129 = vunpack.c.l.b16 %v43
  %v130 = vunpack.c.l.b16 %v44
  %v131 = vunpack.c.l.b16 %v45
  %v132 = vunpack.c.l.b16 %v46
  %v133 = vunpack.c.l.b16 %v47
  %v134 = vunpack.c.l.b16 %v48
  %v135 = vunpack.c.l.b16 %v49
  %v136 = vunpack.c.l.b16 %v50
  %v137 = vunpack.c.l.b16 %v51
  %v138 = vunpack.c.l.b16 %v52
  %v139 = vunpack.c.l.b16 %v53
  %v140 = vunpack.c.l.b16 %v54
  %v141 = vunpack.c.l.b16 %v55
  %v142 = vunpack.c.l.b16 %v56
  %v143 = vunpack.c.l.b16 %v57
  %v144 = vpack.c.b16 %v129, %v128
  %v145 = vpack.c.b16 %v131, %v130
  %v146 = vpack.c.b16 %v133, %v132
  %v147 = vpack.c.b16 %v135, %v134
  %v148 = vpack.c.b16 %v137, %v136
  %v149 = vpack.c.b16 %v139, %v138
  %v150 = vpack.c.b16 %v141, %v140
  %v151 = vpack.c.b16 %v143, %v142
  %v192 = vunpack.c.l.b16 %v58
  %v193 = vunpack.c.h.b16 %v58
  %v194 = vunpack.c.l.b16 %v59
  %v195 = vunpack.c.h.b16 %v59
  %v196 = vunpack.c.l.b16 %v60
  %v197 = vunpack.c.h.b16 %v60
  %v198 = vunpack.c.l.b16 %v61
  %v199 = vunpack.c.h.b16 %v61
  %v200 = vunpack.c.l.b16 %v62
  %v201 = vunpack.c.h.b16 %v62
  %v202 = vunpack.c.l.b16 %v63
  %v203 = vunpack.c.h.b16 %v63
  %v204 = vunpack.c.l.b16 %v64
  %v205 = vunpack.c.h.b16 %v64
  %v206 = vunpack.c.l.b16 %v65
  %v207 = vunpack.c.h.b16 %v65
  %v208 = vunpack.c.l.b16 %v66
  %v209 = vunpack.c.h.b16 %v66
  %v210 = vunpack.c.l.b16 %v67
  %v211 = vunpack.c.h.b16 %v67
  %v212 = vunpack.c.l.b16 %v68
  %v213 = vunpack.c.h.b16 %v68
  %v214 = vunpack.c.l.b16 %v69
  %v215 = vunpack.c.h.b16 %v69
  %v216 = vunpack.c.l.b16 %v70
  %v217 = vunpack.c.h.b16 %v70
  %v218 = vunpack.c.l.b16 %v71
  %v219 = vunpack.c.h.b16 %v71
  %v220 = vunpack.c.l.b16 %v72
  %v221 = vunpack.c.h.b16 %v72
  %v222 = vunpack.c.l.b16 %v73
  %v223 = vunpack.c.h.b16 %v73
  %v224 = vunpack.c.l.b16 %v74
  %v225 = vunpack.c.h.b16 %v74
  %v226 = vunpack.c.l.b16 %v75
  %v227 = vunpack.c.h.b16 %v75
  %v228 = vunpack.c.l.b16 %v76
  %v229 = vunpack.c.h.b16 %v76
  %v230 = vunpack.c.l.b16 %v77
  %v231 = vunpack.c.h.b16 %v77
  %v232 = vunpack.c.l.b16 %v78
  %v233 = vunpack.c.h.b16 %v78
  %v234 = vunpack.c.l.b16 %v79
  %v235 = vunpack.c.h.b16 %v79
  %v236 = vunpack.c.l.b16 %v80
  %v237 = vunpack.c.h.b16 %v80
  %v238 = vunpack.c.l.b16 %v81
  %v239 = vunpack.c.h.b16 %v81
  %v240 = vunpack.c.l.b16 %v82
  %v241 = vunpack.c.h.b16 %v82
  %v242 = vunpack.c.l.b16 %v83
  %v243 = vunpack.c.h.b16 %v83
  %v244 = vunpack.c.l.b16 %v84
  %v245 = vunpack.c.h.b16 %v84
  %v246 = vunpack.c.l.b16 %v85
  %v247 = vunpack.c.h.b16 %v85
  %v248 = vunpack.c.l.b16 %v86
  %v249 = vunpack.c.h.b16 %v86
  %v250 = vunpack.c.l.b16 %v87
  %v251 = vunpack.c.h.b16 %v87
  %v252 = vunpack.c.l.b16 %v88
  %v253 = vunpack.c.h.b16 %v88
  %v254 = vunpack.c.l.b16 %v89
  %v255 = vunpack.c.h.b16 %v89
  %v256 = vpack.c.b16 %v196, %v192
  %v257 = vpack.c.b16 %v197, %v193
  %v258 = vpack.c.b16 %v198, %v194
  %v259 = vpack.c.b16 %v199, %v195
  %v260 = vpack.c.b16 %v204, %v200
  %v261 = vpack.c.b16 %v205, %v201
  %v262 = vpack.c.b16 %v206, %v202
  %v263 = vpack.c.b16 %v207, %v203
  %v264 = vpack.c.b16 %v212, %v208
  %v265 = vpack.c.b16 %v213, %v209
  %v266 = vpack.c.b16 %v214, %v210
  %v267 = vpack.c.b16 %v215, %v211
  %v268 = vpack.c.b16 %v220, %v216
  %v269 = vpack.c.b16 %v221, %v217
  %v270 = vpack.c.b16 %v222, %v218
  %v271 = vpack.c.b16 %v223, %v219
  %v272 = vpack.c.b16 %v228, %v224
  %v273 = vpack.c.b16 %v229, %v225
  %v274 = vpack.c.b16 %v230, %v226
  %v275 = vpack.c.b16 %v231, %v227
  %v276 = vpack.c.b16 %v236, %v232
  %v277 = vpack.c.b16 %v237, %v233
  %v278 = vpack.c.b16 %v238, %v234
  %v279 = vpack.c.b16 %v239, %v235
  %v280 = vpack.c.b16 %v244, %v240
  %v281 = vpack.c.b16 %v245, %v241
  %v282 = vpack.c.b16 %v246, %v242
  %v283 = vpack.c.b16 %v247, %v243
  %v284 = vpack.c.b16 %v252, %v248
  %v285 = vpack.c.b16 %v253, %v249
  %v286 = vpack.c.b16 %v254, %v250
  %v287 = vpack.c.b16 %v255, %v251
  %320 = vmatprep.subr.bf16.mxu0 %v285
  %321 = vmatpush1.bf16.msra.mxu0 %v284
  %322 = vmatprep.subr.bf16.mxu0 %v281
  %323 = vmatpush1.bf16.msra.mxu0 %v280
  %324 = vmatprep.subr.bf16.mxu0 %v277
  %325 = vmatpush1.bf16.msra.mxu0 %v276
  %326 = vmatprep.subr.bf16.mxu0 %v273
  %327 = vmatpush1.bf16.msra.mxu0 %v272
  %328 = vmatprep.subr.bf16.mxu0 %v269
  %329 = vmatpush1.bf16.msra.mxu0 %v268
  %330 = vmatprep.subr.bf16.mxu0 %v265
  %331 = vmatpush1.bf16.msra.mxu0 %v264
  %332 = vmatprep.subr.bf16.mxu0 %v261
  %333 = vmatpush1.bf16.msra.mxu0 %v260
  %334 = vmatprep.subr.bf16.mxu0 %v257
  %335 = vmatpush1.bf16.msra.mxu0 %v256
  %336 = vmatprep.subr.bf16.mxu0 0
  %337 = vmatpush2.bf16.msra.mxu0 0
  %338 = vmatprep.subr.bf16.mxu0 0
  %339 = vmatpush2.bf16.msra.mxu0 0
  %340 = vmatprep.subr.bf16.mxu0 0
  %341 = vmatpush2.bf16.msra.mxu0 0
  %342 = vmatprep.subr.bf16.mxu0 0
  %343 = vmatpush2.bf16.msra.mxu0 0
  %344 = vmatprep.subr.bf16.mxu0 0
  %345 = vmatpush2.bf16.msra.mxu0 0
  %346 = vmatprep.subr.bf16.mxu0 0
  %347 = vmatpush2.bf16.msra.mxu0 0
  %348 = vmatprep.subr.bf16.mxu0 0
  %349 = vmatpush2.bf16.msra.mxu0 0
  %350 = vmatprep.subr.bf16.mxu0 0
  %351 = vmatpush2.bf16.msra.mxu0 0
  %352 = vmatprep.mubr.bf16.mxu0 0
  %353 = vmatmul.mubr.bf16.gmra.mxu0 %v144
  %v354 = vpop.f32.mrf.mxu0
  %v355 = vadd.f32 %v95, %v354
  %v356 = vpop.f32.mrf.mxu0
  %v357 = vadd.f32 %v99, %v356
  %v358 = vpop.f32.mrf.mxu0
  %v359 = vadd.f32 %v95, %v358
  %v360 = vpop.f32.mrf.mxu0
  %v361 = vadd.f32 %v99, %v360
  %362 = vmatprep.mubr.bf16.mxu0 0
  %363 = vmatmul.mubr.bf16.gmra.mxu0 %v145
  %v364 = vpop.f32.mrf.mxu0
  %v365 = vadd.f32 %v95, %v364
  %v366 = vpop.f32.mrf.mxu0
  %v367 = vadd.f32 %v99, %v366
  %v368 = vpop.f32.mrf.mxu0
  %v369 = vadd.f32 %v95, %v368
  %v370 = vpop.f32.mrf.mxu0
  %v371 = vadd.f32 %v99, %v370
  %372 = vmatprep.mubr.bf16.mxu0 0
  %373 = vmatmul.mubr.bf16.gmra.mxu0 %v146
  %v374 = vpop.f32.mrf.mxu0
  %v375 = vadd.f32 %v95, %v374
  %v376 = vpop.f32.mrf.mxu0
  %v377 = vadd.f32 %v99, %v376
  %v378 = vpop.f32.mrf.mxu0
  %v379 = vadd.f32 %v95, %v378
  %v380 = vpop.f32.mrf.mxu0
  %v381 = vadd.f32 %v99, %v380
  %382 = vmatprep.mubr.bf16.mxu0 0
  %383 = vmatmul.mubr.bf16.gmra.mxu0 %v147
  %v384 = vpop.f32.mrf.mxu0
  %v385 = vadd.f32 %v95, %v384
  %v386 = vpop.f32.mrf.mxu0
  %v387 = vadd.f32 %v99, %v386
  %v388 = vpop.f32.mrf.mxu0
  %v389 = vadd.f32 %v95, %v388
  %v390 = vpop.f32.mrf.mxu0
  %v391 = vadd.f32 %v99, %v390
  %392 = vmatprep.mubr.bf16.mxu0 0
  %393 = vmatmul.mubr.bf16.gmra.mxu0 %v148
  %v394 = vpop.f32.mrf.mxu0
  %v395 = vadd.f32 %v95, %v394
  %v396 = vpop.f32.mrf.mxu0
  %v397 = vadd.f32 %v99, %v396
  %v398 = vpop.f32.mrf.mxu0
  %v399 = vadd.f32 %v95, %v398
  %v400 = vpop.f32.mrf.mxu0
  %v401 = vadd.f32 %v99, %v400
  %402 = vmatprep.mubr.bf16.mxu0 0
  %403 = vmatmul.mubr.bf16.gmra.mxu0 %v149
  %v404 = vpop.f32.mrf.mxu0
  %v405 = vadd.f32 %v95, %v404
  %v406 = vpop.f32.mrf.mxu0
  %v407 = vadd.f32 %v99, %v406
  %v408 = vpop.f32.mrf.mxu0
  %v409 = vadd.f32 %v95, %v408
  %v410 = vpop.f32.mrf.mxu0
  %v411 = vadd.f32 %v99, %v410
  %412 = vmatprep.mubr.bf16.mxu0 0
  %413 = vmatmul.mubr.bf16.gmra.mxu0 %v150
  %v414 = vpop.f32.mrf.mxu0
  %v415 = vadd.f32 %v95, %v414
  %v416 = vpop.f32.mrf.mxu0
  %v417 = vadd.f32 %v99, %v416
  %v418 = vpop.f32.mrf.mxu0
  %v419 = vadd.f32 %v95, %v418
  %v420 = vpop.f32.mrf.mxu0
  %v421 = vadd.f32 %v99, %v420
  %422 = vmatprep.mubr.bf16.mxu0 0
  %423 = vmatmul.mubr.bf16.gmra.mxu0 %v151
  %v424 = vpop.f32.mrf.mxu0
  %v425 = vadd.f32 %v95, %v424
  %v426 = vpop.f32.mrf.mxu0
  %v427 = vadd.f32 %v99, %v426
  %v428 = vpop.f32.mrf.mxu0
  %v429 = vadd.f32 %v95, %v428
  %v430 = vpop.f32.mrf.mxu0
  %v431 = vadd.f32 %v99, %v430
  %432 = vdwg.mxu0
  %433 = vmatprep.subr.bf16.mxu0 %v287
  %434 = vmatpush1.bf16.msra.mxu0 %v286
  %435 = vmatprep.subr.bf16.mxu0 %v283
  %436 = vmatpush1.bf16.msra.mxu0 %v282
  %437 = vmatprep.subr.bf16.mxu0 %v279
  %438 = vmatpush1.bf16.msra.mxu0 %v278
  %439 = vmatprep.subr.bf16.mxu0 %v275
  %440 = vmatpush1.bf16.msra.mxu0 %v274
  %441 = vmatprep.subr.bf16.mxu0 %v271
  %442 = vmatpush1.bf16.msra.mxu0 %v270
  %443 = vmatprep.subr.bf16.mxu0 %v267
  %444 = vmatpush1.bf16.msra.mxu0 %v266
  %445 = vmatprep.subr.bf16.mxu0 %v263
  %446 = vmatpush1.bf16.msra.mxu0 %v262
  %447 = vmatprep.subr.bf16.mxu0 %v259
  %448 = vmatpush1.bf16.msra.mxu0 %v258
  %449 = vmatprep.subr.bf16.mxu0 0
  %450 = vmatpush2.bf16.msra.mxu0 0
  %451 = vmatprep.subr.bf16.mxu0 0
  %452 = vmatpush2.bf16.msra.mxu0 0
  %453 = vmatprep.subr.bf16.mxu0 0
  %454 = vmatpush2.bf16.msra.mxu0 0
  %455 = vmatprep.subr.bf16.mxu0 0
  %456 = vmatpush2.bf16.msra.mxu0 0
  %457 = vmatprep.subr.bf16.mxu0 0
  %458 = vmatpush2.bf16.msra.mxu0 0
  %459 = vmatprep.subr.bf16.mxu0 0
  %460 = vmatpush2.bf16.msra.mxu0 0
  %461 = vmatprep.subr.bf16.mxu0 0
  %462 = vmatpush2.bf16.msra.mxu0 0
  %463 = vmatprep.subr.bf16.mxu0 0
  %464 = vmatpush2.bf16.msra.mxu0 0
  %465 = vmatprep.mubr.bf16.mxu0 0
  %466 = vmatmul.mubr.bf16.gmra.mxu0 %v144
  %v467 = vpop.f32.mrf.mxu0
  %v468 = vadd.f32 %v103, %v467
  %v469 = vpop.f32.mrf.mxu0
  %v470 = vadd.f32 %v107, %v469
  %v471 = vpop.f32.mrf.mxu0
  %v472 = vadd.f32 %v103, %v471
  %v473 = vpop.f32.mrf.mxu0
  %v474 = vadd.f32 %v107, %v473
  %475 = vmatprep.mubr.bf16.mxu0 0
  %476 = vmatmul.mubr.bf16.gmra.mxu0 %v145
  %v477 = vpop.f32.mrf.mxu0
  %v478 = vadd.f32 %v103, %v477
  %v479 = vpop.f32.mrf.mxu0
  %v480 = vadd.f32 %v107, %v479
  %v481 = vpop.f32.mrf.mxu0
  %v482 = vadd.f32 %v103, %v481
  %v483 = vpop.f32.mrf.mxu0
  %v484 = vadd.f32 %v107, %v483
  %485 = vmatprep.mubr.bf16.mxu0 0
  %486 = vmatmul.mubr.bf16.gmra.mxu0 %v146
  %v487 = vpop.f32.mrf.mxu0
  %v488 = vadd.f32 %v103, %v487
  %v489 = vpop.f32.mrf.mxu0
  %v490 = vadd.f32 %v107, %v489
  %v491 = vpop.f32.mrf.mxu0
  %v492 = vadd.f32 %v103, %v491
  %v493 = vpop.f32.mrf.mxu0
  %v494 = vadd.f32 %v107, %v493
  %495 = vmatprep.mubr.bf16.mxu0 0
  %496 = vmatmul.mubr.bf16.gmra.mxu0 %v147
  %v497 = vpop.f32.mrf.mxu0
  %v498 = vadd.f32 %v103, %v497
  %v499 = vpop.f32.mrf.mxu0
  %v500 = vadd.f32 %v107, %v499
  %v501 = vpop.f32.mrf.mxu0
  %v502 = vadd.f32 %v103, %v501
  %v503 = vpop.f32.mrf.mxu0
  %v504 = vadd.f32 %v107, %v503
  %505 = vmatprep.mubr.bf16.mxu0 0
  %506 = vmatmul.mubr.bf16.gmra.mxu0 %v148
  %v507 = vpop.f32.mrf.mxu0
  %v508 = vadd.f32 %v103, %v507
  %v509 = vpop.f32.mrf.mxu0
  %v510 = vadd.f32 %v107, %v509
  %v511 = vpop.f32.mrf.mxu0
  %v512 = vadd.f32 %v103, %v511
  %v513 = vpop.f32.mrf.mxu0
  %v514 = vadd.f32 %v107, %v513
  %515 = vmatprep.mubr.bf16.mxu0 0
  %516 = vmatmul.mubr.bf16.gmra.mxu0 %v149
  %v517 = vpop.f32.mrf.mxu0
  %v518 = vadd.f32 %v103, %v517
  %v519 = vpop.f32.mrf.mxu0
  %v520 = vadd.f32 %v107, %v519
  %v521 = vpop.f32.mrf.mxu0
  %v522 = vadd.f32 %v103, %v521
  %v523 = vpop.f32.mrf.mxu0
  %v524 = vadd.f32 %v107, %v523
  %525 = vmatprep.mubr.bf16.mxu0 0
  %526 = vmatmul.mubr.bf16.gmra.mxu0 %v150
  %v527 = vpop.f32.mrf.mxu0
  %v528 = vadd.f32 %v103, %v527
  %v529 = vpop.f32.mrf.mxu0
  %v530 = vadd.f32 %v107, %v529
  %v531 = vpop.f32.mrf.mxu0
  %v532 = vadd.f32 %v103, %v531
  %v533 = vpop.f32.mrf.mxu0
  %v534 = vadd.f32 %v107, %v533
  %535 = vmatprep.mubr.bf16.mxu0 0
  %536 = vmatmul.mubr.bf16.gmra.mxu0 %v151
  %v537 = vpop.f32.mrf.mxu0
  %v538 = vadd.f32 %v103, %v537
  %v539 = vpop.f32.mrf.mxu0
  %v540 = vadd.f32 %v107, %v539
  %v541 = vpop.f32.mrf.mxu0
  %v542 = vadd.f32 %v103, %v541
  %v543 = vpop.f32.mrf.mxu0
  %v544 = vadd.f32 %v107, %v543
  %545 = vdwg.mxu0
  %546 = vst [vmem:[#allocation2] sm:$0xff] %v355
  %547 = vst [vmem:[#allocation2 + $0x8] sm:$0xff] %v357
  %548 = vst [vmem:[#allocation2 + $0x10] sm:$0xff] %v468
  %549 = vst [vmem:[#allocation2 + $0x18] sm:$0xff] %v470
  %550 = vst [vmem:[#allocation2 + $0x20] sm:$0xff] %v359
  %551 = vst [vmem:[#allocation2 + $0x28] sm:$0xff] %v361
  %552 = vst [vmem:[#allocation2 + $0x30] sm:$0xff] %v472
  %553 = vst [vmem:[#allocation2 + $0x38] sm:$0xff] %v474
  %554 = vst [vmem:[#allocation2 + $0x40] sm:$0xff] %v365
  %555 = vst [vmem:[#allocation2 + $0x48] sm:$0xff] %v367
  %556 = vst [vmem:[#allocation2 + $0x50] sm:$0xff] %v478
  %557 = vst [vmem:[#allocation2 + $0x58] sm:$0xff] %v480
  %558 = vst [vmem:[#allocation2 + $0x60] sm:$0xff] %v369
  %559 = vst [vmem:[#allocation2 + $0x68] sm:$0xff] %v371
  %560 = vst [vmem:[#allocation2 + $0x70] sm:$0xff] %v482
  %561 = vst [vmem:[#allocation2 + $0x78] sm:$0xff] %v484
  %562 = vst [vmem:[#allocation2 + $0x80] sm:$0xff] %v375
  %563 = vst [vmem:[#allocation2 + $0x88] sm:$0xff] %v377
  %564 = vst [vmem:[#allocation2 + $0x90] sm:$0xff] %v488
  %565 = vst [vmem:[#allocation2 + $0x98] sm:$0xff] %v490
  %566 = vst [vmem:[#allocation2 + $0xa0] sm:$0xff] %v379
  %567 = vst [vmem:[#allocation2 + $0xa8] sm:$0xff] %v381
  %568 = vst [vmem:[#allocation2 + $0xb0] sm:$0xff] %v492
  %569 = vst [vmem:[#allocation2 + $0xb8] sm:$0xff] %v494
  %570 = vst [vmem:[#allocation2 + $0xc0] sm:$0xff] %v385
  %571 = vst [vmem:[#allocation2 + $0xc8] sm:$0xff] %v387
  %572 = vst [vmem:[#allocation2 + $0xd0] sm:$0xff] %v498
  %573 = vst [vmem:[#allocation2 + $0xd8] sm:$0xff] %v500
  %574 = vst [vmem:[#allocation2 + $0xe0] sm:$0xff] %v389
  %575 = vst [vmem:[#allocation2 + $0xe8] sm:$0xff] %v391
  %576 = vst [vmem:[#allocation2 + $0xf0] sm:$0xff] %v502
  %577 = vst [vmem:[#allocation2 + $0xf8] sm:$0xff] %v504
  %578 = vst [vmem:[#allocation2 + $0x100] sm:$0xff] %v395
  %579 = vst [vmem:[#allocation2 + $0x108] sm:$0xff] %v397
  %580 = vst [vmem:[#allocation2 + $0x110] sm:$0xff] %v508
  %581 = vst [vmem:[#allocation2 + $0x118] sm:$0xff] %v510
  %582 = vst [vmem:[#allocation2 + $0x120] sm:$0xff] %v399
  %583 = vst [vmem:[#allocation2 + $0x128] sm:$0xff] %v401
  %584 = vst [vmem:[#allocation2 + $0x130] sm:$0xff] %v512
  %585 = vst [vmem:[#allocation2 + $0x138] sm:$0xff] %v514
  %586 = vst [vmem:[#allocation2 + $0x140] sm:$0xff] %v405
  %587 = vst [vmem:[#allocation2 + $0x148] sm:$0xff] %v407
  %588 = vst [vmem:[#allocation2 + $0x150] sm:$0xff] %v518
  %589 = vst [vmem:[#allocation2 + $0x158] sm:$0xff] %v520
  %590 = vst [vmem:[#allocation2 + $0x160] sm:$0xff] %v409
  %591 = vst [vmem:[#allocation2 + $0x168] sm:$0xff] %v411
  %592 = vst [vmem:[#allocation2 + $0x170] sm:$0xff] %v522
  %593 = vst [vmem:[#allocation2 + $0x178] sm:$0xff] %v524
  %594 = vst [vmem:[#allocation2 + $0x180] sm:$0xff] %v415
  %595 = vst [vmem:[#allocation2 + $0x188] sm:$0xff] %v417
  %596 = vst [vmem:[#allocation2 + $0x190] sm:$0xff] %v528
  %597 = vst [vmem:[#allocation2 + $0x198] sm:$0xff] %v530
  %598 = vst [vmem:[#allocation2 + $0x1a0] sm:$0xff] %v419
  %599 = vst [vmem:[#allocation2 + $0x1a8] sm:$0xff] %v421
  %600 = vst [vmem:[#allocation2 + $0x1b0] sm:$0xff] %v532
  %601 = vst [vmem:[#allocation2 + $0x1b8] sm:$0xff] %v534
  %602 = vst [vmem:[#allocation2 + $0x1c0] sm:$0xff] %v425
  %603 = vst [vmem:[#allocation2 + $0x1c8] sm:$0xff] %v427
  %604 = vst [vmem:[#allocation2 + $0x1d0] sm:$0xff] %v538
  %605 = vst [vmem:[#allocation2 + $0x1d8] sm:$0xff] %v540
  %606 = vst [vmem:[#allocation2 + $0x1e0] sm:$0xff] %v429
  %607 = vst [vmem:[#allocation2 + $0x1e8] sm:$0xff] %v431
  %608 = vst [vmem:[#allocation2 + $0x1f0] sm:$0xff] %v542
  %609 = vst [vmem:[#allocation2 + $0x1f8] sm:$0xff] %v544
  %v610 = vld [vmem:[%s2] sm:$0xff]
  %v611 = vld [vmem:[%s2 + $0x8] sm:$0xff]
  %v612 = vld [vmem:[%s2 + $0x10] sm:$0xff]
  %v613 = vld [vmem:[%s2 + $0x18] sm:$0xff]
  %v614 = vld [vmem:[%s2 + $0x20] sm:$0xff]
  %v615 = vld [vmem:[%s2 + $0x28] sm:$0xff]
  %v616 = vld [vmem:[%s2 + $0x30] sm:$0xff]
  %v617 = vld [vmem:[%s2 + $0x38] sm:$0xff]
  %v618 = vld [vmem:[%s2 + $0x40] sm:$0xff]
  %v619 = vld [vmem:[%s2 + $0x48] sm:$0xff]
  %v620 = vld [vmem:[%s2 + $0x50] sm:$0xff]
  %v621 = vld [vmem:[%s2 + $0x58] sm:$0xff]
  %v622 = vld [vmem:[%s2 + $0x60] sm:$0xff]
  %v623 = vld [vmem:[%s2 + $0x68] sm:$0xff]
  %v624 = vld [vmem:[%s2 + $0x70] sm:$0xff]
  %v625 = vld [vmem:[%s2 + $0x78] sm:$0xff]
  %v626 = vld [vmem:[%s2 + $0x80] sm:$0xff]
  %v627 = vld [vmem:[%s2 + $0x88] sm:$0xff]
  %v628 = vld [vmem:[%s2 + $0x90] sm:$0xff]
  %v629 = vld [vmem:[%s2 + $0x98] sm:$0xff]
  %v630 = vld [vmem:[%s2 + $0xa0] sm:$0xff]
  %v631 = vld [vmem:[%s2 + $0xa8] sm:$0xff]
  %v632 = vld [vmem:[%s2 + $0xb0] sm:$0xff]
  %v633 = vld [vmem:[%s2 + $0xb8] sm:$0xff]
  %v634 = vld [vmem:[%s2 + $0xc0] sm:$0xff]
  %v635 = vld [vmem:[%s2 + $0xc8] sm:$0xff]
  %v636 = vld [vmem:[%s2 + $0xd0] sm:$0xff]
  %v637 = vld [vmem:[%s2 + $0xd8] sm:$0xff]
  %v638 = vld [vmem:[%s2 + $0xe0] sm:$0xff]
  %v639 = vld [vmem:[%s2 + $0xe8] sm:$0xff]
  %v640 = vld [vmem:[%s2 + $0xf0] sm:$0xff]
  %v641 = vld [vmem:[%s2 + $0xf8] sm:$0xff]
  %v642 = vld [vmem:[%s4] sm:$0xff]
  %v643 = vld [vmem:[%s4 + $0x8] sm:$0xff]
  %s644 = smul.u32 0, 8
  %v645 = vld [vmem:[%s8] sm:$0xff]
  %v646 = vld [vmem:[%s8 + $0x8] sm:$0xff]
  %v647 = vld [vmem:[%s9] sm:$0xff]
  %v648 = vld [vmem:[%s9 + $0x8] sm:$0xff]
  %s649 = smul.u32 0, 4
  %s650 = smul.addr %s649, 8
  %s651 = scalar_lea.vmem [#allocation2], %s650
  %v652 = vld [vmem:[%s651] sm:$0xff]
  %v653 = vld [vmem:[%s651 + $0x8] sm:$0xff]
  %v654 = vld [vmem:[%s651 + $0x10] sm:$0xff]
  %v655 = vld [vmem:[%s651 + $0x18] sm:$0xff]
  %v656 = vld [vmem:[%s651 + $0x20] sm:$0xff]
  %v657 = vld [vmem:[%s651 + $0x28] sm:$0xff]
  %v658 = vld [vmem:[%s651 + $0x30] sm:$0xff]
  %v659 = vld [vmem:[%s651 + $0x38] sm:$0xff]
  %v660 = vpack.c.bf16 %v646, %v645
  %v693 = vunpack.c.l.b16 %v610
  %v694 = vunpack.c.h.b16 %v610
  %v695 = vunpack.c.l.b16 %v611
  %v696 = vunpack.c.h.b16 %v611
  %v697 = vunpack.c.l.b16 %v612
  %v698 = vunpack.c.h.b16 %v612
  %v699 = vunpack.c.l.b16 %v613
  %v700 = vunpack.c.h.b16 %v613
  %v701 = vunpack.c.l.b16 %v614
  %v702 = vunpack.c.h.b16 %v614
  %v703 = vunpack.c.l.b16 %v615
  %v704 = vunpack.c.h.b16 %v615
  %v705 = vunpack.c.l.b16 %v616
  %v706 = vunpack.c.h.b16 %v616
  %v707 = vunpack.c.l.b16 %v617
  %v708 = vunpack.c.h.b16 %v617
  %v709 = vunpack.c.l.b16 %v618
  %v710 = vunpack.c.h.b16 %v618
  %v711 = vunpack.c.l.b16 %v619
  %v712 = vunpack.c.h.b16 %v619
  %v713 = vunpack.c.l.b16 %v620
  %v714 = vunpack.c.h.b16 %v620
  %v715 = vunpack.c.l.b16 %v621
  %v716 = vunpack.c.h.b16 %v621
  %v717 = vunpack.c.l.b16 %v622
  %v718 = vunpack.c.h.b16 %v622
  %v719 = vunpack.c.l.b16 %v623
  %v720 = vunpack.c.h.b16 %v623
  %v721 = vunpack.c.l.b16 %v624
  %v722 = vunpack.c.h.b16 %v624
  %v723 = vunpack.c.l.b16 %v625
  %v724 = vunpack.c.h.b16 %v625
  %v725 = vunpack.c.l.b16 %v626
  %v726 = vunpack.c.h.b16 %v626
  %v727 = vunpack.c.l.b16 %v627
  %v728 = vunpack.c.h.b16 %v627
  %v729 = vunpack.c.l.b16 %v628
  %v730 = vunpack.c.h.b16 %v628
  %v731 = vunpack.c.l.b16 %v629
  %v732 = vunpack.c.h.b16 %v629
  %v733 = vunpack.c.l.b16 %v630
  %v734 = vunpack.c.h.b16 %v630
  %v735 = vunpack.c.l.b16 %v631
  %v736 = vunpack.c.h.b16 %v631
  %v737 = vunpack.c.l.b16 %v632
  %v738 = vunpack.c.h.b16 %v632
  %v739 = vunpack.c.l.b16 %v633
  %v740 = vunpack.c.h.b16 %v633
  %v741 = vunpack.c.l.b16 %v634
  %v742 = vunpack.c.h.b16 %v634
  %v743 = vunpack.c.l.b16 %v635
  %v744 = vunpack.c.h.b16 %v635
  %v745 = vunpack.c.l.b16 %v636
  %v746 = vunpack.c.h.b16 %v636
  %v747 = vunpack.c.l.b16 %v637
  %v748 = vunpack.c.h.b16 %v637
  %v749 = vunpack.c.l.b16 %v638
  %v750 = vunpack.c.h.b16 %v638
  %v751 = vunpack.c.l.b16 %v639
  %v752 = vunpack.c.h.b16 %v639
  %v753 = vunpack.c.l.b16 %v640
  %v754 = vunpack.c.h.b16 %v640
  %v755 = vunpack.c.l.b16 %v641
  %v756 = vunpack.c.h.b16 %v641
  %v757 = vpack.c.b16 %v697, %v693
  %v758 = vpack.c.b16 %v698, %v694
  %v759 = vpack.c.b16 %v699, %v695
  %v760 = vpack.c.b16 %v700, %v696
  %v761 = vpack.c.b16 %v705, %v701
  %v762 = vpack.c.b16 %v706, %v702
  %v763 = vpack.c.b16 %v707, %v703
  %v764 = vpack.c.b16 %v708, %v704
  %v765 = vpack.c.b16 %v713, %v709
  %v766 = vpack.c.b16 %v714, %v710
  %v767 = vpack.c.b16 %v715, %v711
  %v768 = vpack.c.b16 %v716, %v712
  %v769 = vpack.c.b16 %v721, %v717
  %v770 = vpack.c.b16 %v722, %v718
  %v771 = vpack.c.b16 %v723, %v719
  %v772 = vpack.c.b16 %v724, %v720
  %v773 = vpack.c.b16 %v729, %v725
  %v774 = vpack.c.b16 %v730, %v726
  %v775 = vpack.c.b16 %v731, %v727
  %v776 = vpack.c.b16 %v732, %v728
  %v777 = vpack.c.b16 %v737, %v733
  %v778 = vpack.c.b16 %v738, %v734
  %v779 = vpack.c.b16 %v739, %v735
  %v780 = vpack.c.b16 %v740, %v736
  %v781 = vpack.c.b16 %v745, %v741
  %v782 = vpack.c.b16 %v746, %v742
  %v783 = vpack.c.b16 %v747, %v743
  %v784 = vpack.c.b16 %v748, %v744
  %v785 = vpack.c.b16 %v753, %v749
  %v786 = vpack.c.b16 %v754, %v750
  %v787 = vpack.c.b16 %v755, %v751
  %v788 = vpack.c.b16 %v756, %v752
  %821 = vmatprep.subr.bf16.mxu0 %v786
  %822 = vmatpush1.bf16.msra.mxu0 %v785
  %823 = vmatprep.subr.bf16.mxu0 %v782
  %824 = vmatpush1.bf16.msra.mxu0 %v781
  %825 = vmatprep.subr.bf16.mxu0 %v778
  %826 = vmatpush1.bf16.msra.mxu0 %v777
  %827 = vmatprep.subr.bf16.mxu0 %v774
  %828 = vmatpush1.bf16.msra.mxu0 %v773
  %829 = vmatprep.subr.bf16.mxu0 %v770
  %830 = vmatpush1.bf16.msra.mxu0 %v769
  %831 = vmatprep.subr.bf16.mxu0 %v766
  %832 = vmatpush1.bf16.msra.mxu0 %v765
  %833 = vmatprep.subr.bf16.mxu0 %v762
  %834 = vmatpush1.bf16.msra.mxu0 %v761
  %835 = vmatprep.subr.bf16.mxu0 %v758
  %836 = vmatpush1.bf16.msra.mxu0 %v757
  %837 = vmatprep.subr.bf16.mxu0 0
  %838 = vmatpush2.bf16.msra.mxu0 0
  %839 = vmatprep.subr.bf16.mxu0 0
  %840 = vmatpush2.bf16.msra.mxu0 0
  %841 = vmatprep.subr.bf16.mxu0 0
  %842 = vmatpush2.bf16.msra.mxu0 0
  %843 = vmatprep.subr.bf16.mxu0 0
  %844 = vmatpush2.bf16.msra.mxu0 0
  %845 = vmatprep.subr.bf16.mxu0 0
  %846 = vmatpush2.bf16.msra.mxu0 0
  %847 = vmatprep.subr.bf16.mxu0 0
  %848 = vmatpush2.bf16.msra.mxu0 0
  %849 = vmatprep.subr.bf16.mxu0 0
  %850 = vmatpush2.bf16.msra.mxu0 0
  %851 = vmatprep.subr.bf16.mxu0 0
  %852 = vmatpush2.bf16.msra.mxu0 0
  %853 = vmatprep.mubr.bf16.mxu0 0
  %854 = vmatmul.mubr.bf16.gmra.mxu0 %v660
  %v855 = vpop.f32.mrf.mxu0
  %v856 = vadd.f32 0.0, %v855
  %v857 = vpop.f32.mrf.mxu0
  %v858 = vadd.f32 0.0, %v857
  %v859 = vpop.f32.mrf.mxu0
  %v860 = vadd.f32 0.0, %v859
  %v861 = vpop.f32.mrf.mxu0
  %v862 = vadd.f32 0.0, %v861
  %863 = vdwg.mxu0
  %864 = vmatprep.subr.bf16.mxu0 %v788
  %865 = vmatpush1.bf16.msra.mxu0 %v787
  %866 = vmatprep.subr.bf16.mxu0 %v784
  %867 = vmatpush1.bf16.msra.mxu0 %v783
  %868 = vmatprep.subr.bf16.mxu0 %v780
  %869 = vmatpush1.bf16.msra.mxu0 %v779
  %870 = vmatprep.subr.bf16.mxu0 %v776
  %871 = vmatpush1.bf16.msra.mxu0 %v775
  %872 = vmatprep.subr.bf16.mxu0 %v772
  %873 = vmatpush1.bf16.msra.mxu0 %v771
  %874 = vmatprep.subr.bf16.mxu0 %v768
  %875 = vmatpush1.bf16.msra.mxu0 %v767
  %876 = vmatprep.subr.bf16.mxu0 %v764
  %877 = vmatpush1.bf16.msra.mxu0 %v763
  %878 = vmatprep.subr.bf16.mxu0 %v760
  %879 = vmatpush1.bf16.msra.mxu0 %v759
  %880 = vmatprep.subr.bf16.mxu0 0
  %881 = vmatpush2.bf16.msra.mxu0 0
  %882 = vmatprep.subr.bf16.mxu0 0
  %883 = vmatpush2.bf16.msra.mxu0 0
  %884 = vmatprep.subr.bf16.mxu0 0
  %885 = vmatpush2.bf16.msra.mxu0 0
  %886 = vmatprep.subr.bf16.mxu0 0
  %887 = vmatpush2.bf16.msra.mxu0 0
  %888 = vmatprep.subr.bf16.mxu0 0
  %889 = vmatpush2.bf16.msra.mxu0 0
  %890 = vmatprep.subr.bf16.mxu0 0
  %891 = vmatpush2.bf16.msra.mxu0 0
  %892 = vmatprep.subr.bf16.mxu0 0
  %893 = vmatpush2.bf16.msra.mxu0 0
  %894 = vmatprep.subr.bf16.mxu0 0
  %895 = vmatpush2.bf16.msra.mxu0 0
  %896 = vmatprep.mubr.bf16.mxu0 0
  %897 = vmatmul.mubr.bf16.gmra.mxu0 %v660
  %v898 = vpop.f32.mrf.mxu0
  %v899 = vadd.f32 0.0, %v898
  %v900 = vpop.f32.mrf.mxu0
  %v901 = vadd.f32 0.0, %v900
  %v902 = vpop.f32.mrf.mxu0
  %v903 = vadd.f32 0.0, %v902
  %v904 = vpop.f32.mrf.mxu0
  %v905 = vadd.f32 0.0, %v904
  %906 = vdwg.mxu0
  %v907 = vadd.f32 %v652, %v856
  %v908 = vadd.f32 %v653, %v858
  %v909 = vadd.f32 %v654, %v899
  %v910 = vadd.f32 %v655, %v901
  %v911 = vadd.f32 %v656, %v860
  %v912 = vadd.f32 %v657, %v862
  %v913 = vadd.f32 %v658, %v903
  %v914 = vadd.f32 %v659, %v905
  %v915 = vxor.u32 %v907, 2147483648
  %v916 = vxor.u32 %v911, 2147483648
  %v917 = vmul.f32 %v915, 1.442695
  %v918 = vpow.pop %v917
  %v919 = vmul.f32 %v916, 1.442695
  %v920 = vpow.pop %v919
  %v921 = vadd.f32 %v918, 1.0
  %v922 = vadd.f32 %v920, 1.0
  %v923 = vrcp.pop %v921
  %v924 = vmul.f32 1.0, %v923
  %v925 = vrcp.pop %v922
  %v926 = vmul.f32 1.0, %v925
  %v927 = vxor.u32 %v908, 2147483648
  %v928 = vxor.u32 %v912, 2147483648
  %v929 = vmul.f32 %v927, 1.442695
  %v930 = vpow.pop %v929
  %v931 = vmul.f32 %v928, 1.442695
  %v932 = vpow.pop %v931
  %v933 = vadd.f32 %v930, 1.0
  %v934 = vadd.f32 %v932, 1.0
  %v935 = vrcp.pop %v933
  %v936 = vmul.f32 1.0, %v935
  %v937 = vrcp.pop %v934
  %v938 = vmul.f32 1.0, %v937
  %v939 = vtanh.pop %v909
  %v940 = vtanh.pop %v913
  %v941 = vxor.u32 %v910, 2147483648
  %v942 = vxor.u32 %v914, 2147483648
  %v943 = vmul.f32 %v941, 1.442695
  %v944 = vpow.pop %v943
  %v945 = vmul.f32 %v942, 1.442695
  %v946 = vpow.pop %v945
  %v947 = vadd.f32 %v944, 1.0
  %v948 = vadd.f32 %v946, 1.0
  %v949 = vrcp.pop %v947
  %v950 = vmul.f32 1.0, %v949
  %v951 = vrcp.pop %v948
  %v952 = vmul.f32 1.0, %v951
  %v953 = vmul.f32 %v936, %v647
  %v954 = vmul.f32 %v938, %v648
  %v955 = vmul.f32 %v924, %v939
  %v956 = vmul.f32 %v926, %v940
  %v957 = vadd.f32 %v953, %v955
  %v958 = vadd.f32 %v954, %v956
  %v959 = vtanh.pop %v957
  %v960 = vtanh.pop %v958
  %v961 = vmul.f32 %v950, %v959
  %v962 = vmul.f32 %v952, %v960
  %v963 = vstv %s644
  %vm964 = vcmp.lt.s32.totalorder %v963, %v642
  %vm965 = vcmp.lt.s32.totalorder %v963, %v643
  %v966 = vsel %vm964, 1, 0
  %v967 = vsel %vm965, 1, 0
  %968 = vset.pattern.permute.xlu0 0
  %969 = vperm.xlu0 %968, %v966
  %v970 = vpop.permute.xlu0 %969
  %971 = vset.pattern.permute.xlu0 0
  %972 = vperm.xlu0 %971, %v967
  %v973 = vpop.permute.xlu0 %972
  %vm974 = vcmp.eq.s32.totalorder %v970, 1
  %vm975 = vcmp.eq.s32.totalorder %v973, 1
  %v976 = vsel %vm974, %v961, 0.0
  %v977 = vsel %vm975, %v962, 0.0
  %v978 = vpack.c.bf16 %v977, %v976
  %v980 = vunpack.c.l.b16 %v978
  %v981 = vunpack.c.h.b16 %v978
  %v982 = vpack.c.b16 %v980, %v980
  %v983 = vpack.c.b16 %v981, %v981
  %986 = vst [vmem:[%s7] sm:$0xf] %v982
  %987 = vst [vmem:[%s7 + $0x4] sm:$0xf] %v983
  %v988 = vsel %vm974, %v961, %v645
  %v989 = vsel %vm975, %v962, %v646
  %v990 = vsel %vm974, %v957, %v647
  %v991 = vsel %vm975, %v958, %v648
  %s992 = smul.u32 2, 4
  %s993 = smul.addr %s992, 8
  %s994 = scalar_lea.vmem [#allocation2], %s993
  %v995 = vld [vmem:[%s994] sm:$0xff]
  %v996 = vld [vmem:[%s994 + $0x8] sm:$0xff]
  %v997 = vld [vmem:[%s994 + $0x10] sm:$0xff]
  %v998 = vld [vmem:[%s994 + $0x18] sm:$0xff]
  %v999 = vld [vmem:[%s994 + $0x20] sm:$0xff]
  %v1000 = vld [vmem:[%s994 + $0x28] sm:$0xff]
  %v1001 = vld [vmem:[%s994 + $0x30] sm:$0xff]
  %v1002 = vld [vmem:[%s994 + $0x38] sm:$0xff]
  %v1003 = vpack.c.bf16 %v989, %v988
  %1004 = vmatprep.subr.bf16.mxu0 %v786
  %1005 = vmatpush1.bf16.msra.mxu0 %v785
  %1006 = vmatprep.subr.bf16.mxu0 %v782
  %1007 = vmatpush1.bf16.msra.mxu0 %v781
  %1008 = vmatprep.subr.bf16.mxu0 %v778
  %1009 = vmatpush1.bf16.msra.mxu0 %v777
  %1010 = vmatprep.subr.bf16.mxu0 %v774
  %1011 = vmatpush1.bf16.msra.mxu0 %v773
  %1012 = vmatprep.subr.bf16.mxu0 %v770
  %1013 = vmatpush1.bf16.msra.mxu0 %v769
  %1014 = vmatprep.subr.bf16.mxu0 %v766
  %1015 = vmatpush1.bf16.msra.mxu0 %v765
  %1016 = vmatprep.subr.bf16.mxu0 %v762
  %1017 = vmatpush1.bf16.msra.mxu0 %v761
  %1018 = vmatprep.subr.bf16.mxu0 %v758
  %1019 = vmatpush1.bf16.msra.mxu0 %v757
  %1020 = vmatprep.subr.bf16.mxu0 0
  %1021 = vmatpush2.bf16.msra.mxu0 0
  %1022 = vmatprep.subr.bf16.mxu0 0
  %1023 = vmatpush2.bf16.msra.mxu0 0
  %1024 = vmatprep.subr.bf16.mxu0 0
  %1025 = vmatpush2.bf16.msra.mxu0 0
  %1026 = vmatprep.subr.bf16.mxu0 0
  %1027 = vmatpush2.bf16.msra.mxu0 0
  %1028 = vmatprep.subr.bf16.mxu0 0
  %1029 = vmatpush2.bf16.msra.mxu0 0
  %1030 = vmatprep.subr.bf16.mxu0 0
  %1031 = vmatpush2.bf16.msra.mxu0 0
  %1032 = vmatprep.subr.bf16.mxu0 0
  %1033 = vmatpush2.bf16.msra.mxu0 0
  %1034 = vmatprep.subr.bf16.mxu0 0
  %1035 = vmatpush2.bf16.msra.mxu0 0
  %1036 = vmatprep.mubr.bf16.mxu0 0
  %1037 = vmatmul.mubr.bf16.gmra.mxu0 %v1003
  %v1038 = vpop.f32.mrf.mxu0
  %v1039 = vadd.f32 0.0, %v1038
  %v1040 = vpop.f32.mrf.mxu0
  %v1041 = vadd.f32 0.0, %v1040
  %v1042 = vpop.f32.mrf.mxu0
  %v1043 = vadd.f32 0.0, %v1042
  %v1044 = vpop.f32.mrf.mxu0
  %v1045 = vadd.f32 0.0, %v1044
  %1046 = vdwg.mxu0
  %1047 = vmatprep.subr.bf16.mxu0 %v788
  %1048 = vmatpush1.bf16.msra.mxu0 %v787
  %1049 = vmatprep.subr.bf16.mxu0 %v784
  %1050 = vmatpush1.bf16.msra.mxu0 %v783
  %1051 = vmatprep.subr.bf16.mxu0 %v780
  %1052 = vmatpush1.bf16.msra.mxu0 %v779
  %1053 = vmatprep.subr.bf16.mxu0 %v776
  %1054 = vmatpush1.bf16.msra.mxu0 %v775
  %1055 = vmatprep.subr.bf16.mxu0 %v772
  %1056 = vmatpush1.bf16.msra.mxu0 %v771
  %1057 = vmatprep.subr.bf16.mxu0 %v768
  %1058 = vmatpush1.bf16.msra.mxu0 %v767
  %1059 = vmatprep.subr.bf16.mxu0 %v764
  %1060 = vmatpush1.bf16.msra.mxu0 %v763
  %1061 = vmatprep.subr.bf16.mxu0 %v760
  %1062 = vmatpush1.bf16.msra.mxu0 %v759
  %1063 = vmatprep.subr.bf16.mxu0 0
  %1064 = vmatpush2.bf16.msra.mxu0 0
  %1065 = vmatprep.subr.bf16.mxu0 0
  %1066 = vmatpush2.bf16.msra.mxu0 0
  %1067 = vmatprep.subr.bf16.mxu0 0
  %1068 = vmatpush2.bf16.msra.mxu0 0
  %1069 = vmatprep.subr.bf16.mxu0 0
  %1070 = vmatpush2.bf16.msra.mxu0 0
  %1071 = vmatprep.subr.bf16.mxu0 0
  %1072 = vmatpush2.bf16.msra.mxu0 0
  %1073 = vmatprep.subr.bf16.mxu0 0
  %1074 = vmatpush2.bf16.msra.mxu0 0
  %1075 = vmatprep.subr.bf16.mxu0 0
  %1076 = vmatpush2.bf16.msra.mxu0 0
  %1077 = vmatprep.subr.bf16.mxu0 0
  %1078 = vmatpush2.bf16.msra.mxu0 0
  %1079 = vmatprep.mubr.bf16.mxu0 0
  %1080 = vmatmul.mubr.bf16.gmra.mxu0 %v1003
  %v1081 = vpop.f32.mrf.mxu0
  %v1082 = vadd.f32 0.0, %v1081
  %v1083 = vpop.f32.mrf.mxu0
  %v1084 = vadd.f32 0.0, %v1083
  %v1085 = vpop.f32.mrf.mxu0
  %v1086 = vadd.f32 0.0, %v1085
  %v1087 = vpop.f32.mrf.mxu0
  %v1088 = vadd.f32 0.0, %v1087
  %1089 = vdwg.mxu0
  %v1090 = vadd.f32 %v995, %v1039
  %v1091 = vadd.f32 %v996, %v1041
  %v1092 = vadd.f32 %v997, %v1082
  %v1093 = vadd.f32 %v998, %v1084
  %v1094 = vadd.f32 %v999, %v1043
  %v1095 = vadd.f32 %v1000, %v1045
  %v1096 = vadd.f32 %v1001, %v1086
  %v1097 = vadd.f32 %v1002, %v1088
  %v1098 = vxor.u32 %v1090, 2147483648
  %v1099 = vxor.u32 %v1094, 2147483648
  %v1100 = vmul.f32 %v1098, 1.442695
  %v1101 = vpow.pop %v1100
  %v1102 = vmul.f32 %v1099, 1.442695
  %v1103 = vpow.pop %v1102
  %v1104 = vadd.f32 %v1101, 1.0
  %v1105 = vadd.f32 %v1103, 1.0
  %v1106 = vrcp.pop %v1104
  %v1107 = vmul.f32 1.0, %v1106
  %v1108 = vrcp.pop %v1105
  %v1109 = vmul.f32 1.0, %v1108
  %v1110 = vxor.u32 %v1091, 2147483648
  %v1111 = vxor.u32 %v1095, 2147483648
  %v1112 = vmul.f32 %v1110, 1.442695
  %v1113 = vpow.pop %v1112
  %v1114 = vmul.f32 %v1111, 1.442695
  %v1115 = vpow.pop %v1114
  %v1116 = vadd.f32 %v1113, 1.0
  %v1117 = vadd.f32 %v1115, 1.0
  %v1118 = vrcp.pop %v1116
  %v1119 = vmul.f32 1.0, %v1118
  %v1120 = vrcp.pop %v1117
  %v1121 = vmul.f32 1.0, %v1120
  %v1122 = vtanh.pop %v1092
  %v1123 = vtanh.pop %v1096
  %v1124 = vxor.u32 %v1093, 2147483648
  %v1125 = vxor.u32 %v1097, 2147483648
  %v1126 = vmul.f32 %v1124, 1.442695
  %v1127 = vpow.pop %v1126
  %v1128 = vmul.f32 %v1125, 1.442695
  %v1129 = vpow.pop %v1128
  %v1130 = vadd.f32 %v1127, 1.0
  %v1131 = vadd.f32 %v1129, 1.0
  %v1132 = vrcp.pop %v1130
  %v1133 = vmul.f32 1.0, %v1132
  %v1134 = vrcp.pop %v1131
  %v1135 = vmul.f32 1.0, %v1134
  %v1136 = vmul.f32 %v1119, %v990
  %v1137 = vmul.f32 %v1121, %v991
  %v1138 = vmul.f32 %v1107, %v1122
  %v1139 = vmul.f32 %v1109, %v1123
  %v1140 = vadd.f32 %v1136, %v1138
  %v1141 = vadd.f32 %v1137, %v1139
  %v1142 = vtanh.pop %v1140
  %v1143 = vtanh.pop %v1141
  %v1144 = vmul.f32 %v1133, %v1142
  %v1145 = vmul.f32 %v1135, %v1143
  %s1146 = sadd.s32 %s644, 1
  %v1147 = vstv %s1146
  %vm1148 = vcmp.lt.s32.totalorder %v1147, %v642
  %vm1149 = vcmp.lt.s32.totalorder %v1147, %v643
  %v1150 = vsel %vm1148, 1, 0
  %v1151 = vsel %vm1149, 1, 0
  %1152 = vset.pattern.permute.xlu0 0
  %1153 = vperm.xlu0 %1152, %v1150
  %v1154 = vpop.permute.xlu0 %1153
  %1155 = vset.pattern.permute.xlu0 0
  %1156 = vperm.xlu0 %1155, %v1151
  %v1157 = vpop.permute.xlu0 %1156
  %vm1158 = vcmp.eq.s32.totalorder %v1154, 1
  %vm1159 = vcmp.eq.s32.totalorder %v1157, 1
  %v1160 = vsel %vm1158, %v1144, 0.0
  %v1161 = vsel %vm1159, %v1145, 0.0
  %v1162 = vpack.c.bf16 %v1161, %v1160
  %v1164 = vunpack.c.l.b16 %v1162
  %v1165 = vunpack.c.h.b16 %v1162
  %v1166 = vpack.c.b16 %v1164, %v1164
  %v1167 = vpack.c.b16 %v1165, %v1165
  %s1170 = scalar_lea.vmem %s7, 8
  %1171 = vst [vmem:[%s1170] sm:$0xf] %v1166
  %1172 = vst [vmem:[%s1170 + $0x4] sm:$0xf] %v1167
  %v1173 = vsel %vm1158, %v1144, %v988
  %v1174 = vsel %vm1159, %v1145, %v989
  %v1175 = vsel %vm1158, %v1140, %v990
  %v1176 = vsel %vm1159, %v1141, %v991
  %s1177 = smul.u32 4, 4
  %s1178 = smul.addr %s1177, 8
  %s1179 = scalar_lea.vmem [#allocation2], %s1178
  %v1180 = vld [vmem:[%s1179] sm:$0xff]
  %v1181 = vld [vmem:[%s1179 + $0x8] sm:$0xff]
  %v1182 = vld [vmem:[%s1179 + $0x10] sm:$0xff]
  %v1183 = vld [vmem:[%s1179 + $0x18] sm:$0xff]
  %v1184 = vld [vmem:[%s1179 + $0x20] sm:$0xff]
  %v1185 = vld [vmem:[%s1179 + $0x28] sm:$0xff]
  %v1186 = vld [vmem:[%s1179 + $0x30] sm:$0xff]
  %v1187 = vld [vmem:[%s1179 + $0x38] sm:$0xff]
  %v1188 = vpack.c.bf16 %v1174, %v1173
  %1189 = vmatprep.subr.bf16.mxu0 %v786
  %1190 = vmatpush1.bf16.msra.mxu0 %v785
  %1191 = vmatprep.subr.bf16.mxu0 %v782
  %1192 = vmatpush1.bf16.msra.mxu0 %v781
  %1193 = vmatprep.subr.bf16.mxu0 %v778
  %1194 = vmatpush1.bf16.msra.mxu0 %v777
  %1195 = vmatprep.subr.bf16.mxu0 %v774
  %1196 = vmatpush1.bf16.msra.mxu0 %v773
  %1197 = vmatprep.subr.bf16.mxu0 %v770
  %1198 = vmatpush1.bf16.msra.mxu0 %v769
  %1199 = vmatprep.subr.bf16.mxu0 %v766
  %1200 = vmatpush1.bf16.msra.mxu0 %v765
  %1201 = vmatprep.subr.bf16.mxu0 %v762
  %1202 = vmatpush1.bf16.msra.mxu0 %v761
  %1203 = vmatprep.subr.bf16.mxu0 %v758
  %1204 = vmatpush1.bf16.msra.mxu0 %v757
  %1205 = vmatprep.subr.bf16.mxu0 0
  %1206 = vmatpush2.bf16.msra.mxu0 0
  %1207 = vmatprep.subr.bf16.mxu0 0
  %1208 = vmatpush2.bf16.msra.mxu0 0
  %1209 = vmatprep.subr.bf16.mxu0 0
  %1210 = vmatpush2.bf16.msra.mxu0 0
  %1211 = vmatprep.subr.bf16.mxu0 0
  %1212 = vmatpush2.bf16.msra.mxu0 0
  %1213 = vmatprep.subr.bf16.mxu0 0
  %1214 = vmatpush2.bf16.msra.mxu0 0
  %1215 = vmatprep.subr.bf16.mxu0 0
  %1216 = vmatpush2.bf16.msra.mxu0 0
  %1217 = vmatprep.subr.bf16.mxu0 0
  %1218 = vmatpush2.bf16.msra.mxu0 0
  %1219 = vmatprep.subr.bf16.mxu0 0
  %1220 = vmatpush2.bf16.msra.mxu0 0
  %1221 = vmatprep.mubr.bf16.mxu0 0
  %1222 = vmatmul.mubr.bf16.gmra.mxu0 %v1188
  %v1223 = vpop.f32.mrf.mxu0
  %v1224 = vadd.f32 0.0, %v1223
  %v1225 = vpop.f32.mrf.mxu0
  %v1226 = vadd.f32 0.0, %v1225
  %v1227 = vpop.f32.mrf.mxu0
  %v1228 = vadd.f32 0.0, %v1227
  %v1229 = vpop.f32.mrf.mxu0
  %v1230 = vadd.f32 0.0, %v1229
  %1231 = vdwg.mxu0
  %1232 = vmatprep.subr.bf16.mxu0 %v788
  %1233 = vmatpush1.bf16.msra.mxu0 %v787
  %1234 = vmatprep.subr.bf16.mxu0 %v784
  %1235 = vmatpush1.bf16.msra.mxu0 %v783
  %1236 = vmatprep.subr.bf16.mxu0 %v780
  %1237 = vmatpush1.bf16.msra.mxu0 %v779
  %1238 = vmatprep.subr.bf16.mxu0 %v776
  %1239 = vmatpush1.bf16.msra.mxu0 %v775
  %1240 = vmatprep.subr.bf16.mxu0 %v772
  %1241 = vmatpush1.bf16.msra.mxu0 %v771
  %1242 = vmatprep.subr.bf16.mxu0 %v768
  %1243 = vmatpush1.bf16.msra.mxu0 %v767
  %1244 = vmatprep.subr.bf16.mxu0 %v764
  %1245 = vmatpush1.bf16.msra.mxu0 %v763
  %1246 = vmatprep.subr.bf16.mxu0 %v760
  %1247 = vmatpush1.bf16.msra.mxu0 %v759
  %1248 = vmatprep.subr.bf16.mxu0 0
  %1249 = vmatpush2.bf16.msra.mxu0 0
  %1250 = vmatprep.subr.bf16.mxu0 0
  %1251 = vmatpush2.bf16.msra.mxu0 0
  %1252 = vmatprep.subr.bf16.mxu0 0
  %1253 = vmatpush2.bf16.msra.mxu0 0
  %1254 = vmatprep.subr.bf16.mxu0 0
  %1255 = vmatpush2.bf16.msra.mxu0 0
  %1256 = vmatprep.subr.bf16.mxu0 0
  %1257 = vmatpush2.bf16.msra.mxu0 0
  %1258 = vmatprep.subr.bf16.mxu0 0
  %1259 = vmatpush2.bf16.msra.mxu0 0
  %1260 = vmatprep.subr.bf16.mxu0 0
  %1261 = vmatpush2.bf16.msra.mxu0 0
  %1262 = vmatprep.subr.bf16.mxu0 0
  %1263 = vmatpush2.bf16.msra.mxu0 0
  %1264 = vmatprep.mubr.bf16.mxu0 0
  %1265 = vmatmul.mubr.bf16.gmra.mxu0 %v1188
  %v1266 = vpop.f32.mrf.mxu0
  %v1267 = vadd.f32 0.0, %v1266
  %v1268 = vpop.f32.mrf.mxu0
  %v1269 = vadd.f32 0.0, %v1268
  %v1270 = vpop.f32.mrf.mxu0
  %v1271 = vadd.f32 0.0, %v1270
  %v1272 = vpop.f32.mrf.mxu0
  %v1273 = vadd.f32 0.0, %v1272
  %1274 = vdwg.mxu0
  %v1275 = vadd.f32 %v1180, %v1224
  %v1276 = vadd.f32 %v1181, %v1226
  %v1277 = vadd.f32 %v1182, %v1267
  %v1278 = vadd.f32 %v1183, %v1269
  %v1279 = vadd.f32 %v1184, %v1228
  %v1280 = vadd.f32 %v1185, %v1230
  %v1281 = vadd.f32 %v1186, %v1271
  %v1282 = vadd.f32 %v1187, %v1273
  %v1283 = vxor.u32 %v1275, 2147483648
  %v1284 = vxor.u32 %v1279, 2147483648
  %v1285 = vmul.f32 %v1283, 1.442695
  %v1286 = vpow.pop %v1285
  %v1287 = vmul.f32 %v1284, 1.442695
  %v1288 = vpow.pop %v1287
  %v1289 = vadd.f32 %v1286, 1.0
  %v1290 = vadd.f32 %v1288, 1.0
  %v1291 = vrcp.pop %v1289
  %v1292 = vmul.f32 1.0, %v1291
  %v1293 = vrcp.pop %v1290
  %v1294 = vmul.f32 1.0, %v1293
  %v1295 = vxor.u32 %v1276, 2147483648
  %v1296 = vxor.u32 %v1280, 2147483648
  %v1297 = vmul.f32 %v1295, 1.442695
  %v1298 = vpow.pop %v1297
  %v1299 = vmul.f32 %v1296, 1.442695
  %v1300 = vpow.pop %v1299
  %v1301 = vadd.f32 %v1298, 1.0
  %v1302 = vadd.f32 %v1300, 1.0
  %v1303 = vrcp.pop %v1301
  %v1304 = vmul.f32 1.0, %v1303
  %v1305 = vrcp.pop %v1302
  %v1306 = vmul.f32 1.0, %v1305
  %v1307 = vtanh.pop %v1277
  %v1308 = vtanh.pop %v1281
  %v1309 = vxor.u32 %v1278, 2147483648
  %v1310 = vxor.u32 %v1282, 2147483648
  %v1311 = vmul.f32 %v1309, 1.442695
  %v1312 = vpow.pop %v1311
  %v1313 = vmul.f32 %v1310, 1.442695
  %v1314 = vpow.pop %v1313
  %v1315 = vadd.f32 %v1312, 1.0
  %v1316 = vadd.f32 %v1314, 1.0
  %v1317 = vrcp.pop %v1315
  %v1318 = vmul.f32 1.0, %v1317
  %v1319 = vrcp.pop %v1316
  %v1320 = vmul.f32 1.0, %v1319
  %v1321 = vmul.f32 %v1304, %v1175
  %v1322 = vmul.f32 %v1306, %v1176
  %v1323 = vmul.f32 %v1292, %v1307
  %v1324 = vmul.f32 %v1294, %v1308
  %v1325 = vadd.f32 %v1321, %v1323
  %v1326 = vadd.f32 %v1322, %v1324
  %v1327 = vtanh.pop %v1325
  %v1328 = vtanh.pop %v1326
  %v1329 = vmul.f32 %v1318, %v1327
  %v1330 = vmul.f32 %v1320, %v1328
  %s1331 = sadd.s32 %s644, 2
  %v1332 = vstv %s1331
  %vm1333 = vcmp.lt.s32.totalorder %v1332, %v642
  %vm1334 = vcmp.lt.s32.totalorder %v1332, %v643
  %v1335 = vsel %vm1333, 1, 0
  %v1336 = vsel %vm1334, 1, 0
  %1337 = vset.pattern.permute.xlu0 0
  %1338 = vperm.xlu0 %1337, %v1335
  %v1339 = vpop.permute.xlu0 %1338
  %1340 = vset.pattern.permute.xlu0 0
  %1341 = vperm.xlu0 %1340, %v1336
  %v1342 = vpop.permute.xlu0 %1341
  %vm1343 = vcmp.eq.s32.totalorder %v1339, 1
  %vm1344 = vcmp.eq.s32.totalorder %v1342, 1
  %v1345 = vsel %vm1343, %v1329, 0.0
  %v1346 = vsel %vm1344, %v1330, 0.0
  %v1347 = vpack.c.bf16 %v1346, %v1345
  %v1349 = vunpack.c.l.b16 %v1347
  %v1350 = vunpack.c.h.b16 %v1347
  %v1351 = vpack.c.b16 %v1349, %v1349
  %v1352 = vpack.c.b16 %v1350, %v1350
  %s1355 = scalar_lea.vmem %s7, 16
  %1356 = vst [vmem:[%s1355] sm:$0xf] %v1351
  %1357 = vst [vmem:[%s1355 + $0x4] sm:$0xf] %v1352
  %v1358 = vsel %vm1343, %v1329, %v1173
  %v1359 = vsel %vm1344, %v1330, %v1174
  %v1360 = vsel %vm1343, %v1325, %v1175
  %v1361 = vsel %vm1344, %v1326, %v1176
  %s1362 = smul.u32 6, 4
  %s1363 = smul.addr %s1362, 8
  %s1364 = scalar_lea.vmem [#allocation2], %s1363
  %v1365 = vld [vmem:[%s1364] sm:$0xff]
  %v1366 = vld [vmem:[%s1364 + $0x8] sm:$0xff]
  %v1367 = vld [vmem:[%s1364 + $0x10] sm:$0xff]
  %v1368 = vld [vmem:[%s1364 + $0x18] sm:$0xff]
  %v1369 = vld [vmem:[%s1364 + $0x20] sm:$0xff]
  %v1370 = vld [vmem:[%s1364 + $0x28] sm:$0xff]
  %v1371 = vld [vmem:[%s1364 + $0x30] sm:$0xff]
  %v1372 = vld [vmem:[%s1364 + $0x38] sm:$0xff]
  %v1373 = vpack.c.bf16 %v1359, %v1358
  %1374 = vmatprep.subr.bf16.mxu0 %v786
  %1375 = vmatpush1.bf16.msra.mxu0 %v785
  %1376 = vmatprep.subr.bf16.mxu0 %v782
  %1377 = vmatpush1.bf16.msra.mxu0 %v781
  %1378 = vmatprep.subr.bf16.mxu0 %v778
  %1379 = vmatpush1.bf16.msra.mxu0 %v777
  %1380 = vmatprep.subr.bf16.mxu0 %v774
  %1381 = vmatpush1.bf16.msra.mxu0 %v773
  %1382 = vmatprep.subr.bf16.mxu0 %v770
  %1383 = vmatpush1.bf16.msra.mxu0 %v769
  %1384 = vmatprep.subr.bf16.mxu0 %v766
  %1385 = vmatpush1.bf16.msra.mxu0 %v765
  %1386 = vmatprep.subr.bf16.mxu0 %v762
  %1387 = vmatpush1.bf16.msra.mxu0 %v761
  %1388 = vmatprep.subr.bf16.mxu0 %v758
  %1389 = vmatpush1.bf16.msra.mxu0 %v757
  %1390 = vmatprep.subr.bf16.mxu0 0
  %1391 = vmatpush2.bf16.msra.mxu0 0
  %1392 = vmatprep.subr.bf16.mxu0 0
  %1393 = vmatpush2.bf16.msra.mxu0 0
  %1394 = vmatprep.subr.bf16.mxu0 0
  %1395 = vmatpush2.bf16.msra.mxu0 0
  %1396 = vmatprep.subr.bf16.mxu0 0
  %1397 = vmatpush2.bf16.msra.mxu0 0
  %1398 = vmatprep.subr.bf16.mxu0 0
  %1399 = vmatpush2.bf16.msra.mxu0 0
  %1400 = vmatprep.subr.bf16.mxu0 0
  %1401 = vmatpush2.bf16.msra.mxu0 0
  %1402 = vmatprep.subr.bf16.mxu0 0
  %1403 = vmatpush2.bf16.msra.mxu0 0
  %1404 = vmatprep.subr.bf16.mxu0 0
  %1405 = vmatpush2.bf16.msra.mxu0 0
  %1406 = vmatprep.mubr.bf16.mxu0 0
  %1407 = vmatmul.mubr.bf16.gmra.mxu0 %v1373
  %v1408 = vpop.f32.mrf.mxu0
  %v1409 = vadd.f32 0.0, %v1408
  %v1410 = vpop.f32.mrf.mxu0
  %v1411 = vadd.f32 0.0, %v1410
  %v1412 = vpop.f32.mrf.mxu0
  %v1413 = vadd.f32 0.0, %v1412
  %v1414 = vpop.f32.mrf.mxu0
  %v1415 = vadd.f32 0.0, %v1414
  %1416 = vdwg.mxu0
  %1417 = vmatprep.subr.bf16.mxu0 %v788
  %1418 = vmatpush1.bf16.msra.mxu0 %v787
  %1419 = vmatprep.subr.bf16.mxu0 %v784
  %1420 = vmatpush1.bf16.msra.mxu0 %v783
  %1421 = vmatprep.subr.bf16.mxu0 %v780
  %1422 = vmatpush1.bf16.msra.mxu0 %v779
  %1423 = vmatprep.subr.bf16.mxu0 %v776
  %1424 = vmatpush1.bf16.msra.mxu0 %v775
  %1425 = vmatprep.subr.bf16.mxu0 %v772
  %1426 = vmatpush1.bf16.msra.mxu0 %v771
  %1427 = vmatprep.subr.bf16.mxu0 %v768
  %1428 = vmatpush1.bf16.msra.mxu0 %v767
  %1429 = vmatprep.subr.bf16.mxu0 %v764
  %1430 = vmatpush1.bf16.msra.mxu0 %v763
  %1431 = vmatprep.subr.bf16.mxu0 %v760
  %1432 = vmatpush1.bf16.msra.mxu0 %v759
  %1433 = vmatprep.subr.bf16.mxu0 0
  %1434 = vmatpush2.bf16.msra.mxu0 0
  %1435 = vmatprep.subr.bf16.mxu0 0
  %1436 = vmatpush2.bf16.msra.mxu0 0
  %1437 = vmatprep.subr.bf16.mxu0 0
  %1438 = vmatpush2.bf16.msra.mxu0 0
  %1439 = vmatprep.subr.bf16.mxu0 0
  %1440 = vmatpush2.bf16.msra.mxu0 0
  %1441 = vmatprep.subr.bf16.mxu0 0
  %1442 = vmatpush2.bf16.msra.mxu0 0
  %1443 = vmatprep.subr.bf16.mxu0 0
  %1444 = vmatpush2.bf16.msra.mxu0 0
  %1445 = vmatprep.subr.bf16.mxu0 0
  %1446 = vmatpush2.bf16.msra.mxu0 0
  %1447 = vmatprep.subr.bf16.mxu0 0
  %1448 = vmatpush2.bf16.msra.mxu0 0
  %1449 = vmatprep.mubr.bf16.mxu0 0
  %1450 = vmatmul.mubr.bf16.gmra.mxu0 %v1373
  %v1451 = vpop.f32.mrf.mxu0
  %v1452 = vadd.f32 0.0, %v1451
  %v1453 = vpop.f32.mrf.mxu0
  %v1454 = vadd.f32 0.0, %v1453
  %v1455 = vpop.f32.mrf.mxu0
  %v1456 = vadd.f32 0.0, %v1455
  %v1457 = vpop.f32.mrf.mxu0
  %v1458 = vadd.f32 0.0, %v1457
  %1459 = vdwg.mxu0
  %v1460 = vadd.f32 %v1365, %v1409
  %v1461 = vadd.f32 %v1366, %v1411
  %v1462 = vadd.f32 %v1367, %v1452
  %v1463 = vadd.f32 %v1368, %v1454
  %v1464 = vadd.f32 %v1369, %v1413
  %v1465 = vadd.f32 %v1370, %v1415
  %v1466 = vadd.f32 %v1371, %v1456
  %v1467 = vadd.f32 %v1372, %v1458
  %v1468 = vxor.u32 %v1460, 2147483648
  %v1469 = vxor.u32 %v1464, 2147483648
  %v1470 = vmul.f32 %v1468, 1.442695
  %v1471 = vpow.pop %v1470
  %v1472 = vmul.f32 %v1469, 1.442695
  %v1473 = vpow.pop %v1472
  %v1474 = vadd.f32 %v1471, 1.0
  %v1475 = vadd.f32 %v1473, 1.0
  %v1476 = vrcp.pop %v1474
  %v1477 = vmul.f32 1.0, %v1476
  %v1478 = vrcp.pop %v1475
  %v1479 = vmul.f32 1.0, %v1478
  %v1480 = vxor.u32 %v1461, 2147483648
  %v1481 = vxor.u32 %v1465, 2147483648
  %v1482 = vmul.f32 %v1480, 1.442695
  %v1483 = vpow.pop %v1482
  %v1484 = vmul.f32 %v1481, 1.442695
  %v1485 = vpow.pop %v1484
  %v1486 = vadd.f32 %v1483, 1.0
  %v1487 = vadd.f32 %v1485, 1.0
  %v1488 = vrcp.pop %v1486
  %v1489 = vmul.f32 1.0, %v1488
  %v1490 = vrcp.pop %v1487
  %v1491 = vmul.f32 1.0, %v1490
  %v1492 = vtanh.pop %v1462
  %v1493 = vtanh.pop %v1466
  %v1494 = vxor.u32 %v1463, 2147483648
  %v1495 = vxor.u32 %v1467, 2147483648
  %v1496 = vmul.f32 %v1494, 1.442695
  %v1497 = vpow.pop %v1496
  %v1498 = vmul.f32 %v1495, 1.442695
  %v1499 = vpow.pop %v1498
  %v1500 = vadd.f32 %v1497, 1.0
  %v1501 = vadd.f32 %v1499, 1.0
  %v1502 = vrcp.pop %v1500
  %v1503 = vmul.f32 1.0, %v1502
  %v1504 = vrcp.pop %v1501
  %v1505 = vmul.f32 1.0, %v1504
  %v1506 = vmul.f32 %v1489, %v1360
  %v1507 = vmul.f32 %v1491, %v1361
  %v1508 = vmul.f32 %v1477, %v1492
  %v1509 = vmul.f32 %v1479, %v1493
  %v1510 = vadd.f32 %v1506, %v1508
  %v1511 = vadd.f32 %v1507, %v1509
  %v1512 = vtanh.pop %v1510
  %v1513 = vtanh.pop %v1511
  %v1514 = vmul.f32 %v1503, %v1512
  %v1515 = vmul.f32 %v1505, %v1513
  %s1516 = sadd.s32 %s644, 3
  %v1517 = vstv %s1516
  %vm1518 = vcmp.lt.s32.totalorder %v1517, %v642
  %vm1519 = vcmp.lt.s32.totalorder %v1517, %v643
  %v1520 = vsel %vm1518, 1, 0
  %v1521 = vsel %vm1519, 1, 0
  %1522 = vset.pattern.permute.xlu0 0
  %1523 = vperm.xlu0 %1522, %v1520
  %v1524 = vpop.permute.xlu0 %1523
  %1525 = vset.pattern.permute.xlu0 0
  %1526 = vperm.xlu0 %1525, %v1521
  %v1527 = vpop.permute.xlu0 %1526
  %vm1528 = vcmp.eq.s32.totalorder %v1524, 1
  %vm1529 = vcmp.eq.s32.totalorder %v1527, 1
  %v1530 = vsel %vm1528, %v1514, 0.0
  %v1531 = vsel %vm1529, %v1515, 0.0
  %v1532 = vpack.c.bf16 %v1531, %v1530
  %v1534 = vunpack.c.l.b16 %v1532
  %v1535 = vunpack.c.h.b16 %v1532
  %v1536 = vpack.c.b16 %v1534, %v1534
  %v1537 = vpack.c.b16 %v1535, %v1535
  %s1540 = scalar_lea.vmem %s7, 24
  %1541 = vst [vmem:[%s1540] sm:$0xf] %v1536
  %1542 = vst [vmem:[%s1540 + $0x4] sm:$0xf] %v1537
  %v1543 = vsel %vm1528, %v1514, %v1358
  %v1544 = vsel %vm1529, %v1515, %v1359
  %v1545 = vsel %vm1528, %v1510, %v1360
  %v1546 = vsel %vm1529, %v1511, %v1361
  %s1547 = smul.u32 8, 4
  %s1548 = smul.addr %s1547, 8
  %s1549 = scalar_lea.vmem [#allocation2], %s1548
  %v1550 = vld [vmem:[%s1549] sm:$0xff]
  %v1551 = vld [vmem:[%s1549 + $0x8] sm:$0xff]
  %v1552 = vld [vmem:[%s1549 + $0x10] sm:$0xff]
  %v1553 = vld [vmem:[%s1549 + $0x18] sm:$0xff]
  %v1554 = vld [vmem:[%s1549 + $0x20] sm:$0xff]
  %v1555 = vld [vmem:[%s1549 + $0x28] sm:$0xff]
  %v1556 = vld [vmem:[%s1549 + $0x30] sm:$0xff]
  %v1557 = vld [vmem:[%s1549 + $0x38] sm:$0xff]
  %v1558 = vpack.c.bf16 %v1544, %v1543
  %1559 = vmatprep.subr.bf16.mxu0 %v786
  %1560 = vmatpush1.bf16.msra.mxu0 %v785
  %1561 = vmatprep.subr.bf16.mxu0 %v782
  %1562 = vmatpush1.bf16.msra.mxu0 %v781
  %1563 = vmatprep.subr.bf16.mxu0 %v778
  %1564 = vmatpush1.bf16.msra.mxu0 %v777
  %1565 = vmatprep.subr.bf16.mxu0 %v774
  %1566 = vmatpush1.bf16.msra.mxu0 %v773
  %1567 = vmatprep.subr.bf16.mxu0 %v770
  %1568 = vmatpush1.bf16.msra.mxu0 %v769
  %1569 = vmatprep.subr.bf16.mxu0 %v766
  %1570 = vmatpush1.bf16.msra.mxu0 %v765
  %1571 = vmatprep.subr.bf16.mxu0 %v762
  %1572 = vmatpush1.bf16.msra.mxu0 %v761
  %1573 = vmatprep.subr.bf16.mxu0 %v758
  %1574 = vmatpush1.bf16.msra.mxu0 %v757
  %1575 = vmatprep.subr.bf16.mxu0 0
  %1576 = vmatpush2.bf16.msra.mxu0 0
  %1577 = vmatprep.subr.bf16.mxu0 0
  %1578 = vmatpush2.bf16.msra.mxu0 0
  %1579 = vmatprep.subr.bf16.mxu0 0
  %1580 = vmatpush2.bf16.msra.mxu0 0
  %1581 = vmatprep.subr.bf16.mxu0 0
  %1582 = vmatpush2.bf16.msra.mxu0 0
  %1583 = vmatprep.subr.bf16.mxu0 0
  %1584 = vmatpush2.bf16.msra.mxu0 0
  %1585 = vmatprep.subr.bf16.mxu0 0
  %1586 = vmatpush2.bf16.msra.mxu0 0
  %1587 = vmatprep.subr.bf16.mxu0 0
  %1588 = vmatpush2.bf16.msra.mxu0 0
  %1589 = vmatprep.subr.bf16.mxu0 0
  %1590 = vmatpush2.bf16.msra.mxu0 0
  %1591 = vmatprep.mubr.bf16.mxu0 0
  %1592 = vmatmul.mubr.bf16.gmra.mxu0 %v1558
  %v1593 = vpop.f32.mrf.mxu0
  %v1594 = vadd.f32 0.0, %v1593
  %v1595 = vpop.f32.mrf.mxu0
  %v1596 = vadd.f32 0.0, %v1595
  %v1597 = vpop.f32.mrf.mxu0
  %v1598 = vadd.f32 0.0, %v1597
  %v1599 = vpop.f32.mrf.mxu0
  %v1600 = vadd.f32 0.0, %v1599
  %1601 = vdwg.mxu0
  %1602 = vmatprep.subr.bf16.mxu0 %v788
  %1603 = vmatpush1.bf16.msra.mxu0 %v787
  %1604 = vmatprep.subr.bf16.mxu0 %v784
  %1605 = vmatpush1.bf16.msra.mxu0 %v783
  %1606 = vmatprep.subr.bf16.mxu0 %v780
  %1607 = vmatpush1.bf16.msra.mxu0 %v779
  %1608 = vmatprep.subr.bf16.mxu0 %v776
  %1609 = vmatpush1.bf16.msra.mxu0 %v775
  %1610 = vmatprep.subr.bf16.mxu0 %v772
  %1611 = vmatpush1.bf16.msra.mxu0 %v771
  %1612 = vmatprep.subr.bf16.mxu0 %v768
  %1613 = vmatpush1.bf16.msra.mxu0 %v767
  %1614 = vmatprep.subr.bf16.mxu0 %v764
  %1615 = vmatpush1.bf16.msra.mxu0 %v763
  %1616 = vmatprep.subr.bf16.mxu0 %v760
  %1617 = vmatpush1.bf16.msra.mxu0 %v759
  %1618 = vmatprep.subr.bf16.mxu0 0
  %1619 = vmatpush2.bf16.msra.mxu0 0
  %1620 = vmatprep.subr.bf16.mxu0 0
  %1621 = vmatpush2.bf16.msra.mxu0 0
  %1622 = vmatprep.subr.bf16.mxu0 0
  %1623 = vmatpush2.bf16.msra.mxu0 0
  %1624 = vmatprep.subr.bf16.mxu0 0
  %1625 = vmatpush2.bf16.msra.mxu0 0
  %1626 = vmatprep.subr.bf16.mxu0 0
  %1627 = vmatpush2.bf16.msra.mxu0 0
  %1628 = vmatprep.subr.bf16.mxu0 0
  %1629 = vmatpush2.bf16.msra.mxu0 0
  %1630 = vmatprep.subr.bf16.mxu0 0
  %1631 = vmatpush2.bf16.msra.mxu0 0
  %1632 = vmatprep.subr.bf16.mxu0 0
  %1633 = vmatpush2.bf16.msra.mxu0 0
  %1634 = vmatprep.mubr.bf16.mxu0 0
  %1635 = vmatmul.mubr.bf16.gmra.mxu0 %v1558
  %v1636 = vpop.f32.mrf.mxu0
  %v1637 = vadd.f32 0.0, %v1636
  %v1638 = vpop.f32.mrf.mxu0
  %v1639 = vadd.f32 0.0, %v1638
  %v1640 = vpop.f32.mrf.mxu0
  %v1641 = vadd.f32 0.0, %v1640
  %v1642 = vpop.f32.mrf.mxu0
  %v1643 = vadd.f32 0.0, %v1642
  %1644 = vdwg.mxu0
  %v1645 = vadd.f32 %v1550, %v1594
  %v1646 = vadd.f32 %v1551, %v1596
  %v1647 = vadd.f32 %v1552, %v1637
  %v1648 = vadd.f32 %v1553, %v1639
  %v1649 = vadd.f32 %v1554, %v1598
  %v1650 = vadd.f32 %v1555, %v1600
  %v1651 = vadd.f32 %v1556, %v1641
  %v1652 = vadd.f32 %v1557, %v1643
  %v1653 = vxor.u32 %v1645, 2147483648
  %v1654 = vxor.u32 %v1649, 2147483648
  %v1655 = vmul.f32 %v1653, 1.442695
  %v1656 = vpow.pop %v1655
  %v1657 = vmul.f32 %v1654, 1.442695
  %v1658 = vpow.pop %v1657
  %v1659 = vadd.f32 %v1656, 1.0
  %v1660 = vadd.f32 %v1658, 1.0
  %v1661 = vrcp.pop %v1659
  %v1662 = vmul.f32 1.0, %v1661
  %v1663 = vrcp.pop %v1660
  %v1664 = vmul.f32 1.0, %v1663
  %v1665 = vxor.u32 %v1646, 2147483648
  %v1666 = vxor.u32 %v1650, 2147483648
  %v1667 = vmul.f32 %v1665, 1.442695
  %v1668 = vpow.pop %v1667
  %v1669 = vmul.f32 %v1666, 1.442695
  %v1670 = vpow.pop %v1669
  %v1671 = vadd.f32 %v1668, 1.0
  %v1672 = vadd.f32 %v1670, 1.0
  %v1673 = vrcp.pop %v1671
  %v1674 = vmul.f32 1.0, %v1673
  %v1675 = vrcp.pop %v1672
  %v1676 = vmul.f32 1.0, %v1675
  %v1677 = vtanh.pop %v1647
  %v1678 = vtanh.pop %v1651
  %v1679 = vxor.u32 %v1648, 2147483648
  %v1680 = vxor.u32 %v1652, 2147483648
  %v1681 = vmul.f32 %v1679, 1.442695
  %v1682 = vpow.pop %v1681
  %v1683 = vmul.f32 %v1680, 1.442695
  %v1684 = vpow.pop %v1683
  %v1685 = vadd.f32 %v1682, 1.0
  %v1686 = vadd.f32 %v1684, 1.0
  %v1687 = vrcp.pop %v1685
  %v1688 = vmul.f32 1.0, %v1687
  %v1689 = vrcp.pop %v1686
  %v1690 = vmul.f32 1.0, %v1689
  %v1691 = vmul.f32 %v1674, %v1545
  %v1692 = vmul.f32 %v1676, %v1546
  %v1693 = vmul.f32 %v1662, %v1677
  %v1694 = vmul.f32 %v1664, %v1678
  %v1695 = vadd.f32 %v1691, %v1693
  %v1696 = vadd.f32 %v1692, %v1694
  %v1697 = vtanh.pop %v1695
  %v1698 = vtanh.pop %v1696
  %v1699 = vmul.f32 %v1688, %v1697
  %v1700 = vmul.f32 %v1690, %v1698
  %s1701 = sadd.s32 %s644, 4
  %v1702 = vstv %s1701
  %vm1703 = vcmp.lt.s32.totalorder %v1702, %v642
  %vm1704 = vcmp.lt.s32.totalorder %v1702, %v643
  %v1705 = vsel %vm1703, 1, 0
  %v1706 = vsel %vm1704, 1, 0
  %1707 = vset.pattern.permute.xlu0 0
  %1708 = vperm.xlu0 %1707, %v1705
  %v1709 = vpop.permute.xlu0 %1708
  %1710 = vset.pattern.permute.xlu0 0
  %1711 = vperm.xlu0 %1710, %v1706
  %v1712 = vpop.permute.xlu0 %1711
  %vm1713 = vcmp.eq.s32.totalorder %v1709, 1
  %vm1714 = vcmp.eq.s32.totalorder %v1712, 1
  %v1715 = vsel %vm1713, %v1699, 0.0
  %v1716 = vsel %vm1714, %v1700, 0.0
  %v1717 = vpack.c.bf16 %v1716, %v1715
  %v1719 = vunpack.c.l.b16 %v1717
  %v1720 = vunpack.c.h.b16 %v1717
  %v1721 = vpack.c.b16 %v1719, %v1719
  %v1722 = vpack.c.b16 %v1720, %v1720
  %s1725 = scalar_lea.vmem %s7, 32
  %1726 = vst [vmem:[%s1725] sm:$0xf] %v1721
  %1727 = vst [vmem:[%s1725 + $0x4] sm:$0xf] %v1722
  %v1728 = vsel %vm1713, %v1699, %v1543
  %v1729 = vsel %vm1714, %v1700, %v1544
  %v1730 = vsel %vm1713, %v1695, %v1545
  %v1731 = vsel %vm1714, %v1696, %v1546
  %s1732 = smul.u32 10, 4
  %s1733 = smul.addr %s1732, 8
  %s1734 = scalar_lea.vmem [#allocation2], %s1733
  %v1735 = vld [vmem:[%s1734] sm:$0xff]
  %v1736 = vld [vmem:[%s1734 + $0x8] sm:$0xff]
  %v1737 = vld [vmem:[%s1734 + $0x10] sm:$0xff]
  %v1738 = vld [vmem:[%s1734 + $0x18] sm:$0xff]
  %v1739 = vld [vmem:[%s1734 + $0x20] sm:$0xff]
  %v1740 = vld [vmem:[%s1734 + $0x28] sm:$0xff]
  %v1741 = vld [vmem:[%s1734 + $0x30] sm:$0xff]
  %v1742 = vld [vmem:[%s1734 + $0x38] sm:$0xff]
  %v1743 = vpack.c.bf16 %v1729, %v1728
  %1744 = vmatprep.subr.bf16.mxu0 %v786
  %1745 = vmatpush1.bf16.msra.mxu0 %v785
  %1746 = vmatprep.subr.bf16.mxu0 %v782
  %1747 = vmatpush1.bf16.msra.mxu0 %v781
  %1748 = vmatprep.subr.bf16.mxu0 %v778
  %1749 = vmatpush1.bf16.msra.mxu0 %v777
  %1750 = vmatprep.subr.bf16.mxu0 %v774
  %1751 = vmatpush1.bf16.msra.mxu0 %v773
  %1752 = vmatprep.subr.bf16.mxu0 %v770
  %1753 = vmatpush1.bf16.msra.mxu0 %v769
  %1754 = vmatprep.subr.bf16.mxu0 %v766
  %1755 = vmatpush1.bf16.msra.mxu0 %v765
  %1756 = vmatprep.subr.bf16.mxu0 %v762
  %1757 = vmatpush1.bf16.msra.mxu0 %v761
  %1758 = vmatprep.subr.bf16.mxu0 %v758
  %1759 = vmatpush1.bf16.msra.mxu0 %v757
  %1760 = vmatprep.subr.bf16.mxu0 0
  %1761 = vmatpush2.bf16.msra.mxu0 0
  %1762 = vmatprep.subr.bf16.mxu0 0
  %1763 = vmatpush2.bf16.msra.mxu0 0
  %1764 = vmatprep.subr.bf16.mxu0 0
  %1765 = vmatpush2.bf16.msra.mxu0 0
  %1766 = vmatprep.subr.bf16.mxu0 0
  %1767 = vmatpush2.bf16.msra.mxu0 0
  %1768 = vmatprep.subr.bf16.mxu0 0
  %1769 = vmatpush2.bf16.msra.mxu0 0
  %1770 = vmatprep.subr.bf16.mxu0 0
  %1771 = vmatpush2.bf16.msra.mxu0 0
  %1772 = vmatprep.subr.bf16.mxu0 0
  %1773 = vmatpush2.bf16.msra.mxu0 0
  %1774 = vmatprep.subr.bf16.mxu0 0
  %1775 = vmatpush2.bf16.msra.mxu0 0
  %1776 = vmatprep.mubr.bf16.mxu0 0
  %1777 = vmatmul.mubr.bf16.gmra.mxu0 %v1743
  %v1778 = vpop.f32.mrf.mxu0
  %v1779 = vadd.f32 0.0, %v1778
  %v1780 = vpop.f32.mrf.mxu0
  %v1781 = vadd.f32 0.0, %v1780
  %v1782 = vpop.f32.mrf.mxu0
  %v1783 = vadd.f32 0.0, %v1782
  %v1784 = vpop.f32.mrf.mxu0
  %v1785 = vadd.f32 0.0, %v1784
  %1786 = vdwg.mxu0
  %1787 = vmatprep.subr.bf16.mxu0 %v788
  %1788 = vmatpush1.bf16.msra.mxu0 %v787
  %1789 = vmatprep.subr.bf16.mxu0 %v784
  %1790 = vmatpush1.bf16.msra.mxu0 %v783
  %1791 = vmatprep.subr.bf16.mxu0 %v780
  %1792 = vmatpush1.bf16.msra.mxu0 %v779
  %1793 = vmatprep.subr.bf16.mxu0 %v776
  %1794 = vmatpush1.bf16.msra.mxu0 %v775
  %1795 = vmatprep.subr.bf16.mxu0 %v772
  %1796 = vmatpush1.bf16.msra.mxu0 %v771
  %1797 = vmatprep.subr.bf16.mxu0 %v768
  %1798 = vmatpush1.bf16.msra.mxu0 %v767
  %1799 = vmatprep.subr.bf16.mxu0 %v764
  %1800 = vmatpush1.bf16.msra.mxu0 %v763
  %1801 = vmatprep.subr.bf16.mxu0 %v760
  %1802 = vmatpush1.bf16.msra.mxu0 %v759
  %1803 = vmatprep.subr.bf16.mxu0 0
  %1804 = vmatpush2.bf16.msra.mxu0 0
  %1805 = vmatprep.subr.bf16.mxu0 0
  %1806 = vmatpush2.bf16.msra.mxu0 0
  %1807 = vmatprep.subr.bf16.mxu0 0
  %1808 = vmatpush2.bf16.msra.mxu0 0
  %1809 = vmatprep.subr.bf16.mxu0 0
  %1810 = vmatpush2.bf16.msra.mxu0 0
  %1811 = vmatprep.subr.bf16.mxu0 0
  %1812 = vmatpush2.bf16.msra.mxu0 0
  %1813 = vmatprep.subr.bf16.mxu0 0
  %1814 = vmatpush2.bf16.msra.mxu0 0
  %1815 = vmatprep.subr.bf16.mxu0 0
  %1816 = vmatpush2.bf16.msra.mxu0 0
  %1817 = vmatprep.subr.bf16.mxu0 0
  %1818 = vmatpush2.bf16.msra.mxu0 0
  %1819 = vmatprep.mubr.bf16.mxu0 0
  %1820 = vmatmul.mubr.bf16.gmra.mxu0 %v1743
  %v1821 = vpop.f32.mrf.mxu0
  %v1822 = vadd.f32 0.0, %v1821
  %v1823 = vpop.f32.mrf.mxu0
  %v1824 = vadd.f32 0.0, %v1823
  %v1825 = vpop.f32.mrf.mxu0
  %v1826 = vadd.f32 0.0, %v1825
  %v1827 = vpop.f32.mrf.mxu0
  %v1828 = vadd.f32 0.0, %v1827
  %1829 = vdwg.mxu0
  %v1830 = vadd.f32 %v1735, %v1779
  %v1831 = vadd.f32 %v1736, %v1781
  %v1832 = vadd.f32 %v1737, %v1822
  %v1833 = vadd.f32 %v1738, %v1824
  %v1834 = vadd.f32 %v1739, %v1783
  %v1835 = vadd.f32 %v1740, %v1785
  %v1836 = vadd.f32 %v1741, %v1826
  %v1837 = vadd.f32 %v1742, %v1828
  %v1838 = vxor.u32 %v1830, 2147483648
  %v1839 = vxor.u32 %v1834, 2147483648
  %v1840 = vmul.f32 %v1838, 1.442695
  %v1841 = vpow.pop %v1840
  %v1842 = vmul.f32 %v1839, 1.442695
  %v1843 = vpow.pop %v1842
  %v1844 = vadd.f32 %v1841, 1.0
  %v1845 = vadd.f32 %v1843, 1.0
  %v1846 = vrcp.pop %v1844
  %v1847 = vmul.f32 1.0, %v1846
  %v1848 = vrcp.pop %v1845
  %v1849 = vmul.f32 1.0, %v1848
  %v1850 = vxor.u32 %v1831, 2147483648
  %v1851 = vxor.u32 %v1835, 2147483648
  %v1852 = vmul.f32 %v1850, 1.442695
  %v1853 = vpow.pop %v1852
  %v1854 = vmul.f32 %v1851, 1.442695
  %v1855 = vpow.pop %v1854
  %v1856 = vadd.f32 %v1853, 1.0
  %v1857 = vadd.f32 %v1855, 1.0
  %v1858 = vrcp.pop %v1856
  %v1859 = vmul.f32 1.0, %v1858
  %v1860 = vrcp.pop %v1857
  %v1861 = vmul.f32 1.0, %v1860
  %v1862 = vtanh.pop %v1832
  %v1863 = vtanh.pop %v1836
  %v1864 = vxor.u32 %v1833, 2147483648
  %v1865 = vxor.u32 %v1837, 2147483648
  %v1866 = vmul.f32 %v1864, 1.442695
  %v1867 = vpow.pop %v1866
  %v1868 = vmul.f32 %v1865, 1.442695
  %v1869 = vpow.pop %v1868
  %v1870 = vadd.f32 %v1867, 1.0
  %v1871 = vadd.f32 %v1869, 1.0
  %v1872 = vrcp.pop %v1870
  %v1873 = vmul.f32 1.0, %v1872
  %v1874 = vrcp.pop %v1871
  %v1875 = vmul.f32 1.0, %v1874
  %v1876 = vmul.f32 %v1859, %v1730
  %v1877 = vmul.f32 %v1861, %v1731
  %v1878 = vmul.f32 %v1847, %v1862
  %v1879 = vmul.f32 %v1849, %v1863
  %v1880 = vadd.f32 %v1876, %v1878
  %v1881 = vadd.f32 %v1877, %v1879
  %v1882 = vtanh.pop %v1880
  %v1883 = vtanh.pop %v1881
  %v1884 = vmul.f32 %v1873, %v1882
  %v1885 = vmul.f32 %v1875, %v1883
  %s1886 = sadd.s32 %s644, 5
  %v1887 = vstv %s1886
  %vm1888 = vcmp.lt.s32.totalorder %v1887, %v642
  %vm1889 = vcmp.lt.s32.totalorder %v1887, %v643
  %v1890 = vsel %vm1888, 1, 0
  %v1891 = vsel %vm1889, 1, 0
  %1892 = vset.pattern.permute.xlu0 0
  %1893 = vperm.xlu0 %1892, %v1890
  %v1894 = vpop.permute.xlu0 %1893
  %1895 = vset.pattern.permute.xlu0 0
  %1896 = vperm.xlu0 %1895, %v1891
  %v1897 = vpop.permute.xlu0 %1896
  %vm1898 = vcmp.eq.s32.totalorder %v1894, 1
  %vm1899 = vcmp.eq.s32.totalorder %v1897, 1
  %v1900 = vsel %vm1898, %v1884, 0.0
  %v1901 = vsel %vm1899, %v1885, 0.0
  %v1902 = vpack.c.bf16 %v1901, %v1900
  %v1904 = vunpack.c.l.b16 %v1902
  %v1905 = vunpack.c.h.b16 %v1902
  %v1906 = vpack.c.b16 %v1904, %v1904
  %v1907 = vpack.c.b16 %v1905, %v1905
  %s1910 = scalar_lea.vmem %s7, 40
  %1911 = vst [vmem:[%s1910] sm:$0xf] %v1906
  %1912 = vst [vmem:[%s1910 + $0x4] sm:$0xf] %v1907
  %v1913 = vsel %vm1898, %v1884, %v1728
  %v1914 = vsel %vm1899, %v1885, %v1729
  %v1915 = vsel %vm1898, %v1880, %v1730
  %v1916 = vsel %vm1899, %v1881, %v1731
  %s1917 = smul.u32 12, 4
  %s1918 = smul.addr %s1917, 8
  %s1919 = scalar_lea.vmem [#allocation2], %s1918
  %v1920 = vld [vmem:[%s1919] sm:$0xff]
  %v1921 = vld [vmem:[%s1919 + $0x8] sm:$0xff]
  %v1922 = vld [vmem:[%s1919 + $0x10] sm:$0xff]
  %v1923 = vld [vmem:[%s1919 + $0x18] sm:$0xff]
  %v1924 = vld [vmem:[%s1919 + $0x20] sm:$0xff]
  %v1925 = vld [vmem:[%s1919 + $0x28] sm:$0xff]
  %v1926 = vld [vmem:[%s1919 + $0x30] sm:$0xff]
  %v1927 = vld [vmem:[%s1919 + $0x38] sm:$0xff]
  %v1928 = vpack.c.bf16 %v1914, %v1913
  %1929 = vmatprep.subr.bf16.mxu0 %v786
  %1930 = vmatpush1.bf16.msra.mxu0 %v785
  %1931 = vmatprep.subr.bf16.mxu0 %v782
  %1932 = vmatpush1.bf16.msra.mxu0 %v781
  %1933 = vmatprep.subr.bf16.mxu0 %v778
  %1934 = vmatpush1.bf16.msra.mxu0 %v777
  %1935 = vmatprep.subr.bf16.mxu0 %v774
  %1936 = vmatpush1.bf16.msra.mxu0 %v773
  %1937 = vmatprep.subr.bf16.mxu0 %v770
  %1938 = vmatpush1.bf16.msra.mxu0 %v769
  %1939 = vmatprep.subr.bf16.mxu0 %v766
  %1940 = vmatpush1.bf16.msra.mxu0 %v765
  %1941 = vmatprep.subr.bf16.mxu0 %v762
  %1942 = vmatpush1.bf16.msra.mxu0 %v761
  %1943 = vmatprep.subr.bf16.mxu0 %v758
  %1944 = vmatpush1.bf16.msra.mxu0 %v757
  %1945 = vmatprep.subr.bf16.mxu0 0
  %1946 = vmatpush2.bf16.msra.mxu0 0
  %1947 = vmatprep.subr.bf16.mxu0 0
  %1948 = vmatpush2.bf16.msra.mxu0 0
  %1949 = vmatprep.subr.bf16.mxu0 0
  %1950 = vmatpush2.bf16.msra.mxu0 0
  %1951 = vmatprep.subr.bf16.mxu0 0
  %1952 = vmatpush2.bf16.msra.mxu0 0
  %1953 = vmatprep.subr.bf16.mxu0 0
  %1954 = vmatpush2.bf16.msra.mxu0 0
  %1955 = vmatprep.subr.bf16.mxu0 0
  %1956 = vmatpush2.bf16.msra.mxu0 0
  %1957 = vmatprep.subr.bf16.mxu0 0
  %1958 = vmatpush2.bf16.msra.mxu0 0
  %1959 = vmatprep.subr.bf16.mxu0 0
  %1960 = vmatpush2.bf16.msra.mxu0 0
  %1961 = vmatprep.mubr.bf16.mxu0 0
  %1962 = vmatmul.mubr.bf16.gmra.mxu0 %v1928
  %v1963 = vpop.f32.mrf.mxu0
  %v1964 = vadd.f32 0.0, %v1963
  %v1965 = vpop.f32.mrf.mxu0
  %v1966 = vadd.f32 0.0, %v1965
  %v1967 = vpop.f32.mrf.mxu0
  %v1968 = vadd.f32 0.0, %v1967
  %v1969 = vpop.f32.mrf.mxu0
  %v1970 = vadd.f32 0.0, %v1969
  %1971 = vdwg.mxu0
  %1972 = vmatprep.subr.bf16.mxu0 %v788
  %1973 = vmatpush1.bf16.msra.mxu0 %v787
  %1974 = vmatprep.subr.bf16.mxu0 %v784
  %1975 = vmatpush1.bf16.msra.mxu0 %v783
  %1976 = vmatprep.subr.bf16.mxu0 %v780
  %1977 = vmatpush1.bf16.msra.mxu0 %v779
  %1978 = vmatprep.subr.bf16.mxu0 %v776
  %1979 = vmatpush1.bf16.msra.mxu0 %v775
  %1980 = vmatprep.subr.bf16.mxu0 %v772
  %1981 = vmatpush1.bf16.msra.mxu0 %v771
  %1982 = vmatprep.subr.bf16.mxu0 %v768
  %1983 = vmatpush1.bf16.msra.mxu0 %v767
  %1984 = vmatprep.subr.bf16.mxu0 %v764
  %1985 = vmatpush1.bf16.msra.mxu0 %v763
  %1986 = vmatprep.subr.bf16.mxu0 %v760
  %1987 = vmatpush1.bf16.msra.mxu0 %v759
  %1988 = vmatprep.subr.bf16.mxu0 0
  %1989 = vmatpush2.bf16.msra.mxu0 0
  %1990 = vmatprep.subr.bf16.mxu0 0
  %1991 = vmatpush2.bf16.msra.mxu0 0
  %1992 = vmatprep.subr.bf16.mxu0 0
  %1993 = vmatpush2.bf16.msra.mxu0 0
  %1994 = vmatprep.subr.bf16.mxu0 0
  %1995 = vmatpush2.bf16.msra.mxu0 0
  %1996 = vmatprep.subr.bf16.mxu0 0
  %1997 = vmatpush2.bf16.msra.mxu0 0
  %1998 = vmatprep.subr.bf16.mxu0 0
  %1999 = vmatpush2.bf16.msra.mxu0 0
  %2000 = vmatprep.subr.bf16.mxu0 0
  %2001 = vmatpush2.bf16.msra.mxu0 0
  %2002 = vmatprep.subr.bf16.mxu0 0
  %2003 = vmatpush2.bf16.msra.mxu0 0
  %2004 = vmatprep.mubr.bf16.mxu0 0
  %2005 = vmatmul.mubr.bf16.gmra.mxu0 %v1928
  %v2006 = vpop.f32.mrf.mxu0
  %v2007 = vadd.f32 0.0, %v2006
  %v2008 = vpop.f32.mrf.mxu0
  %v2009 = vadd.f32 0.0, %v2008
  %v2010 = vpop.f32.mrf.mxu0
  %v2011 = vadd.f32 0.0, %v2010
  %v2012 = vpop.f32.mrf.mxu0
  %v2013 = vadd.f32 0.0, %v2012
  %2014 = vdwg.mxu0
  %v2015 = vadd.f32 %v1920, %v1964
  %v2016 = vadd.f32 %v1921, %v1966
  %v2017 = vadd.f32 %v1922, %v2007
  %v2018 = vadd.f32 %v1923, %v2009
  %v2019 = vadd.f32 %v1924, %v1968
  %v2020 = vadd.f32 %v1925, %v1970
  %v2021 = vadd.f32 %v1926, %v2011
  %v2022 = vadd.f32 %v1927, %v2013
  %v2023 = vxor.u32 %v2015, 2147483648
  %v2024 = vxor.u32 %v2019, 2147483648
  %v2025 = vmul.f32 %v2023, 1.442695
  %v2026 = vpow.pop %v2025
  %v2027 = vmul.f32 %v2024, 1.442695
  %v2028 = vpow.pop %v2027
  %v2029 = vadd.f32 %v2026, 1.0
  %v2030 = vadd.f32 %v2028, 1.0
  %v2031 = vrcp.pop %v2029
  %v2032 = vmul.f32 1.0, %v2031
  %v2033 = vrcp.pop %v2030
  %v2034 = vmul.f32 1.0, %v2033
  %v2035 = vxor.u32 %v2016, 2147483648
  %v2036 = vxor.u32 %v2020, 2147483648
  %v2037 = vmul.f32 %v2035, 1.442695
  %v2038 = vpow.pop %v2037
  %v2039 = vmul.f32 %v2036, 1.442695
  %v2040 = vpow.pop %v2039
  %v2041 = vadd.f32 %v2038, 1.0
  %v2042 = vadd.f32 %v2040, 1.0
  %v2043 = vrcp.pop %v2041
  %v2044 = vmul.f32 1.0, %v2043
  %v2045 = vrcp.pop %v2042
  %v2046 = vmul.f32 1.0, %v2045
  %v2047 = vtanh.pop %v2017
  %v2048 = vtanh.pop %v2021
  %v2049 = vxor.u32 %v2018, 2147483648
  %v2050 = vxor.u32 %v2022, 2147483648
  %v2051 = vmul.f32 %v2049, 1.442695
  %v2052 = vpow.pop %v2051
  %v2053 = vmul.f32 %v2050, 1.442695
  %v2054 = vpow.pop %v2053
  %v2055 = vadd.f32 %v2052, 1.0
  %v2056 = vadd.f32 %v2054, 1.0
  %v2057 = vrcp.pop %v2055
  %v2058 = vmul.f32 1.0, %v2057
  %v2059 = vrcp.pop %v2056
  %v2060 = vmul.f32 1.0, %v2059
  %v2061 = vmul.f32 %v2044, %v1915
  %v2062 = vmul.f32 %v2046, %v1916
  %v2063 = vmul.f32 %v2032, %v2047
  %v2064 = vmul.f32 %v2034, %v2048
  %v2065 = vadd.f32 %v2061, %v2063
  %v2066 = vadd.f32 %v2062, %v2064
  %v2067 = vtanh.pop %v2065
  %v2068 = vtanh.pop %v2066
  %v2069 = vmul.f32 %v2058, %v2067
  %v2070 = vmul.f32 %v2060, %v2068
  %s2071 = sadd.s32 %s644, 6
  %v2072 = vstv %s2071
  %vm2073 = vcmp.lt.s32.totalorder %v2072, %v642
  %vm2074 = vcmp.lt.s32.totalorder %v2072, %v643
  %v2075 = vsel %vm2073, 1, 0
  %v2076 = vsel %vm2074, 1, 0
  %2077 = vset.pattern.permute.xlu0 0
  %2078 = vperm.xlu0 %2077, %v2075
  %v2079 = vpop.permute.xlu0 %2078
  %2080 = vset.pattern.permute.xlu0 0
  %2081 = vperm.xlu0 %2080, %v2076
  %v2082 = vpop.permute.xlu0 %2081
  %vm2083 = vcmp.eq.s32.totalorder %v2079, 1
  %vm2084 = vcmp.eq.s32.totalorder %v2082, 1
  %v2085 = vsel %vm2083, %v2069, 0.0
  %v2086 = vsel %vm2084, %v2070, 0.0
  %v2087 = vpack.c.bf16 %v2086, %v2085
  %v2089 = vunpack.c.l.b16 %v2087
  %v2090 = vunpack.c.h.b16 %v2087
  %v2091 = vpack.c.b16 %v2089, %v2089
  %v2092 = vpack.c.b16 %v2090, %v2090
  %s2095 = scalar_lea.vmem %s7, 48
  %2096 = vst [vmem:[%s2095] sm:$0xf] %v2091
  %2097 = vst [vmem:[%s2095 + $0x4] sm:$0xf] %v2092
  %v2098 = vsel %vm2083, %v2069, %v1913
  %v2099 = vsel %vm2084, %v2070, %v1914
  %v2100 = vsel %vm2083, %v2065, %v1915
  %v2101 = vsel %vm2084, %v2066, %v1916
  %s2102 = smul.u32 14, 4
  %s2103 = smul.addr %s2102, 8
  %s2104 = scalar_lea.vmem [#allocation2], %s2103
  %v2105 = vld [vmem:[%s2104] sm:$0xff]
  %v2106 = vld [vmem:[%s2104 + $0x8] sm:$0xff]
  %v2107 = vld [vmem:[%s2104 + $0x10] sm:$0xff]
  %v2108 = vld [vmem:[%s2104 + $0x18] sm:$0xff]
  %v2109 = vld [vmem:[%s2104 + $0x20] sm:$0xff]
  %v2110 = vld [vmem:[%s2104 + $0x28] sm:$0xff]
  %v2111 = vld [vmem:[%s2104 + $0x30] sm:$0xff]
  %v2112 = vld [vmem:[%s2104 + $0x38] sm:$0xff]
  %v2113 = vpack.c.bf16 %v2099, %v2098
  %2114 = vmatprep.subr.bf16.mxu0 %v786
  %2115 = vmatpush1.bf16.msra.mxu0 %v785
  %2116 = vmatprep.subr.bf16.mxu0 %v782
  %2117 = vmatpush1.bf16.msra.mxu0 %v781
  %2118 = vmatprep.subr.bf16.mxu0 %v778
  %2119 = vmatpush1.bf16.msra.mxu0 %v777
  %2120 = vmatprep.subr.bf16.mxu0 %v774
  %2121 = vmatpush1.bf16.msra.mxu0 %v773
  %2122 = vmatprep.subr.bf16.mxu0 %v770
  %2123 = vmatpush1.bf16.msra.mxu0 %v769
  %2124 = vmatprep.subr.bf16.mxu0 %v766
  %2125 = vmatpush1.bf16.msra.mxu0 %v765
  %2126 = vmatprep.subr.bf16.mxu0 %v762
  %2127 = vmatpush1.bf16.msra.mxu0 %v761
  %2128 = vmatprep.subr.bf16.mxu0 %v758
  %2129 = vmatpush1.bf16.msra.mxu0 %v757
  %2130 = vmatprep.subr.bf16.mxu0 0
  %2131 = vmatpush2.bf16.msra.mxu0 0
  %2132 = vmatprep.subr.bf16.mxu0 0
  %2133 = vmatpush2.bf16.msra.mxu0 0
  %2134 = vmatprep.subr.bf16.mxu0 0
  %2135 = vmatpush2.bf16.msra.mxu0 0
  %2136 = vmatprep.subr.bf16.mxu0 0
  %2137 = vmatpush2.bf16.msra.mxu0 0
  %2138 = vmatprep.subr.bf16.mxu0 0
  %2139 = vmatpush2.bf16.msra.mxu0 0
  %2140 = vmatprep.subr.bf16.mxu0 0
  %2141 = vmatpush2.bf16.msra.mxu0 0
  %2142 = vmatprep.subr.bf16.mxu0 0
  %2143 = vmatpush2.bf16.msra.mxu0 0
  %2144 = vmatprep.subr.bf16.mxu0 0
  %2145 = vmatpush2.bf16.msra.mxu0 0
  %2146 = vmatprep.mubr.bf16.mxu0 0
  %2147 = vmatmul.mubr.bf16.gmra.mxu0 %v2113
  %v2148 = vpop.f32.mrf.mxu0
  %v2149 = vadd.f32 0.0, %v2148
  %v2150 = vpop.f32.mrf.mxu0
  %v2151 = vadd.f32 0.0, %v2150
  %v2152 = vpop.f32.mrf.mxu0
  %v2153 = vadd.f32 0.0, %v2152
  %v2154 = vpop.f32.mrf.mxu0
  %v2155 = vadd.f32 0.0, %v2154
  %2156 = vdwg.mxu0
  %2157 = vmatprep.subr.bf16.mxu0 %v788
  %2158 = vmatpush1.bf16.msra.mxu0 %v787
  %2159 = vmatprep.subr.bf16.mxu0 %v784
  %2160 = vmatpush1.bf16.msra.mxu0 %v783
  %2161 = vmatprep.subr.bf16.mxu0 %v780
  %2162 = vmatpush1.bf16.msra.mxu0 %v779
  %2163 = vmatprep.subr.bf16.mxu0 %v776
  %2164 = vmatpush1.bf16.msra.mxu0 %v775
  %2165 = vmatprep.subr.bf16.mxu0 %v772
  %2166 = vmatpush1.bf16.msra.mxu0 %v771
  %2167 = vmatprep.subr.bf16.mxu0 %v768
  %2168 = vmatpush1.bf16.msra.mxu0 %v767
  %2169 = vmatprep.subr.bf16.mxu0 %v764
  %2170 = vmatpush1.bf16.msra.mxu0 %v763
  %2171 = vmatprep.subr.bf16.mxu0 %v760
  %2172 = vmatpush1.bf16.msra.mxu0 %v759
  %2173 = vmatprep.subr.bf16.mxu0 0
  %2174 = vmatpush2.bf16.msra.mxu0 0
  %2175 = vmatprep.subr.bf16.mxu0 0
  %2176 = vmatpush2.bf16.msra.mxu0 0
  %2177 = vmatprep.subr.bf16.mxu0 0
  %2178 = vmatpush2.bf16.msra.mxu0 0
  %2179 = vmatprep.subr.bf16.mxu0 0
  %2180 = vmatpush2.bf16.msra.mxu0 0
  %2181 = vmatprep.subr.bf16.mxu0 0
  %2182 = vmatpush2.bf16.msra.mxu0 0
  %2183 = vmatprep.subr.bf16.mxu0 0
  %2184 = vmatpush2.bf16.msra.mxu0 0
  %2185 = vmatprep.subr.bf16.mxu0 0
  %2186 = vmatpush2.bf16.msra.mxu0 0
  %2187 = vmatprep.subr.bf16.mxu0 0
  %2188 = vmatpush2.bf16.msra.mxu0 0
  %2189 = vmatprep.mubr.bf16.mxu0 0
  %2190 = vmatmul.mubr.bf16.gmra.mxu0 %v2113
  %v2191 = vpop.f32.mrf.mxu0
  %v2192 = vadd.f32 0.0, %v2191
  %v2193 = vpop.f32.mrf.mxu0
  %v2194 = vadd.f32 0.0, %v2193
  %v2195 = vpop.f32.mrf.mxu0
  %v2196 = vadd.f32 0.0, %v2195
  %v2197 = vpop.f32.mrf.mxu0
  %v2198 = vadd.f32 0.0, %v2197
  %2199 = vdwg.mxu0
  %v2200 = vadd.f32 %v2105, %v2149
  %v2201 = vadd.f32 %v2106, %v2151
  %v2202 = vadd.f32 %v2107, %v2192
  %v2203 = vadd.f32 %v2108, %v2194
  %v2204 = vadd.f32 %v2109, %v2153
  %v2205 = vadd.f32 %v2110, %v2155
  %v2206 = vadd.f32 %v2111, %v2196
  %v2207 = vadd.f32 %v2112, %v2198
  %v2208 = vxor.u32 %v2200, 2147483648
  %v2209 = vxor.u32 %v2204, 2147483648
  %v2210 = vmul.f32 %v2208, 1.442695
  %v2211 = vpow.pop %v2210
  %v2212 = vmul.f32 %v2209, 1.442695
  %v2213 = vpow.pop %v2212
  %v2214 = vadd.f32 %v2211, 1.0
  %v2215 = vadd.f32 %v2213, 1.0
  %v2216 = vrcp.pop %v2214
  %v2217 = vmul.f32 1.0, %v2216
  %v2218 = vrcp.pop %v2215
  %v2219 = vmul.f32 1.0, %v2218
  %v2220 = vxor.u32 %v2201, 2147483648
  %v2221 = vxor.u32 %v2205, 2147483648
  %v2222 = vmul.f32 %v2220, 1.442695
  %v2223 = vpow.pop %v2222
  %v2224 = vmul.f32 %v2221, 1.442695
  %v2225 = vpow.pop %v2224
  %v2226 = vadd.f32 %v2223, 1.0
  %v2227 = vadd.f32 %v2225, 1.0
  %v2228 = vrcp.pop %v2226
  %v2229 = vmul.f32 1.0, %v2228
  %v2230 = vrcp.pop %v2227
  %v2231 = vmul.f32 1.0, %v2230
  %v2232 = vtanh.pop %v2202
  %v2233 = vtanh.pop %v2206
  %v2234 = vxor.u32 %v2203, 2147483648
  %v2235 = vxor.u32 %v2207, 2147483648
  %v2236 = vmul.f32 %v2234, 1.442695
  %v2237 = vpow.pop %v2236
  %v2238 = vmul.f32 %v2235, 1.442695
  %v2239 = vpow.pop %v2238
  %v2240 = vadd.f32 %v2237, 1.0
  %v2241 = vadd.f32 %v2239, 1.0
  %v2242 = vrcp.pop %v2240
  %v2243 = vmul.f32 1.0, %v2242
  %v2244 = vrcp.pop %v2241
  %v2245 = vmul.f32 1.0, %v2244
  %v2246 = vmul.f32 %v2229, %v2100
  %v2247 = vmul.f32 %v2231, %v2101
  %v2248 = vmul.f32 %v2217, %v2232
  %v2249 = vmul.f32 %v2219, %v2233
  %v2250 = vadd.f32 %v2246, %v2248
  %v2251 = vadd.f32 %v2247, %v2249
  %v2252 = vtanh.pop %v2250
  %v2253 = vtanh.pop %v2251
  %v2254 = vmul.f32 %v2243, %v2252
  %v2255 = vmul.f32 %v2245, %v2253
  %s2256 = sadd.s32 %s644, 7
  %v2257 = vstv %s2256
  %vm2258 = vcmp.lt.s32.totalorder %v2257, %v642
  %vm2259 = vcmp.lt.s32.totalorder %v2257, %v643
  %v2260 = vsel %vm2258, 1, 0
  %v2261 = vsel %vm2259, 1, 0
  %2262 = vset.pattern.permute.xlu0 0
  %2263 = vperm.xlu0 %2262, %v2260
  %v2264 = vpop.permute.xlu0 %2263
  %2265 = vset.pattern.permute.xlu0 0
  %2266 = vperm.xlu0 %2265, %v2261
  %v2267 = vpop.permute.xlu0 %2266
  %vm2268 = vcmp.eq.s32.totalorder %v2264, 1
  %vm2269 = vcmp.eq.s32.totalorder %v2267, 1
  %v2270 = vsel %vm2268, %v2254, 0.0
  %v2271 = vsel %vm2269, %v2255, 0.0
  %v2272 = vpack.c.bf16 %v2271, %v2270
  %v2274 = vunpack.c.l.b16 %v2272
  %v2275 = vunpack.c.h.b16 %v2272
  %v2276 = vpack.c.b16 %v2274, %v2274
  %v2277 = vpack.c.b16 %v2275, %v2275
  %s2280 = scalar_lea.vmem %s7, 56
  %2281 = vst [vmem:[%s2280] sm:$0xf] %v2276
  %2282 = vst [vmem:[%s2280 + $0x4] sm:$0xf] %v2277
  %v2283 = vsel %vm2268, %v2254, %v2098
  %v2284 = vsel %vm2269, %v2255, %v2099
  %v2285 = vsel %vm2268, %v2250, %v2100
  %v2286 = vsel %vm2269, %v2251, %v2101
  %2287 = vst [vmem:[%s8] sm:$0xff] %v2283
  %2288 = vst [vmem:[%s8 + $0x8] sm:$0xff] %v2284
  %2289 = vst [vmem:[%s9] sm:$0xff] %v2285
  %2290 = vst [vmem:[%s9 + $0x8] sm:$0xff] %v2286
  // Predicated region
  $region34: #{rnn_model_forward.2} parent=0 // pred_check
    _
  $region35: #{rnn_model_forward.2} parent=0 // pred_check_branch
    %2292 = sbr.rel (0) target = $region37
  $region36: #{rnn_model_forward.2} parent=0 // pred_region
    _
  $region37: #{rnn_model_forward.2} parent=0 // pred_fallthru
    _
  // Predicated region
  $region38: #{rnn_model_forward.2} parent=0 // pred_check
    _
  $region39: #{rnn_model_forward.2} parent=0 // pred_check_branch
    %2294 = sbr.rel (0) target = $region41
  $region40: #{rnn_model_forward.2} parent=0 // pred_region
    _
  $region41: #{rnn_model_forward.2} parent=0 // pred_fallthru
    _
  // Predicated region
  $region42: #{rnn_model_forward.2} parent=0 // pred_check
    _
  $region43: #{rnn_model_forward.2} parent=0 // pred_check_branch
    %2296 = sbr.rel (0) target = $region45
  $region44: #{rnn_model_forward.2} parent=0 // pred_region
    _
  $region45: #{rnn_model_forward.2} parent=0 // pred_fallthru
    _
  // Predicated region
  $region46: #{rnn_model_forward.2} parent=0 // pred_check
    _
  $region47: #{rnn_model_forward.2} parent=0 // pred_check_branch
    %2298 = sbr.rel (0) target = $region49
  $region48: #{rnn_model_forward.2} parent=0 // pred_region
    _
  $region49: #{rnn_model_forward.2} parent=0 // pred_fallthru
    _
  // Predicated region
  $region50: #{rnn_model_forward.2} parent=0 // pred_check
    _
  $region51: #{rnn_model_forward.2} parent=0 // pred_check_branch
    %2300 = sbr.rel (0) target = $region53
  $region52: #{rnn_model_forward.2} parent=0 // pred_region
    _
  $region53: #{rnn_model_forward.2} parent=0 // pred_fallthru
    _
  // Predicated region
  $region54: #{rnn_model_forward.2} parent=0 // pred_check
    _
  $region55: #{rnn_model_forward.2} parent=0 // pred_check_branch
    %2302 = sbr.rel (0) target = $region57
  $region56: #{rnn_model_forward.2} parent=0 // pred_region
    _
  $region57: #{rnn_model_forward.2} parent=0 // pred_fallthru
    _

</llo_original>
